<compile_context>
chip_gen: v7x
topology: tpu7x:2x2x1
jax: 0.10.0
libtpu: 0.0.40
codegen_flags: <defaults>
</compile_context>

<pallas_src>
import functools

import jax
import jax.numpy as jnp
from jax.experimental import pallas as pl
from jax.experimental.pallas import tpu as pltpu

IN_DIM = 16000       # SpeakerEncoder in_dim
EMB = 64             # speaker embedding dim (ds)
DF = 512             # dual-encoder output dim
MEL = 80             # true mel bins
MEL_PAD = 128        # lane-padded mel bins
VOCAB = 1000         # true decoder vocab
VOCAB_PAD = 1024     # lane-padded vocab
BOTTLENECK = 64      # adapter bottleneck
HEAD = MEL_PAD + VOCAB_PAD  # fused flow+decoder head width (1152)


# ----------------------------------------------------------------------------
# Fused kernel: DualEncoder + (FlowSynth-H ++ Decoder) head + both losses
# ----------------------------------------------------------------------------
def _tse_kernel(
    eflow_ref, hcat_ref, txt_ref, melgt_ref,                 # activations
    w_adn_ref, b_adn_ref, w_aup_ref, b_aup_ref,              # fused adapters
    w_proj_ref, b_proj_ref,                                  # dual-encoder proj
    w_head_ref, b_head_ref,                                  # fused flow+decoder
    lflow_ref, lce_ref,                                      # per-b partial sums
    *, seq_len, t_tile, mask_rows,
):
    f32 = jnp.float32
    bf16 = jnp.bfloat16
    t_idx = pl.program_id(1)

    # --- DualEncoder (block-diagonal fused adapters + proj) ------------------
    x = hcat_ref[0]                                               # (tile, dw+dl) bf16
    a = jnp.maximum(
        jnp.dot(x, w_adn_ref[...], preferred_element_type=f32) + b_adn_ref[...],
        0.0)                                                      # (tile, 2*BN) f32
    u = (jnp.dot(a.astype(bf16), w_aup_ref[...], preferred_element_type=f32)
         + b_aup_ref[...])                                        # (tile, dw+dl)
    H = (jnp.dot(u.astype(bf16), w_proj_ref[...], preferred_element_type=f32)
         + b_proj_ref[...])                                       # (tile, DF)
    Hb = H.astype(bf16)

    # --- Fused FlowSynth-H + Decoder head: one MXU pass, N = 1152 ------------
    head = (jnp.dot(Hb, w_head_ref[...], preferred_element_type=f32)
            + b_head_ref[...])                                    # (tile, 1152)

    if mask_rows:
        row = (jax.lax.broadcasted_iota(jnp.int32, (t_tile, 1), 0)
               + t_idx * t_tile)
        valid = (row < seq_len).astype(f32)                       # (tile, 1)

    # --- FlowSynth + MSE (padded mel lanes are exactly 0 on both sides) ------
    mel = head[:, :MEL_PAD] + eflow_ref[0]                        # (tile, MEL_PAD)
    diff = mel - melgt_ref[0]
    sq = diff * diff
    if mask_rows:
        sq = sq * valid
    part_flow = jnp.sum(sq)

    # --- Decoder + cross entropy (vocab-pad mask baked into the bias) --------
    logits = head[:, MEL_PAD:]                                    # (tile, VOCAB_PAD)
    m = jnp.max(logits, axis=-1, keepdims=True)
    lse = m + jnp.log(jnp.sum(jnp.exp(logits - m), axis=-1, keepdims=True))
    cls = jax.lax.broadcasted_iota(jnp.int32, logits.shape, 1)
    tgt = jnp.sum(jnp.where(cls == txt_ref[0], logits, 0.0),
                  axis=-1, keepdims=True)
    ce = lse - tgt
    if mask_rows:
        ce = ce * valid
    part_ce = jnp.sum(ce)

    # --- accumulate partial sums for this batch row ---------------------------
    @pl.when(t_idx == 0)
    def _():
        lflow_ref[...] = jnp.zeros_like(lflow_ref)
        lce_ref[...] = jnp.zeros_like(lce_ref)

    lflow_ref[...] += part_flow
    lce_ref[...] += part_ce


# ----------------------------------------------------------------------------
# Parameter init (torch-Linear-style uniform(+-1/sqrt(fan_in)))
# ----------------------------------------------------------------------------
def _linear(key, fan_in, fan_out):
    bound = float(fan_in) ** -0.5
    kw, kb = jax.random.split(key)
    w = jax.random.uniform(kw, (fan_in, fan_out), jnp.float32, -bound, bound)
    b = jax.random.uniform(kb, (1, fan_out), jnp.float32, -bound, bound)
    return w, b


def init_params(key, dw, dl):
    ks = jax.random.split(key, 8)
    w_spk, b_spk = _linear(ks[0], IN_DIM, EMB)
    wdw, bdw = _linear(ks[1], dw, BOTTLENECK)
    wuw, buw = _linear(ks[2], BOTTLENECK, dw)
    wdl, bdl = _linear(ks[3], dl, BOTTLENECK)
    wul, bul = _linear(ks[4], BOTTLENECK, dl)
    wproj, bproj = _linear(ks[5], dw + dl, DF)
    wflow, bflow = _linear(ks[6], DF + EMB, MEL)
    wdec, bdec = _linear(ks[7], DF, VOCAB)

    bn2 = 2 * BOTTLENECK
    # Fused adapters: block-diagonal down / up weights (exact same math as the
    # two separate adapters followed by concat).
    w_adn = (jnp.zeros((dw + dl, bn2), jnp.float32)
             .at[:dw, :BOTTLENECK].set(wdw)
             .at[dw:, BOTTLENECK:].set(wdl))
    b_adn = jnp.concatenate([bdw, bdl], axis=-1)
    w_aup = (jnp.zeros((bn2, dw + dl), jnp.float32)
             .at[:BOTTLENECK, :dw].set(wuw)
             .at[BOTTLENECK:, dw:].set(wul))
    b_aup = jnp.concatenate([buw, bul], axis=-1)

    pad_m = MEL_PAD - MEL
    pad_v = VOCAB_PAD - VOCAB
    # Fused head: [flow (H part, mel-padded) | decoder (vocab-padded)].
    w_fh = jnp.pad(wflow[:DF], ((0, 0), (0, pad_m)))                # (DF, 128)
    w_dc = jnp.pad(wdec, ((0, 0), (0, pad_v)))                      # (DF, 1024)
    w_head = jnp.concatenate([w_fh, w_dc], axis=1)                  # (DF, 1152)
    b_fh = jnp.pad(bflow, ((0, 0), (0, pad_m)))                     # (1, 128)
    # Padded vocab columns get -1e30 bias -> mask is free inside the kernel.
    b_dc = jnp.pad(bdec, ((0, 0), (0, pad_v)), constant_values=-1e30)
    b_head = jnp.concatenate([b_fh, b_dc], axis=1)                  # (1, 1152)

    bf16 = jnp.bfloat16
    return dict(
        # speaker encoder + flow e-part stay f32, consumed by XLA in the wrapper
        w_spk=w_spk, b_spk=b_spk, w_fe=wflow[DF:],
        # kernel-resident weights (bf16) / biases (f32)
        w_adn=w_adn.astype(bf16), b_adn=b_adn,
        w_aup=w_aup.astype(bf16), b_aup=b_aup,
        w_proj=wproj.astype(bf16), b_proj=bproj,
        w_head=w_head.astype(bf16), b_head=b_head,
    )


# ----------------------------------------------------------------------------
# Wrapper
# ----------------------------------------------------------------------------
def _tiling(T):
    if T >= 512:
        t_tile = 512
    else:
        t_tile = max(8, ((T + 7) // 8) * 8)      # single full-T (sublane-padded) block
    T_pad = ((T + t_tile - 1) // t_tile) * t_tile
    return t_tile, T_pad


def _resident_spec(arr):
    zeros = (0,) * arr.ndim
    return pl.BlockSpec(arr.shape, lambda b, t: zeros)


def tse_forward(params, hf, hl, enroll, txt, noise_key):
    B, T, dw = hf.shape
    dl = hl.shape[-1]
    dsum = dw + dl
    t_tile, T_pad = _tiling(T)
    n_t = T_pad // t_tile
    mask_rows = (T_pad != T)

    f32 = jnp.float32
    bf16 = jnp.bfloat16

    # --- SpeakerEncoder + its FlowSynth contribution, hoisted to XLA ---------
    e = enroll.astype(f32) @ params["w_spk"] + params["b_spk"]          # (B, EMB)
    e_flow = e @ params["w_fe"]                                         # (B, MEL)
    e_flow = jnp.pad(e_flow, ((0, 0), (0, MEL_PAD - MEL)))
    e_flow = e_flow.reshape(B, 1, MEL_PAD)

    # --- activations (pad T to the tile grid; padded rows masked in-kernel) --
    hcat = jnp.concatenate([hf, hl], axis=-1).astype(bf16)              # (B, T, dw+dl)
    txt3 = txt.reshape(B, T, 1).astype(jnp.int32)
    if mask_rows:
        hcat = jnp.pad(hcat, ((0, 0), (0, T_pad - T), (0, 0)))
        txt3 = jnp.pad(txt3, ((0, 0), (0, T_pad - T), (0, 0)))

    # mel_gt ~ N(0,1): generated by XLA, padded mel lanes kept exactly zero.
    mel_gt = jax.random.normal(noise_key, (B, T_pad, MEL), f32)
    mel_gt = jnp.pad(mel_gt, ((0, 0), (0, 0), (0, MEL_PAD - MEL)))

    in_specs = [
        pl.BlockSpec((1, 1, MEL_PAD), lambda b, t: (b, 0, 0)),          # e_flow
        pl.BlockSpec((1, t_tile, dsum), lambda b, t: (b, t, 0)),        # hcat
        pl.BlockSpec((1, t_tile, 1), lambda b, t: (b, t, 0)),           # txt
        pl.BlockSpec((1, t_tile, MEL_PAD), lambda b, t: (b, t, 0)),     # mel_gt
        _resident_spec(params["w_adn"]), _resident_spec(params["b_adn"]),
        _resident_spec(params["w_aup"]), _resident_spec(params["b_aup"]),
        _resident_spec(params["w_proj"]), _resident_spec(params["b_proj"]),
        _resident_spec(params["w_head"]), _resident_spec(params["b_head"]),
    ]
    out_specs = (
        pl.BlockSpec((1, 1, 128), lambda b, t: (b, 0, 0)),
        pl.BlockSpec((1, 1, 128), lambda b, t: (b, 0, 0)),
    )

    grid_spec = pltpu.PrefetchScalarGridSpec(
        num_scalar_prefetch=0,
        grid=(B, n_t),
        in_specs=in_specs,
        out_specs=out_specs,
    )

    kernel = functools.partial(
        _tse_kernel, seq_len=T, t_tile=t_tile, mask_rows=mask_rows)

    # TODO(synk): on v7x with B<=2, a (B, 2, n_t/2) grid with the middle axis
    # "parallel" would use both TensorCores; omitted to keep one code path.
    lflow_p, lce_p = pl.pallas_call(
        kernel,
        grid_spec=grid_spec,
        out_shape=(
            jax.ShapeDtypeStruct((B, 1, 128), f32),
            jax.ShapeDtypeStruct((B, 1, 128), f32),
        ),
        compiler_params=pltpu.CompilerParams(
            dimension_semantics=("parallel", "arbitrary")),
    )(
        e_flow, hcat, txt3, mel_gt,
        params["w_adn"], params["b_adn"], params["w_aup"], params["b_aup"],
        params["w_proj"], params["b_proj"],
        params["w_head"], params["b_head"],
    )

    # Normalize by TRUE (unpadded) element counts.
    l_flow = jnp.sum(lflow_p[:, 0, 0]) / float(B * T * MEL)
    l_ce = jnp.sum(lce_p[:, 0, 0]) / float(B * T)
    return l_flow, l_ce


# ----------------------------------------------------------------------------
if __name__ == "__main__":
    B, T, dw, dl = 2, 8, 32, 32

    key = jax.random.PRNGKey(0)
    k_par, k_hf, k_hl, k_en, k_txt, k_noise = jax.random.split(key, 6)

    params = init_params(k_par, dw, dl)
    hf = jax.random.normal(k_hf, (B, T, dw), jnp.float32)
    hl = jax.random.normal(k_hl, (B, T, dl), jnp.float32)
    enroll = jax.random.normal(k_en, (B, IN_DIM), jnp.float32)
    txt = jax.random.randint(k_txt, (B, T), 0, VOCAB, dtype=jnp.int32)

    l_flow, l_ce = jax.jit(tse_forward)(params, hf, hl, enroll, txt, k_noise)
    jax.block_until_ready((l_flow, l_ce))
    print("KERNEL_OK")
</pallas_src>

<mosaic_0001>
module attributes {stable_mosaic.version = 11 : i64} {
  func.func @_tse_kernel(%arg0: i32, %arg1: i32, %arg2: memref<1x1x128xf32, #tpu.memory_space<vmem>>, %arg3: memref<1x8x64xbf16, #tpu.memory_space<vmem>>, %arg4: memref<1x8x1xi32, #tpu.memory_space<vmem>>, %arg5: memref<1x8x128xf32, #tpu.memory_space<vmem>>, %arg6: memref<64x128xbf16, #tpu.memory_space<vmem>>, %arg7: memref<1x128xf32, #tpu.memory_space<vmem>>, %arg8: memref<128x64xbf16, #tpu.memory_space<vmem>>, %arg9: memref<1x64xf32, #tpu.memory_space<vmem>>, %arg10: memref<64x512xbf16, #tpu.memory_space<vmem>>, %arg11: memref<1x512xf32, #tpu.memory_space<vmem>>, %arg12: memref<512x1152xbf16, #tpu.memory_space<vmem>>, %arg13: memref<1x1152xf32, #tpu.memory_space<vmem>>, %arg14: memref<1x1x128xf32, #tpu.memory_space<vmem>>, %arg15: memref<1x1x128xf32, #tpu.memory_space<vmem>>) attributes {dimension_semantics = [#tpu.dimension_semantics<parallel>, #tpu.dimension_semantics<arbitrary>], iteration_bounds = array<i64: 2, 1>, scalar_prefetch = 0 : i64, scratch_operands = 0 : i64, tpu.core_type = #tpu.core_type<tc>, window_params = [{transform_indices = @transform_0, window_bounds = array<i64: 1, 1, 128>}, {transform_indices = @transform_1, window_bounds = array<i64: 1, 8, 64>}, {transform_indices = @transform_2, window_bounds = array<i64: 1, 8, 1>}, {transform_indices = @transform_3, window_bounds = array<i64: 1, 8, 128>}, {pipeline_mode = #tpu.pipeline_mode<synchronous>, transform_indices = @transform_4, window_bounds = array<i64: 64, 128>}, {pipeline_mode = #tpu.pipeline_mode<synchronous>, transform_indices = @transform_5, window_bounds = array<i64: 1, 128>}, {pipeline_mode = #tpu.pipeline_mode<synchronous>, transform_indices = @transform_6, window_bounds = array<i64: 128, 64>}, {pipeline_mode = #tpu.pipeline_mode<synchronous>, transform_indices = @transform_7, window_bounds = array<i64: 1, 64>}, {pipeline_mode = #tpu.pipeline_mode<synchronous>, transform_indices = @transform_8, window_bounds = array<i64: 64, 512>}, {pipeline_mode = #tpu.pipeline_mode<synchronous>, transform_indices = @transform_9, window_bounds = array<i64: 1, 512>}, {pipeline_mode = #tpu.pipeline_mode<synchronous>, transform_indices = @transform_10, window_bounds = array<i64: 512, 1152>}, {pipeline_mode = #tpu.pipeline_mode<synchronous>, transform_indices = @transform_11, window_bounds = array<i64: 1, 1152>}, {transform_indices = @transform_12, window_bounds = array<i64: 1, 1, 128>}, {transform_indices = @transform_13, window_bounds = array<i64: 1, 1, 128>}]} {
    %c0 = arith.constant 0 : index
    %c0_0 = arith.constant 0 : index
    %c0_1 = arith.constant 0 : index
    %0 = vector.load %arg3[%c0, %c0_0, %c0_1] : memref<1x8x64xbf16, #tpu.memory_space<vmem>>, vector<1x8x64xbf16>
    %1 = vector.shape_cast %0 : vector<1x8x64xbf16> to vector<8x64xbf16>
    %c0_2 = arith.constant 0 : index
    %c0_3 = arith.constant 0 : index
    %2 = vector.load %arg6[%c0_2, %c0_3] : memref<64x128xbf16, #tpu.memory_space<vmem>>, vector<64x128xbf16>
    %cst = arith.constant dense<0.000000e+00> : vector<8x128xf32>
    %3 = tpu.matmul %1, %2, %cst {dimension_numbers = #tpu.dot_dimension_numbers<[1], [0], [0], [1], [0, 0, 1, 1], [], []>} : vector<8x64xbf16>, vector<64x128xbf16>, vector<8x128xf32> -> vector<8x128xf32>
    %c0_4 = arith.constant 0 : index
    %c0_5 = arith.constant 0 : index
    %4 = vector.load %arg7[%c0_4, %c0_5] : memref<1x128xf32, #tpu.memory_space<vmem>>, vector<1x128xf32>
    %5 = vector.broadcast %4 : vector<1x128xf32> to vector<8x128xf32>
    %6 = arith.addf %3, %5 : vector<8x128xf32>
    %cst_6 = arith.constant 0.000000e+00 : f32
    %7 = vector.broadcast %cst_6 : f32 to vector<8x128xf32>
    %8 = arith.maximumf %6, %7 : vector<8x128xf32>
    %9 = arith.truncf %8 : vector<8x128xf32> to vector<8x128xbf16>
    %c0_7 = arith.constant 0 : index
    %c0_8 = arith.constant 0 : index
    %10 = vector.load %arg8[%c0_7, %c0_8] : memref<128x64xbf16, #tpu.memory_space<vmem>>, vector<128x64xbf16>
    %cst_9 = arith.constant dense<0.000000e+00> : vector<8x64xf32>
    %11 = tpu.matmul %9, %10, %cst_9 {dimension_numbers = #tpu.dot_dimension_numbers<[1], [0], [0], [1], [0, 0, 1, 1], [], []>} : vector<8x128xbf16>, vector<128x64xbf16>, vector<8x64xf32> -> vector<8x64xf32>
    %c0_10 = arith.constant 0 : index
    %c0_11 = arith.constant 0 : index
    %12 = vector.load %arg9[%c0_10, %c0_11] : memref<1x64xf32, #tpu.memory_space<vmem>>, vector<1x64xf32>
    %13 = vector.broadcast %12 : vector<1x64xf32> to vector<8x64xf32>
    %14 = arith.addf %11, %13 : vector<8x64xf32>
    %15 = arith.truncf %14 : vector<8x64xf32> to vector<8x64xbf16>
    %c0_12 = arith.constant 0 : index
    %c0_13 = arith.constant 0 : index
    %16 = vector.load %arg10[%c0_12, %c0_13] : memref<64x512xbf16, #tpu.memory_space<vmem>>, vector<64x512xbf16>
    %cst_14 = arith.constant dense<0.000000e+00> : vector<8x512xf32>
    %17 = tpu.matmul %15, %16, %cst_14 {dimension_numbers = #tpu.dot_dimension_numbers<[1], [0], [0], [1], [0, 0, 1, 1], [], []>} : vector<8x64xbf16>, vector<64x512xbf16>, vector<8x512xf32> -> vector<8x512xf32>
    %c0_15 = arith.constant 0 : index
    %c0_16 = arith.constant 0 : index
    %18 = vector.load %arg11[%c0_15, %c0_16] : memref<1x512xf32, #tpu.memory_space<vmem>>, vector<1x512xf32>
    %19 = vector.broadcast %18 : vector<1x512xf32> to vector<8x512xf32>
    %20 = arith.addf %17, %19 : vector<8x512xf32>
    %21 = arith.truncf %20 : vector<8x512xf32> to vector<8x512xbf16>
    %c0_17 = arith.constant 0 : index
    %c0_18 = arith.constant 0 : index
    %22 = vector.load %arg12[%c0_17, %c0_18] : memref<512x1152xbf16, #tpu.memory_space<vmem>>, vector<512x1152xbf16>
    %cst_19 = arith.constant dense<0.000000e+00> : vector<8x1152xf32>
    %23 = tpu.matmul %21, %22, %cst_19 {dimension_numbers = #tpu.dot_dimension_numbers<[1], [0], [0], [1], [0, 0, 1, 1], [], []>} : vector<8x512xbf16>, vector<512x1152xbf16>, vector<8x1152xf32> -> vector<8x1152xf32>
    %c0_20 = arith.constant 0 : index
    %c0_21 = arith.constant 0 : index
    %24 = vector.load %arg13[%c0_20, %c0_21] : memref<1x1152xf32, #tpu.memory_space<vmem>>, vector<1x1152xf32>
    %25 = vector.broadcast %24 : vector<1x1152xf32> to vector<8x1152xf32>
    %26 = arith.addf %23, %25 : vector<8x1152xf32>
    %27 = vector.extract_strided_slice %26 {offsets = [0, 0], sizes = [8, 128], strides = [1, 1]} : vector<8x1152xf32> to vector<8x128xf32>
    %c0_22 = arith.constant 0 : index
    %c0_23 = arith.constant 0 : index
    %c0_24 = arith.constant 0 : index
    %28 = vector.load %arg2[%c0_22, %c0_23, %c0_24] : memref<1x1x128xf32, #tpu.memory_space<vmem>>, vector<1x1x128xf32>
    %29 = vector.shape_cast %28 : vector<1x1x128xf32> to vector<1x128xf32>
    %30 = vector.broadcast %29 : vector<1x128xf32> to vector<8x128xf32>
    %31 = arith.addf %27, %30 : vector<8x128xf32>
    %c0_25 = arith.constant 0 : index
    %c0_26 = arith.constant 0 : index
    %c0_27 = arith.constant 0 : index
    %32 = vector.load %arg5[%c0_25, %c0_26, %c0_27] : memref<1x8x128xf32, #tpu.memory_space<vmem>>, vector<1x8x128xf32>
    %33 = vector.shape_cast %32 : vector<1x8x128xf32> to vector<8x128xf32>
    %34 = arith.subf %31, %33 : vector<8x128xf32>
    %35 = arith.mulf %34, %34 : vector<8x128xf32>
    %36 = vector.shape_cast %35 : vector<8x128xf32> to vector<1x8x128xf32>
    %cst_28 = arith.constant dense<0.000000e+00> : vector<1xf32>
    %37 = vector.multi_reduction <add>, %36, %cst_28 [1, 2] : vector<1x8x128xf32> to vector<1xf32>
    %38 = vector.shape_cast %37 : vector<1xf32> to vector<1x1x1xf32>
    %39 = vector.extract %38[0, 0, 0] : f32 from vector<1x1x1xf32>
    %40 = vector.extract_strided_slice %26 {offsets = [0, 128], sizes = [8, 1024], strides = [1, 1]} : vector<8x1152xf32> to vector<8x1024xf32>
    %cst_29 = arith.constant dense<0xFF800000> : vector<8xf32>
    %41 = vector.multi_reduction <maximumf>, %40, %cst_29 [1] : vector<8x1024xf32> to vector<8xf32>
    %42 = vector.shape_cast %41 : vector<8xf32> to vector<8x1xf32>
    %43 = vector.broadcast %42 : vector<8x1xf32> to vector<8x1024xf32>
    %44 = arith.subf %40, %43 : vector<8x1024xf32>
    %45 = math.exp %44 : vector<8x1024xf32>
    %cst_30 = arith.constant dense<0.000000e+00> : vector<8xf32>
    %46 = vector.multi_reduction <add>, %45, %cst_30 [1] : vector<8x1024xf32> to vector<8xf32>
    %47 = vector.shape_cast %46 : vector<8xf32> to vector<8x1xf32>
    %48 = math.log %47 : vector<8x1xf32>
    %49 = arith.addf %42, %48 : vector<8x1xf32>
    %50 = tpu.iota {dimensions = array<i32: 1>} : vector<8x1024xi32>
    %c0_31 = arith.constant 0 : index
    %c0_32 = arith.constant 0 : index
    %c0_33 = arith.constant 0 : index
    %51 = vector.load %arg4[%c0_31, %c0_32, %c0_33] : memref<1x8x1xi32, #tpu.memory_space<vmem>>, vector<1x8x1xi32>
    %52 = vector.shape_cast %51 : vector<1x8x1xi32> to vector<8x1xi32>
    %53 = vector.broadcast %52 : vector<8x1xi32> to vector<8x1024xi32>
    %54 = arith.cmpi eq, %50, %53 : vector<8x1024xi32>
    %cst_34 = arith.constant 0.000000e+00 : f32
    %55 = vector.broadcast %cst_34 : f32 to vector<8x1024xf32>
    %56 = arith.select %54, %40, %55 : vector<8x1024xi1>, vector<8x1024xf32>
    %cst_35 = arith.constant dense<0.000000e+00> : vector<8xf32>
    %57 = vector.multi_reduction <add>, %56, %cst_35 [1] : vector<8x1024xf32> to vector<8xf32>
    %58 = vector.shape_cast %57 : vector<8xf32> to vector<8x1xf32>
    %59 = arith.subf %49, %58 : vector<8x1xf32>
    %60 = vector.shape_cast %59 : vector<8x1xf32> to vector<1x8x1xf32>
    %cst_36 = arith.constant dense<0.000000e+00> : vector<1xf32>
    %61 = vector.multi_reduction <add>, %60, %cst_36 [1, 2] : vector<1x8x1xf32> to vector<1xf32>
    %62 = vector.shape_cast %61 : vector<1xf32> to vector<1x1x1xf32>
    %63 = vector.extract %62[0, 0, 0] : f32 from vector<1x1x1xf32>
    %c0_i32 = arith.constant 0 : i32
    %64 = arith.cmpi eq, %arg1, %c0_i32 : i32
    %65 = arith.extui %64 : i1 to i32
    %c0_i32_37 = arith.constant 0 : i32
    %66 = arith.cmpi ne, %65, %c0_i32_37 : i32
    scf.if %66 {
      %cst_50 = arith.constant 0.000000e+00 : f32
      %75 = vector.broadcast %cst_50 : f32 to vector<1x1x128xf32>
      %c0_51 = arith.constant 0 : index
      %c0_52 = arith.constant 0 : index
      %c0_53 = arith.constant 0 : index
      %76 = vector.load %arg14[%c0_51, %c0_52, %c0_53] : memref<1x1x128xf32, #tpu.memory_space<vmem>>, vector<1x1x128xf32>
      tpu.vector_store %arg14[%c0_51, %c0_52, %c0_53], %75 {strides = array<i32>} : memref<1x1x128xf32, #tpu.memory_space<vmem>>, vector<1x1x128xf32>,
      %cst_54 = arith.constant 0.000000e+00 : f32
      %77 = vector.broadcast %cst_54 : f32 to vector<1x1x128xf32>
      %c0_55 = arith.constant 0 : index
      %c0_56 = arith.constant 0 : index
      %c0_57 = arith.constant 0 : index
      %78 = vector.load %arg15[%c0_55, %c0_56, %c0_57] : memref<1x1x128xf32, #tpu.memory_space<vmem>>, vector<1x1x128xf32>
      tpu.vector_store %arg15[%c0_55, %c0_56, %c0_57], %77 {strides = array<i32>} : memref<1x1x128xf32, #tpu.memory_space<vmem>>, vector<1x1x128xf32>,
    } else {
    }
    %c0_38 = arith.constant 0 : index
    %c0_39 = arith.constant 0 : index
    %c0_40 = arith.constant 0 : index
    %67 = vector.load %arg14[%c0_38, %c0_39, %c0_40] : memref<1x1x128xf32, #tpu.memory_space<vmem>>, vector<1x1x128xf32>
    %68 = vector.broadcast %39 : f32 to vector<1x1x128xf32>
    %69 = arith.addf %67, %68 : vector<1x1x128xf32>
    %c0_41 = arith.constant 0 : index
    %c0_42 = arith.constant 0 : index
    %c0_43 = arith.constant 0 : index
    %70 = vector.load %arg14[%c0_41, %c0_42, %c0_43] : memref<1x1x128xf32, #tpu.memory_space<vmem>>, vector<1x1x128xf32>
    tpu.vector_store %arg14[%c0_41, %c0_42, %c0_43], %69 {strides = array<i32>} : memref<1x1x128xf32, #tpu.memory_space<vmem>>, vector<1x1x128xf32>,
    %c0_44 = arith.constant 0 : index
    %c0_45 = arith.constant 0 : index
    %c0_46 = arith.constant 0 : index
    %71 = vector.load %arg15[%c0_44, %c0_45, %c0_46] : memref<1x1x128xf32, #tpu.memory_space<vmem>>, vector<1x1x128xf32>
    %72 = vector.broadcast %63 : f32 to vector<1x1x128xf32>
    %73 = arith.addf %71, %72 : vector<1x1x128xf32>
    %c0_47 = arith.constant 0 : index
    %c0_48 = arith.constant 0 : index
    %c0_49 = arith.constant 0 : index
    %74 = vector.load %arg15[%c0_47, %c0_48, %c0_49] : memref<1x1x128xf32, #tpu.memory_space<vmem>>, vector<1x1x128xf32>
    tpu.vector_store %arg15[%c0_47, %c0_48, %c0_49], %73 {strides = array<i32>} : memref<1x1x128xf32, #tpu.memory_space<vmem>>, vector<1x1x128xf32>,
    return
  }
  func.func @transform_0(%arg0: i32, %arg1: i32) -> (i32, i32, i32) {
    %c0_i32 = arith.constant 0 : i32
    %c0_i32_0 = arith.constant 0 : i32
    %c0_i32_1 = arith.constant 0 : i32
    return %arg0, %c0_i32, %c0_i32_0 : i32, i32, i32
  }
  func.func @transform_1(%arg0: i32, %arg1: i32) -> (i32, i32, i32) {
    %c0_i32 = arith.constant 0 : i32
    %c0_i32_0 = arith.constant 0 : i32
    return %arg0, %arg1, %c0_i32 : i32, i32, i32
  }
  func.func @transform_2(%arg0: i32, %arg1: i32) -> (i32, i32, i32) {
    %c0_i32 = arith.constant 0 : i32
    %c0_i32_0 = arith.constant 0 : i32
    return %arg0, %arg1, %c0_i32 : i32, i32, i32
  }
  func.func @transform_3(%arg0: i32, %arg1: i32) -> (i32, i32, i32) {
    %c0_i32 = arith.constant 0 : i32
    %c0_i32_0 = arith.constant 0 : i32
    return %arg0, %arg1, %c0_i32 : i32, i32, i32
  }
  func.func @transform_4(%arg0: i32, %arg1: i32) -> (i32, i32) {
    %c0_i32 = arith.constant 0 : i32
    %c0_i32_0 = arith.constant 0 : i32
    %c0_i32_1 = arith.constant 0 : i32
    return %c0_i32, %c0_i32_0 : i32, i32
  }
  func.func @transform_5(%arg0: i32, %arg1: i32) -> (i32, i32) {
    %c0_i32 = arith.constant 0 : i32
    %c0_i32_0 = arith.constant 0 : i32
    %c0_i32_1 = arith.constant 0 : i32
    return %c0_i32, %c0_i32_0 : i32, i32
  }
  func.func @transform_6(%arg0: i32, %arg1: i32) -> (i32, i32) {
    %c0_i32 = arith.constant 0 : i32
    %c0_i32_0 = arith.constant 0 : i32
    %c0_i32_1 = arith.constant 0 : i32
    return %c0_i32, %c0_i32_0 : i32, i32
  }
  func.func @transform_7(%arg0: i32, %arg1: i32) -> (i32, i32) {
    %c0_i32 = arith.constant 0 : i32
    %c0_i32_0 = arith.constant 0 : i32
    %c0_i32_1 = arith.constant 0 : i32
    return %c0_i32, %c0_i32_0 : i32, i32
  }
  func.func @transform_8(%arg0: i32, %arg1: i32) -> (i32, i32) {
    %c0_i32 = arith.constant 0 : i32
    %c0_i32_0 = arith.constant 0 : i32
    %c0_i32_1 = arith.constant 0 : i32
    return %c0_i32, %c0_i32_0 : i32, i32
  }
  func.func @transform_9(%arg0: i32, %arg1: i32) -> (i32, i32) {
    %c0_i32 = arith.constant 0 : i32
    %c0_i32_0 = arith.constant 0 : i32
    %c0_i32_1 = arith.constant 0 : i32
    return %c0_i32, %c0_i32_0 : i32, i32
  }
  func.func @transform_10(%arg0: i32, %arg1: i32) -> (i32, i32) {
    %c0_i32 = arith.constant 0 : i32
    %c0_i32_0 = arith.constant 0 : i32
    %c0_i32_1 = arith.constant 0 : i32
    return %c0_i32, %c0_i32_0 : i32, i32
  }
  func.func @transform_11(%arg0: i32, %arg1: i32) -> (i32, i32) {
    %c0_i32 = arith.constant 0 : i32
    %c0_i32_0 = arith.constant 0 : i32
    %c0_i32_1 = arith.constant 0 : i32
    return %c0_i32, %c0_i32_0 : i32, i32
  }
  func.func @transform_12(%arg0: i32, %arg1: i32) -> (i32, i32, i32) {
    %c0_i32 = arith.constant 0 : i32
    %c0_i32_0 = arith.constant 0 : i32
    %c0_i32_1 = arith.constant 0 : i32
    return %arg0, %c0_i32, %c0_i32_0 : i32, i32, i32
  }
  func.func @transform_13(%arg0: i32, %arg1: i32) -> (i32, i32, i32) {
    %c0_i32 = arith.constant 0 : i32
    %c0_i32_0 = arith.constant 0 : i32
    %c0_i32_1 = arith.constant 0 : i32
    return %arg0, %c0_i32, %c0_i32_0 : i32, i32, i32
  }
}

</mosaic_0001>

<llo_original>
// kernel: tse_forward.1
$region0: #{tse_forward.1}
  #allocation0 [shape = 'u32[]', space=smem, size = 0x4, offset = 0x4, fixed_abs, tag = 'smem constant byte address 0x4 - core index']
  #allocation1 [shape = 'u32[144,128]{1,0:T(1,128)}', space=vmem, size = 0x12000, scoped, tag = 'internal scratch']
  %s0 = inlined_call_operand.vmem [shape: f32[2,1,128], index: 0, kind: input, shape index: {}]
  %s1 = inlined_call_operand.vmem [shape: bf16[2,8,64], index: 1, kind: input, shape index: {}]
  %s2 = inlined_call_operand.vmem [shape: s32[2,8,1], index: 2, kind: input, shape index: {}]
  %s3 = inlined_call_operand.vmem [shape: f32[2,8,128], index: 3, kind: input, shape index: {}]
  %s4 = inlined_call_operand.vmem [shape: bf16[64,128], index: 4, kind: input, shape index: {}]
  %s5 = inlined_call_operand.vmem [shape: f32[1,128], index: 5, kind: input, shape index: {}]
  %s6 = inlined_call_operand.vmem [shape: bf16[128,64], index: 6, kind: input, shape index: {}]
  %s7 = inlined_call_operand.vmem [shape: f32[1,64], index: 7, kind: input, shape index: {}]
  %s8 = inlined_call_operand.vmem [shape: bf16[64,512], index: 8, kind: input, shape index: {}]
  %s9 = inlined_call_operand.vmem [shape: f32[1,512], index: 9, kind: input, shape index: {}]
  %s10 = inlined_call_operand.vmem [shape: bf16[512,1152], index: 10, kind: input, shape index: {}]
  %s11 = inlined_call_operand.vmem [shape: f32[1,1152], index: 11, kind: input, shape index: {}]
  %s12 = inlined_call_operand.vmem [shape: f32[2,1,128], index: 12, kind: output, shape index: {0}]
  %s13 = inlined_call_operand.vmem [shape: f32[2,1,128], index: 13, kind: output, shape index: {1}]
  %14 = xla_tuple %s12, %s13
  %s15 = sld [smem:[#allocation0]]
  $region93: #{tse_forward.1} parent=0
    _
  %s17 = ssub.s32 1, %s15
  %s18 = scalar_select 0, %s17, %s15
  loop: start=0, step=1, limit=4
  $region2: #{tse_forward.1} parent=0 // loop_pre_header
    _
  $region3: #{tse_forward.1} parent=0 // loop_header
    %s20 = sphi 0, %s24
    %p21 = scmp.ge.s32.totalorder %s20, 4
    %s27 = sphi 0, %s39
    %s28 = sphi 0, %s35
    %s29 = sphi 0, %s27
    %s30 = sphi 0, %s28
    %s31 = sphi 0, %s29
    %s32 = sphi 0, %s30
    %s42 = sphi 0, %s44
    %s45 = sphi 0, %s42
    %s46 = sphi 0, %s45
    %s62 = sphi 0, %s46
    %s70 = sphi 0, %s72
    %s73 = sphi 0, %s70
    %s74 = sphi 0, %s73
    %s90 = sphi 0, %s74
    %s98 = sphi 0, %s100
    %s101 = sphi 0, %s98
    %s102 = sphi 0, %s101
    %s118 = sphi 0, %s102
    %s126 = sphi 0, %s128
    %s129 = sphi 0, %s126
    %s130 = sphi 0, %s129
    %s146 = sphi 0, %s130
    %s150 = sphi 0, %s150
    %s152 = sphi 0, %s150
    %s153 = sphi 0, %s152
    %s167 = sphi 0, %s153
    %s171 = sphi 0, %s171
    %s173 = sphi 0, %s171
    %s174 = sphi 0, %s173
    %s188 = sphi 0, %s174
    %s192 = sphi 0, %s192
    %s194 = sphi 0, %s192
    %s195 = sphi 0, %s194
    %s209 = sphi 0, %s195
    %s213 = sphi 0, %s213
    %s215 = sphi 0, %s213
    %s216 = sphi 0, %s215
    %s230 = sphi 0, %s216
    %s234 = sphi 0, %s234
    %s236 = sphi 0, %s234
    %s237 = sphi 0, %s236
    %s251 = sphi 0, %s237
    %s255 = sphi 0, %s255
    %s257 = sphi 0, %s255
    %s258 = sphi 0, %s257
    %s272 = sphi 0, %s258
    %s276 = sphi 0, %s276
    %s278 = sphi 0, %s276
    %s279 = sphi 0, %s278
    %s293 = sphi 0, %s279
    %s297 = sphi 0, %s297
    %s299 = sphi 0, %s297
    %s300 = sphi 0, %s299
    %s314 = sphi 0, %s300
    %s320 = sphi 0, %s322
    %s323 = sphi 0, %s320
    %s324 = sphi 0, %s323
    %s340 = sphi 0, %s324
    %s346 = sphi 0, %s348
    %s349 = sphi 0, %s346
    %s350 = sphi 0, %s349
    %s366 = sphi 0, %s350
  $region4: #{tse_forward.1} parent=0 // loop_header_branch
    %23 = sbr.rel (%p21) target = $region8
  $region5: #{tse_forward.1} parent=0 // loop_body
    %s25 = ssub.s32 %s20, 1
    %s26 = ssub.s32 %s20, 2
    %s33 = sadd.s32 1, %s28
    %p34 = scmp.ge.s32.totalorder %s33, 1
    %s35 = scalar_select %p34, 0, %s33
    %s36 = sadd.s32 1, %s27
    %s37 = scalar_select %p34, %s36, %s27
    %p38 = scmp.ge.s32.totalorder %s37, 2
    %s39 = scalar_select %p38, 0, %s37
    %s40 = ssub.s32 %s27, %s39
    %p41 = scmp.eq.s32.totalorder %s40, 0
    %s43 = sadd.s32 %s42, 1
    %s44 = scalar_select %p41, %s42, %s43
    %p47 = pneg %p41
    %p48 = scmp.eq.s32.totalorder %s20, 1
    %p49 = por %p47, %p48
    %p50 = scmp.ne.s32.totalorder %s42, %s45
    %p51 = scmp.eq.s32.totalorder %s20, 0
    %p52 = por %p50, %p51
    %p53 = scmp.ne.s32.totalorder %s42, %s45
    %p54 = scmp.eq.s32.totalorder %s25, 1
    %p55 = por %p53, %p54
    %p56 = scmp.ne.s32.totalorder %s45, %s46
    %p57 = scmp.eq.s32.totalorder %s25, 0
    %p58 = por %p56, %p57
    %p59 = scmp.ne.s32.totalorder %s45, %s46
    %p60 = scmp.eq.s32.totalorder %s26, 1
    %p61 = por %p59, %p60
    %p63 = scmp.ne.s32.totalorder %s46, %s62
    %p64 = scmp.eq.s32.totalorder %s26, 0
    %p65 = por %p63, %p64
    %s66 = ssub.s32 %s27, %s39
    %s67 = ssub.s32 %s28, %s35
    %s68 = sor.u32 %s66, %s67
    %p69 = scmp.eq.s32.totalorder %s68, 0
    %s71 = sadd.s32 %s70, 1
    %s72 = scalar_select %p69, %s70, %s71
    %p75 = pneg %p69
    %p76 = scmp.eq.s32.totalorder %s20, 1
    %p77 = por %p75, %p76
    %p78 = scmp.ne.s32.totalorder %s70, %s73
    %p79 = scmp.eq.s32.totalorder %s20, 0
    %p80 = por %p78, %p79
    %p81 = scmp.ne.s32.totalorder %s70, %s73
    %p82 = scmp.eq.s32.totalorder %s25, 1
    %p83 = por %p81, %p82
    %p84 = scmp.ne.s32.totalorder %s73, %s74
    %p85 = scmp.eq.s32.totalorder %s25, 0
    %p86 = por %p84, %p85
    %p87 = scmp.ne.s32.totalorder %s73, %s74
    %p88 = scmp.eq.s32.totalorder %s26, 1
    %p89 = por %p87, %p88
    %p91 = scmp.ne.s32.totalorder %s74, %s90
    %p92 = scmp.eq.s32.totalorder %s26, 0
    %p93 = por %p91, %p92
    %s94 = ssub.s32 %s27, %s39
    %s95 = ssub.s32 %s28, %s35
    %s96 = sor.u32 %s94, %s95
    %p97 = scmp.eq.s32.totalorder %s96, 0
    %s99 = sadd.s32 %s98, 1
    %s100 = scalar_select %p97, %s98, %s99
    %p103 = pneg %p97
    %p104 = scmp.eq.s32.totalorder %s20, 1
    %p105 = por %p103, %p104
    %p106 = scmp.ne.s32.totalorder %s98, %s101
    %p107 = scmp.eq.s32.totalorder %s20, 0
    %p108 = por %p106, %p107
    %p109 = scmp.ne.s32.totalorder %s98, %s101
    %p110 = scmp.eq.s32.totalorder %s25, 1
    %p111 = por %p109, %p110
    %p112 = scmp.ne.s32.totalorder %s101, %s102
    %p113 = scmp.eq.s32.totalorder %s25, 0
    %p114 = por %p112, %p113
    %p115 = scmp.ne.s32.totalorder %s101, %s102
    %p116 = scmp.eq.s32.totalorder %s26, 1
    %p117 = por %p115, %p116
    %p119 = scmp.ne.s32.totalorder %s102, %s118
    %p120 = scmp.eq.s32.totalorder %s26, 0
    %p121 = por %p119, %p120
    %s122 = ssub.s32 %s27, %s39
    %s123 = ssub.s32 %s28, %s35
    %s124 = sor.u32 %s122, %s123
    %p125 = scmp.eq.s32.totalorder %s124, 0
    %s127 = sadd.s32 %s126, 1
    %s128 = scalar_select %p125, %s126, %s127
    %p131 = pneg %p125
    %p132 = scmp.eq.s32.totalorder %s20, 1
    %p133 = por %p131, %p132
    %p134 = scmp.ne.s32.totalorder %s126, %s129
    %p135 = scmp.eq.s32.totalorder %s20, 0
    %p136 = por %p134, %p135
    %p137 = scmp.ne.s32.totalorder %s126, %s129
    %p138 = scmp.eq.s32.totalorder %s25, 1
    %p139 = por %p137, %p138
    %p140 = scmp.ne.s32.totalorder %s129, %s130
    %p141 = scmp.eq.s32.totalorder %s25, 0
    %p142 = por %p140, %p141
    %p143 = scmp.ne.s32.totalorder %s129, %s130
    %p144 = scmp.eq.s32.totalorder %s26, 1
    %p145 = por %p143, %p144
    %p147 = scmp.ne.s32.totalorder %s130, %s146
    %p148 = scmp.eq.s32.totalorder %s26, 0
    %p149 = por %p147, %p148
    %s151 = sadd.s32 %s150, 1
    %p154 = scmp.eq.s32.totalorder %s20, 1
    %p155 = scmp.ne.s32.totalorder %s150, %s152
    %p156 = scmp.eq.s32.totalorder %s20, 0
    %p157 = por %p155, %p156
    %p158 = scmp.ne.s32.totalorder %s150, %s152
    %p159 = scmp.eq.s32.totalorder %s25, 1
    %p160 = por %p158, %p159
    %p161 = scmp.ne.s32.totalorder %s152, %s153
    %p162 = scmp.eq.s32.totalorder %s25, 0
    %p163 = por %p161, %p162
    %p164 = scmp.ne.s32.totalorder %s152, %s153
    %p165 = scmp.eq.s32.totalorder %s26, 1
    %p166 = por %p164, %p165
    %p168 = scmp.ne.s32.totalorder %s153, %s167
    %p169 = scmp.eq.s32.totalorder %s26, 0
    %p170 = por %p168, %p169
    %s172 = sadd.s32 %s171, 1
    %p175 = scmp.eq.s32.totalorder %s20, 1
    %p176 = scmp.ne.s32.totalorder %s171, %s173
    %p177 = scmp.eq.s32.totalorder %s20, 0
    %p178 = por %p176, %p177
    %p179 = scmp.ne.s32.totalorder %s171, %s173
    %p180 = scmp.eq.s32.totalorder %s25, 1
    %p181 = por %p179, %p180
    %p182 = scmp.ne.s32.totalorder %s173, %s174
    %p183 = scmp.eq.s32.totalorder %s25, 0
    %p184 = por %p182, %p183
    %p185 = scmp.ne.s32.totalorder %s173, %s174
    %p186 = scmp.eq.s32.totalorder %s26, 1
    %p187 = por %p185, %p186
    %p189 = scmp.ne.s32.totalorder %s174, %s188
    %p190 = scmp.eq.s32.totalorder %s26, 0
    %p191 = por %p189, %p190
    %s193 = sadd.s32 %s192, 1
    %p196 = scmp.eq.s32.totalorder %s20, 1
    %p197 = scmp.ne.s32.totalorder %s192, %s194
    %p198 = scmp.eq.s32.totalorder %s20, 0
    %p199 = por %p197, %p198
    %p200 = scmp.ne.s32.totalorder %s192, %s194
    %p201 = scmp.eq.s32.totalorder %s25, 1
    %p202 = por %p200, %p201
    %p203 = scmp.ne.s32.totalorder %s194, %s195
    %p204 = scmp.eq.s32.totalorder %s25, 0
    %p205 = por %p203, %p204
    %p206 = scmp.ne.s32.totalorder %s194, %s195
    %p207 = scmp.eq.s32.totalorder %s26, 1
    %p208 = por %p206, %p207
    %p210 = scmp.ne.s32.totalorder %s195, %s209
    %p211 = scmp.eq.s32.totalorder %s26, 0
    %p212 = por %p210, %p211
    %s214 = sadd.s32 %s213, 1
    %p217 = scmp.eq.s32.totalorder %s20, 1
    %p218 = scmp.ne.s32.totalorder %s213, %s215
    %p219 = scmp.eq.s32.totalorder %s20, 0
    %p220 = por %p218, %p219
    %p221 = scmp.ne.s32.totalorder %s213, %s215
    %p222 = scmp.eq.s32.totalorder %s25, 1
    %p223 = por %p221, %p222
    %p224 = scmp.ne.s32.totalorder %s215, %s216
    %p225 = scmp.eq.s32.totalorder %s25, 0
    %p226 = por %p224, %p225
    %p227 = scmp.ne.s32.totalorder %s215, %s216
    %p228 = scmp.eq.s32.totalorder %s26, 1
    %p229 = por %p227, %p228
    %p231 = scmp.ne.s32.totalorder %s216, %s230
    %p232 = scmp.eq.s32.totalorder %s26, 0
    %p233 = por %p231, %p232
    %s235 = sadd.s32 %s234, 1
    %p238 = scmp.eq.s32.totalorder %s20, 1
    %p239 = scmp.ne.s32.totalorder %s234, %s236
    %p240 = scmp.eq.s32.totalorder %s20, 0
    %p241 = por %p239, %p240
    %p242 = scmp.ne.s32.totalorder %s234, %s236
    %p243 = scmp.eq.s32.totalorder %s25, 1
    %p244 = por %p242, %p243
    %p245 = scmp.ne.s32.totalorder %s236, %s237
    %p246 = scmp.eq.s32.totalorder %s25, 0
    %p247 = por %p245, %p246
    %p248 = scmp.ne.s32.totalorder %s236, %s237
    %p249 = scmp.eq.s32.totalorder %s26, 1
    %p250 = por %p248, %p249
    %p252 = scmp.ne.s32.totalorder %s237, %s251
    %p253 = scmp.eq.s32.totalorder %s26, 0
    %p254 = por %p252, %p253
    %s256 = sadd.s32 %s255, 1
    %p259 = scmp.eq.s32.totalorder %s20, 1
    %p260 = scmp.ne.s32.totalorder %s255, %s257
    %p261 = scmp.eq.s32.totalorder %s20, 0
    %p262 = por %p260, %p261
    %p263 = scmp.ne.s32.totalorder %s255, %s257
    %p264 = scmp.eq.s32.totalorder %s25, 1
    %p265 = por %p263, %p264
    %p266 = scmp.ne.s32.totalorder %s257, %s258
    %p267 = scmp.eq.s32.totalorder %s25, 0
    %p268 = por %p266, %p267
    %p269 = scmp.ne.s32.totalorder %s257, %s258
    %p270 = scmp.eq.s32.totalorder %s26, 1
    %p271 = por %p269, %p270
    %p273 = scmp.ne.s32.totalorder %s258, %s272
    %p274 = scmp.eq.s32.totalorder %s26, 0
    %p275 = por %p273, %p274
    %s277 = sadd.s32 %s276, 1
    %p280 = scmp.eq.s32.totalorder %s20, 1
    %p281 = scmp.ne.s32.totalorder %s276, %s278
    %p282 = scmp.eq.s32.totalorder %s20, 0
    %p283 = por %p281, %p282
    %p284 = scmp.ne.s32.totalorder %s276, %s278
    %p285 = scmp.eq.s32.totalorder %s25, 1
    %p286 = por %p284, %p285
    %p287 = scmp.ne.s32.totalorder %s278, %s279
    %p288 = scmp.eq.s32.totalorder %s25, 0
    %p289 = por %p287, %p288
    %p290 = scmp.ne.s32.totalorder %s278, %s279
    %p291 = scmp.eq.s32.totalorder %s26, 1
    %p292 = por %p290, %p291
    %p294 = scmp.ne.s32.totalorder %s279, %s293
    %p295 = scmp.eq.s32.totalorder %s26, 0
    %p296 = por %p294, %p295
    %s298 = sadd.s32 %s297, 1
    %p301 = scmp.eq.s32.totalorder %s20, 1
    %p302 = scmp.ne.s32.totalorder %s297, %s299
    %p303 = scmp.eq.s32.totalorder %s20, 0
    %p304 = por %p302, %p303
    %p305 = scmp.ne.s32.totalorder %s297, %s299
    %p306 = scmp.eq.s32.totalorder %s25, 1
    %p307 = por %p305, %p306
    %p308 = scmp.ne.s32.totalorder %s299, %s300
    %p309 = scmp.eq.s32.totalorder %s25, 0
    %p310 = por %p308, %p309
    %p311 = scmp.ne.s32.totalorder %s299, %s300
    %p312 = scmp.eq.s32.totalorder %s26, 1
    %p313 = por %p311, %p312
    %p315 = scmp.ne.s32.totalorder %s300, %s314
    %p316 = scmp.eq.s32.totalorder %s26, 0
    %p317 = por %p315, %p316
    %s318 = ssub.s32 %s27, %s39
    %p319 = scmp.eq.s32.totalorder %s318, 0
    %s321 = sadd.s32 %s320, 1
    %s322 = scalar_select %p319, %s320, %s321
    %p325 = pneg %p319
    %p326 = scmp.eq.s32.totalorder %s20, 1
    %p327 = por %p325, %p326
    %p328 = scmp.ne.s32.totalorder %s320, %s323
    %p329 = scmp.eq.s32.totalorder %s20, 0
    %p330 = por %p328, %p329
    %p331 = scmp.ne.s32.totalorder %s320, %s323
    %p332 = scmp.eq.s32.totalorder %s25, 1
    %p333 = por %p331, %p332
    %p334 = scmp.ne.s32.totalorder %s323, %s324
    %p335 = scmp.eq.s32.totalorder %s25, 0
    %p336 = por %p334, %p335
    %p337 = scmp.ne.s32.totalorder %s323, %s324
    %p338 = scmp.eq.s32.totalorder %s26, 1
    %p339 = por %p337, %p338
    %p341 = scmp.ne.s32.totalorder %s324, %s340
    %p342 = scmp.eq.s32.totalorder %s26, 0
    %p343 = por %p341, %p342
    %s344 = ssub.s32 %s27, %s39
    %p345 = scmp.eq.s32.totalorder %s344, 0
    %s347 = sadd.s32 %s346, 1
    %s348 = scalar_select %p345, %s346, %s347
    %p351 = pneg %p345
    %p352 = scmp.eq.s32.totalorder %s20, 1
    %p353 = por %p351, %p352
    %p354 = scmp.ne.s32.totalorder %s346, %s349
    %p355 = scmp.eq.s32.totalorder %s20, 0
    %p356 = por %p354, %p355
    %p357 = scmp.ne.s32.totalorder %s346, %s349
    %p358 = scmp.eq.s32.totalorder %s25, 1
    %p359 = por %p357, %p358
    %p360 = scmp.ne.s32.totalorder %s349, %s350
    %p361 = scmp.eq.s32.totalorder %s25, 0
    %p362 = por %p360, %p361
    %p363 = scmp.ne.s32.totalorder %s349, %s350
    %p364 = scmp.eq.s32.totalorder %s26, 1
    %p365 = por %p363, %p364
    %p367 = scmp.ne.s32.totalorder %s350, %s366
    %p368 = scmp.eq.s32.totalorder %s26, 0
    %p369 = por %p367, %p368
    %p370 = scmp.le.s32.totalorder 1, %s20
    %p371 = scmp.lt.s32.totalorder %s20, 3
    %p372 = pnand %p370, %p371
    %p373 = pneg %p372
    // Predicated region
    $region9: #{tse_forward.1} parent=5 // pred_check
      _
    $region10: #{tse_forward.1} parent=5 // pred_check_branch
      %375 = sbr.rel (%p372) target = $region12
    $region11: #{tse_forward.1} parent=5 // pred_region
      %s376 = ssub.s32 %s20, 1
      // Predicated region
      $region13: #{tse_forward.1} parent=11 // pred_check
        %p377 = pneg %p163
      $region14: #{tse_forward.1} parent=11 // pred_check_branch
        %379 = sbr.rel (%p377) target = $region16
      $region15: #{tse_forward.1} parent=11 // pred_region
        _
      $region16: #{tse_forward.1} parent=11 // pred_fallthru
        _
      // Predicated region
      $region17: #{tse_forward.1} parent=11 // pred_check
        %p380 = pneg %p184
      $region18: #{tse_forward.1} parent=11 // pred_check_branch
        %382 = sbr.rel (%p380) target = $region20
      $region19: #{tse_forward.1} parent=11 // pred_region
        _
      $region20: #{tse_forward.1} parent=11 // pred_fallthru
        _
      // Predicated region
      $region21: #{tse_forward.1} parent=11 // pred_check
        %p383 = pneg %p205
      $region22: #{tse_forward.1} parent=11 // pred_check_branch
        %385 = sbr.rel (%p383) target = $region24
      $region23: #{tse_forward.1} parent=11 // pred_region
        _
      $region24: #{tse_forward.1} parent=11 // pred_fallthru
        _
      // Predicated region
      $region25: #{tse_forward.1} parent=11 // pred_check
        %p386 = pneg %p226
      $region26: #{tse_forward.1} parent=11 // pred_check_branch
        %388 = sbr.rel (%p386) target = $region28
      $region27: #{tse_forward.1} parent=11 // pred_region
        _
      $region28: #{tse_forward.1} parent=11 // pred_fallthru
        _
      // Predicated region
      $region29: #{tse_forward.1} parent=11 // pred_check
        %p389 = pneg %p247
      $region30: #{tse_forward.1} parent=11 // pred_check_branch
        %391 = sbr.rel (%p389) target = $region32
      $region31: #{tse_forward.1} parent=11 // pred_region
        _
      $region32: #{tse_forward.1} parent=11 // pred_fallthru
        _
      // Predicated region
      $region33: #{tse_forward.1} parent=11 // pred_check
        %p392 = pneg %p268
      $region34: #{tse_forward.1} parent=11 // pred_check_branch
        %394 = sbr.rel (%p392) target = $region36
      $region35: #{tse_forward.1} parent=11 // pred_region
        _
      $region36: #{tse_forward.1} parent=11 // pred_fallthru
        _
      // Predicated region
      $region37: #{tse_forward.1} parent=11 // pred_check
        %p395 = pneg %p289
      $region38: #{tse_forward.1} parent=11 // pred_check_branch
        %397 = sbr.rel (%p395) target = $region40
      $region39: #{tse_forward.1} parent=11 // pred_region
        _
      $region40: #{tse_forward.1} parent=11 // pred_fallthru
        _
      // Predicated region
      $region41: #{tse_forward.1} parent=11 // pred_check
        %p398 = pneg %p310
      $region42: #{tse_forward.1} parent=11 // pred_check_branch
        %400 = sbr.rel (%p398) target = $region44
      $region43: #{tse_forward.1} parent=11 // pred_region
        _
      $region44: #{tse_forward.1} parent=11 // pred_fallthru
        _
    $region12: #{tse_forward.1} parent=5 // pred_fallthru
      _
    %p401 = scmp.lt.s32.totalorder %s20, 2
    // Predicated region
    $region45: #{tse_forward.1} parent=5 // pred_check
      %p402 = pneg %p401
    $region46: #{tse_forward.1} parent=5 // pred_check_branch
      %404 = sbr.rel (%p402) target = $region48
    $region47: #{tse_forward.1} parent=5 // pred_region
      // Predicated region
      $region49: #{tse_forward.1} parent=47 // pred_check
        %p405 = pneg %p52
      $region50: #{tse_forward.1} parent=47 // pred_check_branch
        %407 = sbr.rel (%p405) target = $region52
      $region51: #{tse_forward.1} parent=47 // pred_region
        %p408 = scmp.lt.s32.totalorder %s27, 1
        %s409 = scalar_select %p408, %s27, 1
        %s410 = scalar_lea.vmem %s0, %s409
      $region52: #{tse_forward.1} parent=47 // pred_fallthru
        _
      // Predicated region
      $region53: #{tse_forward.1} parent=47 // pred_check
        %p411 = pneg %p80
      $region54: #{tse_forward.1} parent=47 // pred_check_branch
        %413 = sbr.rel (%p411) target = $region56
      $region55: #{tse_forward.1} parent=47 // pred_region
        %p414 = scmp.lt.s32.totalorder %s27, 1
        %s415 = scalar_select %p414, %s27, 1
        %p416 = scmp.lt.s32.totalorder %s28, 0
        %s417 = scalar_select %p416, %s28, 0
        %s418 = sadd.s32 %s417, %s415
        %s419 = smul.addr %s418, 4
        %s420 = scalar_lea.vmem %s1, %s419
      $region56: #{tse_forward.1} parent=47 // pred_fallthru
        _
      // Predicated region
      $region57: #{tse_forward.1} parent=47 // pred_check
        %p421 = pneg %p108
      $region58: #{tse_forward.1} parent=47 // pred_check_branch
        %423 = sbr.rel (%p421) target = $region60
      $region59: #{tse_forward.1} parent=47 // pred_region
        %p424 = scmp.lt.s32.totalorder %s27, 1
        %s425 = scalar_select %p424, %s27, 1
        %p426 = scmp.lt.s32.totalorder %s28, 0
        %s427 = scalar_select %p426, %s28, 0
        %s428 = sadd.s32 %s427, %s425
        %s429 = smul.addr %s428, 8
        %s430 = scalar_lea.vmem %s2, %s429
      $region60: #{tse_forward.1} parent=47 // pred_fallthru
        _
      // Predicated region
      $region61: #{tse_forward.1} parent=47 // pred_check
        %p431 = pneg %p136
      $region62: #{tse_forward.1} parent=47 // pred_check_branch
        %433 = sbr.rel (%p431) target = $region64
      $region63: #{tse_forward.1} parent=47 // pred_region
        %p434 = scmp.lt.s32.totalorder %s27, 1
        %s435 = scalar_select %p434, %s27, 1
        %p436 = scmp.lt.s32.totalorder %s28, 0
        %s437 = scalar_select %p436, %s28, 0
        %s438 = sadd.s32 %s437, %s435
        %s439 = smul.addr %s438, 8
        %s440 = scalar_lea.vmem %s3, %s439
      $region64: #{tse_forward.1} parent=47 // pred_fallthru
        _
    $region48: #{tse_forward.1} parent=5 // pred_fallthru
      _
    %p441 = scmp.le.s32.totalorder 1, %s20
    %p442 = scmp.lt.s32.totalorder %s20, 3
    %p443 = pnand %p441, %p442
    %p444 = pneg %p443
    // Predicated region
    $region65: #{tse_forward.1} parent=5 // pred_check
      _
    $region66: #{tse_forward.1} parent=5 // pred_check_branch
      %446 = sbr.rel (%p443) target = $region68
    $region67: #{tse_forward.1} parent=5 // pred_region
      %s447 = ssub.s32 %s20, 1
      %p448 = scmp.lt.s32.totalorder %s29, 1
      %s449 = scalar_select %p448, %s29, 1
      %s450 = scalar_lea.vmem %s0, %s449
      %p451 = pneg %p58
      %p452 = pneg %p55
      %p453 = scmp.lt.s32.totalorder %s29, 1
      %s454 = scalar_select %p453, %s29, 1
      %p455 = scmp.lt.s32.totalorder %s30, 0
      %s456 = scalar_select %p455, %s30, 0
      %s457 = sadd.s32 %s456, %s454
      %s458 = smul.addr %s457, 4
      %s459 = scalar_lea.vmem %s1, %s458
      %p460 = pneg %p86
      %p461 = pneg %p83
      %p462 = scmp.lt.s32.totalorder %s29, 1
      %s463 = scalar_select %p462, %s29, 1
      %p464 = scmp.lt.s32.totalorder %s30, 0
      %s465 = scalar_select %p464, %s30, 0
      %s466 = sadd.s32 %s465, %s463
      %s467 = smul.addr %s466, 8
      %s468 = scalar_lea.vmem %s2, %s467
      %p469 = pneg %p114
      %p470 = pneg %p111
      %p471 = scmp.lt.s32.totalorder %s29, 1
      %s472 = scalar_select %p471, %s29, 1
      %p473 = scmp.lt.s32.totalorder %s30, 0
      %s474 = scalar_select %p473, %s30, 0
      %s475 = sadd.s32 %s474, %s472
      %s476 = smul.addr %s475, 8
      %s477 = scalar_lea.vmem %s3, %s476
      %p478 = pneg %p142
      %p479 = pneg %p139
      %p480 = pneg %p163
      %p481 = pneg %p160
      %p482 = pneg %p184
      %p483 = pneg %p181
      %p484 = pneg %p205
      %p485 = pneg %p202
      %p486 = pneg %p226
      %p487 = pneg %p223
      %p488 = pneg %p247
      %p489 = pneg %p244
      %p490 = pneg %p268
      %p491 = pneg %p265
      %p492 = pneg %p289
      %p493 = pneg %p286
      %p494 = pneg %p310
      %p495 = pneg %p307
      %p496 = pneg %p336
      %p497 = pneg %p333
      %p498 = scmp.lt.s32.totalorder %s29, 1
      %s499 = scalar_select %p498, %s29, 1
      %s500 = scalar_lea.vmem %s12, %s499
      %p501 = pneg %p362
      %p502 = pneg %p359
      %p503 = scmp.lt.s32.totalorder %s29, 1
      %s504 = scalar_select %p503, %s29, 1
      %s505 = scalar_lea.vmem %s13, %s504
      %p506 = scmp.lt.s32.totalorder %s29, 1
      %s507 = scalar_select %p506, %s29, 1
      %s508 = scalar_lea.vmem %s0, %s507
      %p509 = scmp.lt.s32.totalorder %s29, 1
      %s510 = scalar_select %p509, %s29, 1
      %p511 = scmp.lt.s32.totalorder %s30, 0
      %s512 = scalar_select %p511, %s30, 0
      %s513 = sadd.s32 %s512, %s510
      %s514 = smul.addr %s513, 4
      %s515 = scalar_lea.vmem %s1, %s514
      %p516 = scmp.lt.s32.totalorder %s29, 1
      %s517 = scalar_select %p516, %s29, 1
      %p518 = scmp.lt.s32.totalorder %s30, 0
      %s519 = scalar_select %p518, %s30, 0
      %s520 = sadd.s32 %s519, %s517
      %s521 = smul.addr %s520, 8
      %s522 = scalar_lea.vmem %s2, %s521
      %p523 = scmp.lt.s32.totalorder %s29, 1
      %s524 = scalar_select %p523, %s29, 1
      %p525 = scmp.lt.s32.totalorder %s30, 0
      %s526 = scalar_select %p525, %s30, 0
      %s527 = sadd.s32 %s526, %s524
      %s528 = smul.addr %s527, 8
      %s529 = scalar_lea.vmem %s3, %s528
      %p530 = scmp.lt.s32.totalorder %s29, 1
      %s531 = scalar_select %p530, %s29, 1
      %s532 = scalar_lea.vmem %s12, %s531
      %p533 = scmp.lt.s32.totalorder %s29, 1
      %s534 = scalar_select %p533, %s29, 1
      %s535 = scalar_lea.vmem %s13, %s534
      %v537 = vld [vmem:[%s515] sm:$0xf]
      %v538 = vld [vmem:[%s4] sm:$0xf]
      %v539 = vld [vmem:[%s4 + $0x4] sm:$0xf]
      %v540 = vld [vmem:[%s4 + $0x8] sm:$0xf]
      %v541 = vld [vmem:[%s4 + $0xc] sm:$0xf]
      %v542 = vld [vmem:[%s4 + $0x10] sm:$0xf]
      %v543 = vld [vmem:[%s4 + $0x14] sm:$0xf]
      %v544 = vld [vmem:[%s4 + $0x18] sm:$0xf]
      %v545 = vld [vmem:[%s4 + $0x1c] sm:$0xf]
      %v546 = vld [vmem:[%s5] sm:$0x1]
      %v548 = vlaneseq
      %v549 = vshrl.u32 %v548, 7
      %v550 = vsub.s32 0, %v549
      %v551 = vrot.slane %v546, %v550
      %v561 = vunpack.c.l.b16 %v538
      %v562 = vunpack.c.l.b16 %v539
      %v563 = vunpack.c.l.b16 %v540
      %v564 = vunpack.c.l.b16 %v541
      %v565 = vunpack.c.l.b16 %v542
      %v566 = vunpack.c.l.b16 %v543
      %v567 = vunpack.c.l.b16 %v544
      %v568 = vunpack.c.l.b16 %v545
      %v569 = vpack.c.b16 %v562, %v561
      %v570 = vpack.c.b16 %v564, %v563
      %v571 = vpack.c.b16 %v566, %v565
      %v572 = vpack.c.b16 %v568, %v567
      %vm577 = vcmask 523264
      %v579 = vsel %vm577, %v537, 0
      %581 = vmatprep.subr.bf16.mxu0 0
      %582 = vmatpush1.bf16.msra.mxu0 %v569
      %583 = vmatprep.subr.bf16.mxu0 0
      %584 = vmatpush1.bf16.msra.mxu0 %v570
      %585 = vmatprep.subr.bf16.mxu0 0
      %586 = vmatpush1.bf16.msra.mxu0 %v571
      %587 = vmatprep.subr.bf16.mxu0 0
      %588 = vmatpush1.bf16.msra.mxu0 %v572
      %589 = vmatprep.subr.bf16.mxu0 0
      %590 = vmatpush1.bf16.msra.mxu0 0
      %591 = vmatprep.subr.bf16.mxu0 0
      %592 = vmatpush1.bf16.msra.mxu0 0
      %593 = vmatprep.subr.bf16.mxu0 0
      %594 = vmatpush1.bf16.msra.mxu0 0
      %595 = vmatprep.subr.bf16.mxu0 0
      %596 = vmatpush1.bf16.msra.mxu0 0
      %597 = vmatprep.subr.bf16.mxu0 0
      %598 = vmatpush1.bf16.msra.mxu0 0
      %599 = vmatprep.subr.bf16.mxu0 0
      %600 = vmatpush1.bf16.msra.mxu0 0
      %601 = vmatprep.subr.bf16.mxu0 0
      %602 = vmatpush1.bf16.msra.mxu0 0
      %603 = vmatprep.subr.bf16.mxu0 0
      %604 = vmatpush1.bf16.msra.mxu0 0
      %605 = vmatprep.subr.bf16.mxu0 0
      %606 = vmatpush1.bf16.msra.mxu0 0
      %607 = vmatprep.subr.bf16.mxu0 0
      %608 = vmatpush1.bf16.msra.mxu0 0
      %609 = vmatprep.subr.bf16.mxu0 0
      %610 = vmatpush1.bf16.msra.mxu0 0
      %611 = vmatprep.subr.bf16.mxu0 0
      %612 = vmatpush1.bf16.msra.mxu0 0
      %613 = vmatprep.mubr.bf16.mxu0 0
      %614 = vmatmul.mubr.bf16.gmra.mrb[0].mxu0 %v579
      %v615 = vpop.f32.mrb[0].mxu0
      %v616 = vadd.f32 %v551, %v615
      %v617 = vpop.f32.mrb[0].mxu0
      %v618 = vpop.f32.mrb[0].mxu0
      %v619 = vpop.f32.mrb[0].mxu0
      %620 = vdwg.mxu0
      %v621 = vmax.f32 %v616, 0.0
      %v622 = vpack.c.bf16 %v621, %v621
      %v623 = vld [vmem:[%s6] sm:$0xf]
      %v624 = vld [vmem:[%s6 + $0x4] sm:$0xf]
      %v625 = vld [vmem:[%s6 + $0x8] sm:$0xf]
      %v626 = vld [vmem:[%s6 + $0xc] sm:$0xf]
      %v627 = vld [vmem:[%s6 + $0x10] sm:$0xf]
      %v628 = vld [vmem:[%s6 + $0x14] sm:$0xf]
      %v629 = vld [vmem:[%s6 + $0x18] sm:$0xf]
      %v630 = vld [vmem:[%s6 + $0x1c] sm:$0xf]
      %v631 = vld [vmem:[%s6 + $0x20] sm:$0xf]
      %v632 = vld [vmem:[%s6 + $0x24] sm:$0xf]
      %v633 = vld [vmem:[%s6 + $0x28] sm:$0xf]
      %v634 = vld [vmem:[%s6 + $0x2c] sm:$0xf]
      %v635 = vld [vmem:[%s6 + $0x30] sm:$0xf]
      %v636 = vld [vmem:[%s6 + $0x34] sm:$0xf]
      %v637 = vld [vmem:[%s6 + $0x38] sm:$0xf]
      %v638 = vld [vmem:[%s6 + $0x3c] sm:$0xf]
      %v639 = vld [vmem:[%s7] sm:$0x1]
      %v641 = vlaneseq
      %v642 = vshrl.u32 %v641, 7
      %v643 = vsub.s32 0, %v642
      %v644 = vrot.slane %v639, %v643
      %v662 = vunpack.c.l.b16 %v623
      %v663 = vunpack.c.l.b16 %v624
      %v664 = vunpack.c.l.b16 %v625
      %v665 = vunpack.c.l.b16 %v626
      %v666 = vunpack.c.l.b16 %v627
      %v667 = vunpack.c.l.b16 %v628
      %v668 = vunpack.c.l.b16 %v629
      %v669 = vunpack.c.l.b16 %v630
      %v670 = vunpack.c.l.b16 %v631
      %v671 = vunpack.c.l.b16 %v632
      %v672 = vunpack.c.l.b16 %v633
      %v673 = vunpack.c.l.b16 %v634
      %v674 = vunpack.c.l.b16 %v635
      %v675 = vunpack.c.l.b16 %v636
      %v676 = vunpack.c.l.b16 %v637
      %v677 = vunpack.c.l.b16 %v638
      %v678 = vpack.c.b16 %v663, %v662
      %v679 = vpack.c.b16 %v665, %v664
      %v680 = vpack.c.b16 %v667, %v666
      %v681 = vpack.c.b16 %v669, %v668
      %v682 = vpack.c.b16 %v671, %v670
      %v683 = vpack.c.b16 %v673, %v672
      %v684 = vpack.c.b16 %v675, %v674
      %v685 = vpack.c.b16 %v677, %v676
      %694 = vmatprep.subr.bf16.mxu0 0
      %695 = vmatpush1.bf16.msra.mxu0 %v678
      %696 = vmatprep.subr.bf16.mxu0 0
      %697 = vmatpush1.bf16.msra.mxu0 %v679
      %698 = vmatprep.subr.bf16.mxu0 0
      %699 = vmatpush1.bf16.msra.mxu0 %v680
      %700 = vmatprep.subr.bf16.mxu0 0
      %701 = vmatpush1.bf16.msra.mxu0 %v681
      %702 = vmatprep.subr.bf16.mxu0 0
      %703 = vmatpush1.bf16.msra.mxu0 %v682
      %704 = vmatprep.subr.bf16.mxu0 0
      %705 = vmatpush1.bf16.msra.mxu0 %v683
      %706 = vmatprep.subr.bf16.mxu0 0
      %707 = vmatpush1.bf16.msra.mxu0 %v684
      %708 = vmatprep.subr.bf16.mxu0 0
      %709 = vmatpush1.bf16.msra.mxu0 %v685
      %710 = vmatprep.subr.bf16.mxu0 0
      %711 = vmatpush1.bf16.msra.mxu0 0
      %712 = vmatprep.subr.bf16.mxu0 0
      %713 = vmatpush1.bf16.msra.mxu0 0
      %714 = vmatprep.subr.bf16.mxu0 0
      %715 = vmatpush1.bf16.msra.mxu0 0
      %716 = vmatprep.subr.bf16.mxu0 0
      %717 = vmatpush1.bf16.msra.mxu0 0
      %718 = vmatprep.subr.bf16.mxu0 0
      %719 = vmatpush1.bf16.msra.mxu0 0
      %720 = vmatprep.subr.bf16.mxu0 0
      %721 = vmatpush1.bf16.msra.mxu0 0
      %722 = vmatprep.subr.bf16.mxu0 0
      %723 = vmatpush1.bf16.msra.mxu0 0
      %724 = vmatprep.subr.bf16.mxu0 0
      %725 = vmatpush1.bf16.msra.mxu0 0
      %726 = vmatprep.mubr.bf16.mxu0 0
      %727 = vmatmul.mubr.bf16.gmra.mrb[0].mxu0 %v622
      %v728 = vpop.f32.mrb[0].mxu0
      %v729 = vadd.f32 %v644, %v728
      %v730 = vpop.f32.mrb[0].mxu0
      %v731 = vpop.f32.mrb[0].mxu0
      %v732 = vpop.f32.mrb[0].mxu0
      %733 = vdwg.mxu0
      %v734 = vpack.c.bf16 %v729, %v729
      %v735 = vld [vmem:[%s8] sm:$0xff]
      %v736 = vld [vmem:[%s8 + $0x8] sm:$0xff]
      %v737 = vld [vmem:[%s8 + $0x10] sm:$0xff]
      %v738 = vld [vmem:[%s8 + $0x18] sm:$0xff]
      %v739 = vld [vmem:[%s8 + $0x20] sm:$0xff]
      %v740 = vld [vmem:[%s8 + $0x28] sm:$0xff]
      %v741 = vld [vmem:[%s8 + $0x30] sm:$0xff]
      %v742 = vld [vmem:[%s8 + $0x38] sm:$0xff]
      %v743 = vld [vmem:[%s8 + $0x40] sm:$0xff]
      %v744 = vld [vmem:[%s8 + $0x48] sm:$0xff]
      %v745 = vld [vmem:[%s8 + $0x50] sm:$0xff]
      %v746 = vld [vmem:[%s8 + $0x58] sm:$0xff]
      %v747 = vld [vmem:[%s8 + $0x60] sm:$0xff]
      %v748 = vld [vmem:[%s8 + $0x68] sm:$0xff]
      %v749 = vld [vmem:[%s8 + $0x70] sm:$0xff]
      %v750 = vld [vmem:[%s8 + $0x78] sm:$0xff]
      %v751 = vld [vmem:[%s9] sm:$0xf]
      %v753 = vlaneseq
      %v754 = vshrl.u32 %v753, 7
      %v755 = vsub.s32 0, %v754
      %v756 = vrot.slane %v751, %v755
      %v757 = vlaneseq
      %v758 = vshrl.u32 %v757, 7
      %v759 = vsub.s32 1, %v758
      %v760 = vrot.slane %v751, %v759
      %v761 = vlaneseq
      %v762 = vshrl.u32 %v761, 7
      %v763 = vsub.s32 2, %v762
      %v764 = vrot.slane %v751, %v763
      %v765 = vlaneseq
      %v766 = vshrl.u32 %v765, 7
      %v767 = vsub.s32 3, %v766
      %v768 = vrot.slane %v751, %v767
      %v789 = vunpack.c.l.b16 %v735
      %v790 = vunpack.c.h.b16 %v735
      %v791 = vunpack.c.l.b16 %v736
      %v792 = vunpack.c.h.b16 %v736
      %v793 = vunpack.c.l.b16 %v737
      %v794 = vunpack.c.h.b16 %v737
      %v795 = vunpack.c.l.b16 %v738
      %v796 = vunpack.c.h.b16 %v738
      %v797 = vunpack.c.l.b16 %v739
      %v798 = vunpack.c.h.b16 %v739
      %v799 = vunpack.c.l.b16 %v740
      %v800 = vunpack.c.h.b16 %v740
      %v801 = vunpack.c.l.b16 %v741
      %v802 = vunpack.c.h.b16 %v741
      %v803 = vunpack.c.l.b16 %v742
      %v804 = vunpack.c.h.b16 %v742
      %v805 = vunpack.c.l.b16 %v743
      %v806 = vunpack.c.h.b16 %v743
      %v807 = vunpack.c.l.b16 %v744
      %v808 = vunpack.c.h.b16 %v744
      %v809 = vunpack.c.l.b16 %v745
      %v810 = vunpack.c.h.b16 %v745
      %v811 = vunpack.c.l.b16 %v746
      %v812 = vunpack.c.h.b16 %v746
      %v813 = vunpack.c.l.b16 %v747
      %v814 = vunpack.c.h.b16 %v747
      %v815 = vunpack.c.l.b16 %v748
      %v816 = vunpack.c.h.b16 %v748
      %v817 = vunpack.c.l.b16 %v749
      %v818 = vunpack.c.h.b16 %v749
      %v819 = vunpack.c.l.b16 %v750
      %v820 = vunpack.c.h.b16 %v750
      %v821 = vpack.c.b16 %v793, %v789
      %v822 = vpack.c.b16 %v794, %v790
      %v823 = vpack.c.b16 %v795, %v791
      %v824 = vpack.c.b16 %v796, %v792
      %v825 = vpack.c.b16 %v801, %v797
      %v826 = vpack.c.b16 %v802, %v798
      %v827 = vpack.c.b16 %v803, %v799
      %v828 = vpack.c.b16 %v804, %v800
      %v829 = vpack.c.b16 %v809, %v805
      %v830 = vpack.c.b16 %v810, %v806
      %v831 = vpack.c.b16 %v811, %v807
      %v832 = vpack.c.b16 %v812, %v808
      %v833 = vpack.c.b16 %v817, %v813
      %v834 = vpack.c.b16 %v818, %v814
      %v835 = vpack.c.b16 %v819, %v815
      %v836 = vpack.c.b16 %v820, %v816
      %v854 = vsel %vm577, %v734, 0
      %856 = vmatprep.subr.bf16.mxu0 %v822
      %857 = vmatpush1.bf16.msra.mxu0 %v821
      %858 = vmatprep.subr.bf16.mxu0 %v826
      %859 = vmatpush1.bf16.msra.mxu0 %v825
      %860 = vmatprep.subr.bf16.mxu0 %v830
      %861 = vmatpush1.bf16.msra.mxu0 %v829
      %862 = vmatprep.subr.bf16.mxu0 %v834
      %863 = vmatpush1.bf16.msra.mxu0 %v833
      %864 = vmatprep.subr.bf16.mxu0 0
      %865 = vmatpush1.bf16.msra.mxu0 0
      %866 = vmatprep.subr.bf16.mxu0 0
      %867 = vmatpush1.bf16.msra.mxu0 0
      %868 = vmatprep.subr.bf16.mxu0 0
      %869 = vmatpush1.bf16.msra.mxu0 0
      %870 = vmatprep.subr.bf16.mxu0 0
      %871 = vmatpush1.bf16.msra.mxu0 0
      %872 = vmatprep.subr.bf16.mxu0 0
      %873 = vmatpush1.bf16.msra.mxu0 0
      %874 = vmatprep.subr.bf16.mxu0 0
      %875 = vmatpush1.bf16.msra.mxu0 0
      %876 = vmatprep.subr.bf16.mxu0 0
      %877 = vmatpush1.bf16.msra.mxu0 0
      %878 = vmatprep.subr.bf16.mxu0 0
      %879 = vmatpush1.bf16.msra.mxu0 0
      %880 = vmatprep.subr.bf16.mxu0 0
      %881 = vmatpush1.bf16.msra.mxu0 0
      %882 = vmatprep.subr.bf16.mxu0 0
      %883 = vmatpush1.bf16.msra.mxu0 0
      %884 = vmatprep.subr.bf16.mxu0 0
      %885 = vmatpush1.bf16.msra.mxu0 0
      %886 = vmatprep.subr.bf16.mxu0 0
      %887 = vmatpush1.bf16.msra.mxu0 0
      %888 = vmatprep.mubr.bf16.mxu0 0
      %889 = vmatmul.mubr.bf16.gmra.mrb[0].mxu0 %v854
      %v890 = vpop.f32.mrb[0].mxu0
      %v891 = vadd.f32 %v756, %v890
      %v892 = vpop.f32.mrb[0].mxu0
      %v893 = vadd.f32 %v760, %v892
      %v894 = vpop.f32.mrb[0].mxu0
      %v895 = vpop.f32.mrb[0].mxu0
      %896 = vdwg.mxu0
      %897 = vmatprep.subr.bf16.mxu0 %v824
      %898 = vmatpush1.bf16.msra.mxu0 %v823
      %899 = vmatprep.subr.bf16.mxu0 %v828
      %900 = vmatpush1.bf16.msra.mxu0 %v827
      %901 = vmatprep.subr.bf16.mxu0 %v832
      %902 = vmatpush1.bf16.msra.mxu0 %v831
      %903 = vmatprep.subr.bf16.mxu0 %v836
      %904 = vmatpush1.bf16.msra.mxu0 %v835
      %905 = vmatprep.subr.bf16.mxu0 0
      %906 = vmatpush1.bf16.msra.mxu0 0
      %907 = vmatprep.subr.bf16.mxu0 0
      %908 = vmatpush1.bf16.msra.mxu0 0
      %909 = vmatprep.subr.bf16.mxu0 0
      %910 = vmatpush1.bf16.msra.mxu0 0
      %911 = vmatprep.subr.bf16.mxu0 0
      %912 = vmatpush1.bf16.msra.mxu0 0
      %913 = vmatprep.subr.bf16.mxu0 0
      %914 = vmatpush1.bf16.msra.mxu0 0
      %915 = vmatprep.subr.bf16.mxu0 0
      %916 = vmatpush1.bf16.msra.mxu0 0
      %917 = vmatprep.subr.bf16.mxu0 0
      %918 = vmatpush1.bf16.msra.mxu0 0
      %919 = vmatprep.subr.bf16.mxu0 0
      %920 = vmatpush1.bf16.msra.mxu0 0
      %921 = vmatprep.subr.bf16.mxu0 0
      %922 = vmatpush1.bf16.msra.mxu0 0
      %923 = vmatprep.subr.bf16.mxu0 0
      %924 = vmatpush1.bf16.msra.mxu0 0
      %925 = vmatprep.subr.bf16.mxu0 0
      %926 = vmatpush1.bf16.msra.mxu0 0
      %927 = vmatprep.subr.bf16.mxu0 0
      %928 = vmatpush1.bf16.msra.mxu0 0
      %929 = vmatprep.mubr.bf16.mxu0 0
      %930 = vmatmul.mubr.bf16.gmra.mrb[0].mxu0 %v854
      %v931 = vpop.f32.mrb[0].mxu0
      %v932 = vadd.f32 %v764, %v931
      %v933 = vpop.f32.mrb[0].mxu0
      %v934 = vadd.f32 %v768, %v933
      %v935 = vpop.f32.mrb[0].mxu0
      %v936 = vpop.f32.mrb[0].mxu0
      %937 = vdwg.mxu0
      %v938 = vpack.c.bf16 %v891, %v891
      %v939 = vpack.c.bf16 %v893, %v893
      %v940 = vpack.c.bf16 %v932, %v932
      %v941 = vpack.c.bf16 %v934, %v934
      %v942 = vld [vmem:[%s10] sm:$0xff]
      %v943 = vld [vmem:[%s10 + $0x8] sm:$0xff]
      %v944 = vld [vmem:[%s10 + $0x10] sm:$0xff]
      %v945 = vld [vmem:[%s10 + $0x18] sm:$0xff]
      %v946 = vld [vmem:[%s10 + $0x20] sm:$0xf]
      %v947 = vld [vmem:[%s10 + $0x24] sm:$0xff]
      %v948 = vld [vmem:[%s10 + $0x2c] sm:$0xff]
      %v949 = vld [vmem:[%s10 + $0x34] sm:$0xff]
      %v950 = vld [vmem:[%s10 + $0x3c] sm:$0xff]
      %v951 = vld [vmem:[%s10 + $0x44] sm:$0xf]
      %v952 = vld [vmem:[%s10 + $0x48] sm:$0xff]
      %v953 = vld [vmem:[%s10 + $0x50] sm:$0xff]
      %v954 = vld [vmem:[%s10 + $0x58] sm:$0xff]
      %v955 = vld [vmem:[%s10 + $0x60] sm:$0xff]
      %v956 = vld [vmem:[%s10 + $0x68] sm:$0xf]
      %v957 = vld [vmem:[%s10 + $0x6c] sm:$0xff]
      %v958 = vld [vmem:[%s10 + $0x74] sm:$0xff]
      %v959 = vld [vmem:[%s10 + $0x7c] sm:$0xff]
      %v960 = vld [vmem:[%s10 + $0x84] sm:$0xff]
      %v961 = vld [vmem:[%s10 + $0x8c] sm:$0xf]
      %v962 = vld [vmem:[%s10 + $0x90] sm:$0xff]
      %v963 = vld [vmem:[%s10 + $0x98] sm:$0xff]
      %v964 = vld [vmem:[%s10 + $0xa0] sm:$0xff]
      %v965 = vld [vmem:[%s10 + $0xa8] sm:$0xff]
      %v966 = vld [vmem:[%s10 + $0xb0] sm:$0xf]
      %v967 = vld [vmem:[%s10 + $0xb4] sm:$0xff]
      %v968 = vld [vmem:[%s10 + $0xbc] sm:$0xff]
      %v969 = vld [vmem:[%s10 + $0xc4] sm:$0xff]
      %v970 = vld [vmem:[%s10 + $0xcc] sm:$0xff]
      %v971 = vld [vmem:[%s10 + $0xd4] sm:$0xf]
      %v972 = vld [vmem:[%s10 + $0xd8] sm:$0xff]
      %v973 = vld [vmem:[%s10 + $0xe0] sm:$0xff]
      %v974 = vld [vmem:[%s10 + $0xe8] sm:$0xff]
      %v975 = vld [vmem:[%s10 + $0xf0] sm:$0xff]
      %v976 = vld [vmem:[%s10 + $0xf8] sm:$0xf]
      %v977 = vld [vmem:[%s10 + $0xfc] sm:$0xff]
      %v978 = vld [vmem:[%s10 + $0x104] sm:$0xff]
      %v979 = vld [vmem:[%s10 + $0x10c] sm:$0xff]
      %v980 = vld [vmem:[%s10 + $0x114] sm:$0xff]
      %v981 = vld [vmem:[%s10 + $0x11c] sm:$0xf]
      %v982 = vld [vmem:[%s10 + $0x120] sm:$0xff]
      %v983 = vld [vmem:[%s10 + $0x128] sm:$0xff]
      %v984 = vld [vmem:[%s10 + $0x130] sm:$0xff]
      %v985 = vld [vmem:[%s10 + $0x138] sm:$0xff]
      %v986 = vld [vmem:[%s10 + $0x140] sm:$0xf]
      %v987 = vld [vmem:[%s10 + $0x144] sm:$0xff]
      %v988 = vld [vmem:[%s10 + $0x14c] sm:$0xff]
      %v989 = vld [vmem:[%s10 + $0x154] sm:$0xff]
      %v990 = vld [vmem:[%s10 + $0x15c] sm:$0xff]
      %v991 = vld [vmem:[%s10 + $0x164] sm:$0xf]
      %v992 = vld [vmem:[%s10 + $0x168] sm:$0xff]
      %v993 = vld [vmem:[%s10 + $0x170] sm:$0xff]
      %v994 = vld [vmem:[%s10 + $0x178] sm:$0xff]
      %v995 = vld [vmem:[%s10 + $0x180] sm:$0xff]
      %v996 = vld [vmem:[%s10 + $0x188] sm:$0xf]
      %v997 = vld [vmem:[%s10 + $0x18c] sm:$0xff]
      %v998 = vld [vmem:[%s10 + $0x194] sm:$0xff]
      %v999 = vld [vmem:[%s10 + $0x19c] sm:$0xff]
      %v1000 = vld [vmem:[%s10 + $0x1a4] sm:$0xff]
      %v1001 = vld [vmem:[%s10 + $0x1ac] sm:$0xf]
      %v1002 = vld [vmem:[%s10 + $0x1b0] sm:$0xff]
      %v1003 = vld [vmem:[%s10 + $0x1b8] sm:$0xff]
      %v1004 = vld [vmem:[%s10 + $0x1c0] sm:$0xff]
      %v1005 = vld [vmem:[%s10 + $0x1c8] sm:$0xff]
      %v1006 = vld [vmem:[%s10 + $0x1d0] sm:$0xf]
      %v1007 = vld [vmem:[%s10 + $0x1d4] sm:$0xff]
      %v1008 = vld [vmem:[%s10 + $0x1dc] sm:$0xff]
      %v1009 = vld [vmem:[%s10 + $0x1e4] sm:$0xff]
      %v1010 = vld [vmem:[%s10 + $0x1ec] sm:$0xff]
      %v1011 = vld [vmem:[%s10 + $0x1f4] sm:$0xf]
      %v1012 = vld [vmem:[%s10 + $0x1f8] sm:$0xff]
      %v1013 = vld [vmem:[%s10 + $0x200] sm:$0xff]
      %v1014 = vld [vmem:[%s10 + $0x208] sm:$0xff]
      %v1015 = vld [vmem:[%s10 + $0x210] sm:$0xff]
      %v1016 = vld [vmem:[%s10 + $0x218] sm:$0xf]
      %v1017 = vld [vmem:[%s10 + $0x21c] sm:$0xff]
      %v1018 = vld [vmem:[%s10 + $0x224] sm:$0xff]
      %v1019 = vld [vmem:[%s10 + $0x22c] sm:$0xff]
      %v1020 = vld [vmem:[%s10 + $0x234] sm:$0xff]
      %v1021 = vld [vmem:[%s10 + $0x23c] sm:$0xf]
      %v1022 = vld [vmem:[%s10 + $0x240] sm:$0xff]
      %v1023 = vld [vmem:[%s10 + $0x248] sm:$0xff]
      %v1024 = vld [vmem:[%s10 + $0x250] sm:$0xff]
      %v1025 = vld [vmem:[%s10 + $0x258] sm:$0xff]
      %v1026 = vld [vmem:[%s10 + $0x260] sm:$0xf]
      %v1027 = vld [vmem:[%s10 + $0x264] sm:$0xff]
      %v1028 = vld [vmem:[%s10 + $0x26c] sm:$0xff]
      %v1029 = vld [vmem:[%s10 + $0x274] sm:$0xff]
      %v1030 = vld [vmem:[%s10 + $0x27c] sm:$0xff]
      %v1031 = vld [vmem:[%s10 + $0x284] sm:$0xf]
      %v1032 = vld [vmem:[%s10 + $0x288] sm:$0xff]
      %v1033 = vld [vmem:[%s10 + $0x290] sm:$0xff]
      %v1034 = vld [vmem:[%s10 + $0x298] sm:$0xff]
      %v1035 = vld [vmem:[%s10 + $0x2a0] sm:$0xff]
      %v1036 = vld [vmem:[%s10 + $0x2a8] sm:$0xf]
      %v1037 = vld [vmem:[%s10 + $0x2ac] sm:$0xff]
      %v1038 = vld [vmem:[%s10 + $0x2b4] sm:$0xff]
      %v1039 = vld [vmem:[%s10 + $0x2bc] sm:$0xff]
      %v1040 = vld [vmem:[%s10 + $0x2c4] sm:$0xff]
      %v1041 = vld [vmem:[%s10 + $0x2cc] sm:$0xf]
      %v1042 = vld [vmem:[%s10 + $0x2d0] sm:$0xff]
      %v1043 = vld [vmem:[%s10 + $0x2d8] sm:$0xff]
      %v1044 = vld [vmem:[%s10 + $0x2e0] sm:$0xff]
      %v1045 = vld [vmem:[%s10 + $0x2e8] sm:$0xff]
      %v1046 = vld [vmem:[%s10 + $0x2f0] sm:$0xf]
      %v1047 = vld [vmem:[%s10 + $0x2f4] sm:$0xff]
      %v1048 = vld [vmem:[%s10 + $0x2fc] sm:$0xff]
      %v1049 = vld [vmem:[%s10 + $0x304] sm:$0xff]
      %v1050 = vld [vmem:[%s10 + $0x30c] sm:$0xff]
      %v1051 = vld [vmem:[%s10 + $0x314] sm:$0xf]
      %v1052 = vld [vmem:[%s10 + $0x318] sm:$0xff]
      %v1053 = vld [vmem:[%s10 + $0x320] sm:$0xff]
      %v1054 = vld [vmem:[%s10 + $0x328] sm:$0xff]
      %v1055 = vld [vmem:[%s10 + $0x330] sm:$0xff]
      %v1056 = vld [vmem:[%s10 + $0x338] sm:$0xf]
      %v1057 = vld [vmem:[%s10 + $0x33c] sm:$0xff]
      %v1058 = vld [vmem:[%s10 + $0x344] sm:$0xff]
      %v1059 = vld [vmem:[%s10 + $0x34c] sm:$0xff]
      %v1060 = vld [vmem:[%s10 + $0x354] sm:$0xff]
      %v1061 = vld [vmem:[%s10 + $0x35c] sm:$0xf]
      %v1062 = vld [vmem:[%s10 + $0x360] sm:$0xff]
      %v1063 = vld [vmem:[%s10 + $0x368] sm:$0xff]
      %v1064 = vld [vmem:[%s10 + $0x370] sm:$0xff]
      %v1065 = vld [vmem:[%s10 + $0x378] sm:$0xff]
      %v1066 = vld [vmem:[%s10 + $0x380] sm:$0xf]
      %v1067 = vld [vmem:[%s10 + $0x384] sm:$0xff]
      %v1068 = vld [vmem:[%s10 + $0x38c] sm:$0xff]
      %v1069 = vld [vmem:[%s10 + $0x394] sm:$0xff]
      %v1070 = vld [vmem:[%s10 + $0x39c] sm:$0xff]
      %v1071 = vld [vmem:[%s10 + $0x3a4] sm:$0xf]
      %v1072 = vld [vmem:[%s10 + $0x3a8] sm:$0xff]
      %v1073 = vld [vmem:[%s10 + $0x3b0] sm:$0xff]
      %v1074 = vld [vmem:[%s10 + $0x3b8] sm:$0xff]
      %v1075 = vld [vmem:[%s10 + $0x3c0] sm:$0xff]
      %v1076 = vld [vmem:[%s10 + $0x3c8] sm:$0xf]
      %v1077 = vld [vmem:[%s10 + $0x3cc] sm:$0xff]
      %v1078 = vld [vmem:[%s10 + $0x3d4] sm:$0xff]
      %v1079 = vld [vmem:[%s10 + $0x3dc] sm:$0xff]
      %v1080 = vld [vmem:[%s10 + $0x3e4] sm:$0xff]
      %v1081 = vld [vmem:[%s10 + $0x3ec] sm:$0xf]
      %v1082 = vld [vmem:[%s10 + $0x3f0] sm:$0xff]
      %v1083 = vld [vmem:[%s10 + $0x3f8] sm:$0xff]
      %v1084 = vld [vmem:[%s10 + $0x400] sm:$0xff]
      %v1085 = vld [vmem:[%s10 + $0x408] sm:$0xff]
      %v1086 = vld [vmem:[%s10 + $0x410] sm:$0xf]
      %v1087 = vld [vmem:[%s10 + $0x414] sm:$0xff]
      %v1088 = vld [vmem:[%s10 + $0x41c] sm:$0xff]
      %v1089 = vld [vmem:[%s10 + $0x424] sm:$0xff]
      %v1090 = vld [vmem:[%s10 + $0x42c] sm:$0xff]
      %v1091 = vld [vmem:[%s10 + $0x434] sm:$0xf]
      %v1092 = vld [vmem:[%s10 + $0x438] sm:$0xff]
      %v1093 = vld [vmem:[%s10 + $0x440] sm:$0xff]
      %v1094 = vld [vmem:[%s10 + $0x448] sm:$0xff]
      %v1095 = vld [vmem:[%s10 + $0x450] sm:$0xff]
      %v1096 = vld [vmem:[%s10 + $0x458] sm:$0xf]
      %v1097 = vld [vmem:[%s10 + $0x45c] sm:$0xff]
      %v1098 = vld [vmem:[%s10 + $0x464] sm:$0xff]
      %v1099 = vld [vmem:[%s10 + $0x46c] sm:$0xff]
      %v1100 = vld [vmem:[%s10 + $0x474] sm:$0xff]
      %v1101 = vld [vmem:[%s10 + $0x47c] sm:$0xf]
      %v1102 = vld [vmem:[%s10 + $0x480] sm:$0xff]
      %v1103 = vld [vmem:[%s10 + $0x488] sm:$0xff]
      %v1104 = vld [vmem:[%s10 + $0x490] sm:$0xff]
      %v1105 = vld [vmem:[%s10 + $0x498] sm:$0xff]
      %v1106 = vld [vmem:[%s10 + $0x4a0] sm:$0xf]
      %v1107 = vld [vmem:[%s10 + $0x4a4] sm:$0xff]
      %v1108 = vld [vmem:[%s10 + $0x4ac] sm:$0xff]
      %v1109 = vld [vmem:[%s10 + $0x4b4] sm:$0xff]
      %v1110 = vld [vmem:[%s10 + $0x4bc] sm:$0xff]
      %v1111 = vld [vmem:[%s10 + $0x4c4] sm:$0xf]
      %v1112 = vld [vmem:[%s10 + $0x4c8] sm:$0xff]
      %v1113 = vld [vmem:[%s10 + $0x4d0] sm:$0xff]
      %v1114 = vld [vmem:[%s10 + $0x4d8] sm:$0xff]
      %v1115 = vld [vmem:[%s10 + $0x4e0] sm:$0xff]
      %v1116 = vld [vmem:[%s10 + $0x4e8] sm:$0xf]
      %v1117 = vld [vmem:[%s10 + $0x4ec] sm:$0xff]
      %v1118 = vld [vmem:[%s10 + $0x4f4] sm:$0xff]
      %v1119 = vld [vmem:[%s10 + $0x4fc] sm:$0xff]
      %v1120 = vld [vmem:[%s10 + $0x504] sm:$0xff]
      %v1121 = vld [vmem:[%s10 + $0x50c] sm:$0xf]
      %v1122 = vld [vmem:[%s10 + $0x510] sm:$0xff]
      %v1123 = vld [vmem:[%s10 + $0x518] sm:$0xff]
      %v1124 = vld [vmem:[%s10 + $0x520] sm:$0xff]
      %v1125 = vld [vmem:[%s10 + $0x528] sm:$0xff]
      %v1126 = vld [vmem:[%s10 + $0x530] sm:$0xf]
      %v1127 = vld [vmem:[%s10 + $0x534] sm:$0xff]
      %v1128 = vld [vmem:[%s10 + $0x53c] sm:$0xff]
      %v1129 = vld [vmem:[%s10 + $0x544] sm:$0xff]
      %v1130 = vld [vmem:[%s10 + $0x54c] sm:$0xff]
      %v1131 = vld [vmem:[%s10 + $0x554] sm:$0xf]
      %v1132 = vld [vmem:[%s10 + $0x558] sm:$0xff]
      %v1133 = vld [vmem:[%s10 + $0x560] sm:$0xff]
      %v1134 = vld [vmem:[%s10 + $0x568] sm:$0xff]
      %v1135 = vld [vmem:[%s10 + $0x570] sm:$0xff]
      %v1136 = vld [vmem:[%s10 + $0x578] sm:$0xf]
      %v1137 = vld [vmem:[%s10 + $0x57c] sm:$0xff]
      %v1138 = vld [vmem:[%s10 + $0x584] sm:$0xff]
      %v1139 = vld [vmem:[%s10 + $0x58c] sm:$0xff]
      %v1140 = vld [vmem:[%s10 + $0x594] sm:$0xff]
      %v1141 = vld [vmem:[%s10 + $0x59c] sm:$0xf]
      %v1142 = vld [vmem:[%s10 + $0x5a0] sm:$0xff]
      %v1143 = vld [vmem:[%s10 + $0x5a8] sm:$0xff]
      %v1144 = vld [vmem:[%s10 + $0x5b0] sm:$0xff]
      %v1145 = vld [vmem:[%s10 + $0x5b8] sm:$0xff]
      %v1146 = vld [vmem:[%s10 + $0x5c0] sm:$0xf]
      %v1147 = vld [vmem:[%s10 + $0x5c4] sm:$0xff]
      %v1148 = vld [vmem:[%s10 + $0x5cc] sm:$0xff]
      %v1149 = vld [vmem:[%s10 + $0x5d4] sm:$0xff]
      %v1150 = vld [vmem:[%s10 + $0x5dc] sm:$0xff]
      %v1151 = vld [vmem:[%s10 + $0x5e4] sm:$0xf]
      %v1152 = vld [vmem:[%s10 + $0x5e8] sm:$0xff]
      %v1153 = vld [vmem:[%s10 + $0x5f0] sm:$0xff]
      %v1154 = vld [vmem:[%s10 + $0x5f8] sm:$0xff]
      %v1155 = vld [vmem:[%s10 + $0x600] sm:$0xff]
      %v1156 = vld [vmem:[%s10 + $0x608] sm:$0xf]
      %v1157 = vld [vmem:[%s10 + $0x60c] sm:$0xff]
      %v1158 = vld [vmem:[%s10 + $0x614] sm:$0xff]
      %v1159 = vld [vmem:[%s10 + $0x61c] sm:$0xff]
      %v1160 = vld [vmem:[%s10 + $0x624] sm:$0xff]
      %v1161 = vld [vmem:[%s10 + $0x62c] sm:$0xf]
      %v1162 = vld [vmem:[%s10 + $0x630] sm:$0xff]
      %v1163 = vld [vmem:[%s10 + $0x638] sm:$0xff]
      %v1164 = vld [vmem:[%s10 + $0x640] sm:$0xff]
      %v1165 = vld [vmem:[%s10 + $0x648] sm:$0xff]
      %v1166 = vld [vmem:[%s10 + $0x650] sm:$0xf]
      %v1167 = vld [vmem:[%s10 + $0x654] sm:$0xff]
      %v1168 = vld [vmem:[%s10 + $0x65c] sm:$0xff]
      %v1169 = vld [vmem:[%s10 + $0x664] sm:$0xff]
      %v1170 = vld [vmem:[%s10 + $0x66c] sm:$0xff]
      %v1171 = vld [vmem:[%s10 + $0x674] sm:$0xf]
      %v1172 = vld [vmem:[%s10 + $0x678] sm:$0xff]
      %v1173 = vld [vmem:[%s10 + $0x680] sm:$0xff]
      %v1174 = vld [vmem:[%s10 + $0x688] sm:$0xff]
      %v1175 = vld [vmem:[%s10 + $0x690] sm:$0xff]
      %v1176 = vld [vmem:[%s10 + $0x698] sm:$0xf]
      %v1177 = vld [vmem:[%s10 + $0x69c] sm:$0xff]
      %v1178 = vld [vmem:[%s10 + $0x6a4] sm:$0xff]
      %v1179 = vld [vmem:[%s10 + $0x6ac] sm:$0xff]
      %v1180 = vld [vmem:[%s10 + $0x6b4] sm:$0xff]
      %v1181 = vld [vmem:[%s10 + $0x6bc] sm:$0xf]
      %v1182 = vld [vmem:[%s10 + $0x6c0] sm:$0xff]
      %v1183 = vld [vmem:[%s10 + $0x6c8] sm:$0xff]
      %v1184 = vld [vmem:[%s10 + $0x6d0] sm:$0xff]
      %v1185 = vld [vmem:[%s10 + $0x6d8] sm:$0xff]
      %v1186 = vld [vmem:[%s10 + $0x6e0] sm:$0xf]
      %v1187 = vld [vmem:[%s10 + $0x6e4] sm:$0xff]
      %v1188 = vld [vmem:[%s10 + $0x6ec] sm:$0xff]
      %v1189 = vld [vmem:[%s10 + $0x6f4] sm:$0xff]
      %v1190 = vld [vmem:[%s10 + $0x6fc] sm:$0xff]
      %v1191 = vld [vmem:[%s10 + $0x704] sm:$0xf]
      %v1192 = vld [vmem:[%s10 + $0x708] sm:$0xff]
      %v1193 = vld [vmem:[%s10 + $0x710] sm:$0xff]
      %v1194 = vld [vmem:[%s10 + $0x718] sm:$0xff]
      %v1195 = vld [vmem:[%s10 + $0x720] sm:$0xff]
      %v1196 = vld [vmem:[%s10 + $0x728] sm:$0xf]
      %v1197 = vld [vmem:[%s10 + $0x72c] sm:$0xff]
      %v1198 = vld [vmem:[%s10 + $0x734] sm:$0xff]
      %v1199 = vld [vmem:[%s10 + $0x73c] sm:$0xff]
      %v1200 = vld [vmem:[%s10 + $0x744] sm:$0xff]
      %v1201 = vld [vmem:[%s10 + $0x74c] sm:$0xf]
      %v1202 = vld [vmem:[%s10 + $0x750] sm:$0xff]
      %v1203 = vld [vmem:[%s10 + $0x758] sm:$0xff]
      %v1204 = vld [vmem:[%s10 + $0x760] sm:$0xff]
      %v1205 = vld [vmem:[%s10 + $0x768] sm:$0xff]
      %v1206 = vld [vmem:[%s10 + $0x770] sm:$0xf]
      %v1207 = vld [vmem:[%s10 + $0x774] sm:$0xff]
      %v1208 = vld [vmem:[%s10 + $0x77c] sm:$0xff]
      %v1209 = vld [vmem:[%s10 + $0x784] sm:$0xff]
      %v1210 = vld [vmem:[%s10 + $0x78c] sm:$0xff]
      %v1211 = vld [vmem:[%s10 + $0x794] sm:$0xf]
      %v1212 = vld [vmem:[%s10 + $0x798] sm:$0xff]
      %v1213 = vld [vmem:[%s10 + $0x7a0] sm:$0xff]
      %v1214 = vld [vmem:[%s10 + $0x7a8] sm:$0xff]
      %v1215 = vld [vmem:[%s10 + $0x7b0] sm:$0xff]
      %v1216 = vld [vmem:[%s10 + $0x7b8] sm:$0xf]
      %v1217 = vld [vmem:[%s10 + $0x7bc] sm:$0xff]
      %v1218 = vld [vmem:[%s10 + $0x7c4] sm:$0xff]
      %v1219 = vld [vmem:[%s10 + $0x7cc] sm:$0xff]
      %v1220 = vld [vmem:[%s10 + $0x7d4] sm:$0xff]
      %v1221 = vld [vmem:[%s10 + $0x7dc] sm:$0xf]
      %v1222 = vld [vmem:[%s10 + $0x7e0] sm:$0xff]
      %v1223 = vld [vmem:[%s10 + $0x7e8] sm:$0xff]
      %v1224 = vld [vmem:[%s10 + $0x7f0] sm:$0xff]
      %v1225 = vld [vmem:[%s10 + $0x7f8] sm:$0xff]
      %v1226 = vld [vmem:[%s10 + $0x800] sm:$0xf]
      %v1227 = vld [vmem:[%s10 + $0x804] sm:$0xff]
      %v1228 = vld [vmem:[%s10 + $0x80c] sm:$0xff]
      %v1229 = vld [vmem:[%s10 + $0x814] sm:$0xff]
      %v1230 = vld [vmem:[%s10 + $0x81c] sm:$0xff]
      %v1231 = vld [vmem:[%s10 + $0x824] sm:$0xf]
      %v1232 = vld [vmem:[%s10 + $0x828] sm:$0xff]
      %v1233 = vld [vmem:[%s10 + $0x830] sm:$0xff]
      %v1234 = vld [vmem:[%s10 + $0x838] sm:$0xff]
      %v1235 = vld [vmem:[%s10 + $0x840] sm:$0xff]
      %v1236 = vld [vmem:[%s10 + $0x848] sm:$0xf]
      %v1237 = vld [vmem:[%s10 + $0x84c] sm:$0xff]
      %v1238 = vld [vmem:[%s10 + $0x854] sm:$0xff]
      %v1239 = vld [vmem:[%s10 + $0x85c] sm:$0xff]
      %v1240 = vld [vmem:[%s10 + $0x864] sm:$0xff]
      %v1241 = vld [vmem:[%s10 + $0x86c] sm:$0xf]
      %v1242 = vld [vmem:[%s10 + $0x870] sm:$0xff]
      %v1243 = vld [vmem:[%s10 + $0x878] sm:$0xff]
      %v1244 = vld [vmem:[%s10 + $0x880] sm:$0xff]
      %v1245 = vld [vmem:[%s10 + $0x888] sm:$0xff]
      %v1246 = vld [vmem:[%s10 + $0x890] sm:$0xf]
      %v1247 = vld [vmem:[%s10 + $0x894] sm:$0xff]
      %v1248 = vld [vmem:[%s10 + $0x89c] sm:$0xff]
      %v1249 = vld [vmem:[%s10 + $0x8a4] sm:$0xff]
      %v1250 = vld [vmem:[%s10 + $0x8ac] sm:$0xff]
      %v1251 = vld [vmem:[%s10 + $0x8b4] sm:$0xf]
      %v1252 = vld [vmem:[%s10 + $0x8b8] sm:$0xff]
      %v1253 = vld [vmem:[%s10 + $0x8c0] sm:$0xff]
      %v1254 = vld [vmem:[%s10 + $0x8c8] sm:$0xff]
      %v1255 = vld [vmem:[%s10 + $0x8d0] sm:$0xff]
      %v1256 = vld [vmem:[%s10 + $0x8d8] sm:$0xf]
      %v1257 = vld [vmem:[%s10 + $0x8dc] sm:$0xff]
      %v1258 = vld [vmem:[%s10 + $0x8e4] sm:$0xff]
      %v1259 = vld [vmem:[%s10 + $0x8ec] sm:$0xff]
      %v1260 = vld [vmem:[%s10 + $0x8f4] sm:$0xff]
      %v1261 = vld [vmem:[%s10 + $0x8fc] sm:$0xf]
      %v1262 = vld [vmem:[%s11] sm:$0xff]
      %v1263 = vld [vmem:[%s11 + $0x8] sm:$0x1]
      %v1266 = vlaneseq
      %v1267 = vshrl.u32 %v1266, 7
      %v1268 = vsub.s32 0, %v1267
      %v1269 = vrot.slane %v1262, %v1268
      %v1270 = vlaneseq
      %v1271 = vshrl.u32 %v1270, 7
      %v1272 = vsub.s32 1, %v1271
      %v1273 = vrot.slane %v1262, %v1272
      %v1274 = vlaneseq
      %v1275 = vshrl.u32 %v1274, 7
      %v1276 = vsub.s32 2, %v1275
      %v1277 = vrot.slane %v1262, %v1276
      %v1278 = vlaneseq
      %v1279 = vshrl.u32 %v1278, 7
      %v1280 = vsub.s32 3, %v1279
      %v1281 = vrot.slane %v1262, %v1280
      %v1282 = vlaneseq
      %v1283 = vshrl.u32 %v1282, 7
      %v1284 = vsub.s32 4, %v1283
      %v1285 = vrot.slane %v1262, %v1284
      %v1286 = vlaneseq
      %v1287 = vshrl.u32 %v1286, 7
      %v1288 = vsub.s32 5, %v1287
      %v1289 = vrot.slane %v1262, %v1288
      %v1290 = vlaneseq
      %v1291 = vshrl.u32 %v1290, 7
      %v1292 = vsub.s32 6, %v1291
      %v1293 = vrot.slane %v1262, %v1292
      %v1294 = vlaneseq
      %v1295 = vshrl.u32 %v1294, 7
      %v1296 = vsub.s32 7, %v1295
      %v1297 = vrot.slane %v1262, %v1296
      %v1298 = vlaneseq
      %v1299 = vshrl.u32 %v1298, 7
      %v1300 = vsub.s32 0, %v1299
      %v1301 = vrot.slane %v1263, %v1300
      %v1631 = vunpack.c.l.b16 %v942
      %v1632 = vunpack.c.h.b16 %v942
      %v1633 = vunpack.c.l.b16 %v943
      %v1634 = vunpack.c.h.b16 %v943
      %v1635 = vunpack.c.l.b16 %v944
      %v1636 = vunpack.c.h.b16 %v944
      %v1637 = vunpack.c.l.b16 %v945
      %v1638 = vunpack.c.h.b16 %v945
      %v1639 = vunpack.c.l.b16 %v946
      %v1640 = vunpack.c.l.b16 %v947
      %v1641 = vunpack.c.h.b16 %v947
      %v1642 = vunpack.c.l.b16 %v948
      %v1643 = vunpack.c.h.b16 %v948
      %v1644 = vunpack.c.l.b16 %v949
      %v1645 = vunpack.c.h.b16 %v949
      %v1646 = vunpack.c.l.b16 %v950
      %v1647 = vunpack.c.h.b16 %v950
      %v1648 = vunpack.c.l.b16 %v951
      %v1649 = vunpack.c.l.b16 %v952
      %v1650 = vunpack.c.h.b16 %v952
      %v1651 = vunpack.c.l.b16 %v953
      %v1652 = vunpack.c.h.b16 %v953
      %v1653 = vunpack.c.l.b16 %v954
      %v1654 = vunpack.c.h.b16 %v954
      %v1655 = vunpack.c.l.b16 %v955
      %v1656 = vunpack.c.h.b16 %v955
      %v1657 = vunpack.c.l.b16 %v956
      %v1658 = vunpack.c.l.b16 %v957
      %v1659 = vunpack.c.h.b16 %v957
      %v1660 = vunpack.c.l.b16 %v958
      %v1661 = vunpack.c.h.b16 %v958
      %v1662 = vunpack.c.l.b16 %v959
      %v1663 = vunpack.c.h.b16 %v959
      %v1664 = vunpack.c.l.b16 %v960
      %v1665 = vunpack.c.h.b16 %v960
      %v1666 = vunpack.c.l.b16 %v961
      %v1667 = vunpack.c.l.b16 %v962
      %v1668 = vunpack.c.h.b16 %v962
      %v1669 = vunpack.c.l.b16 %v963
      %v1670 = vunpack.c.h.b16 %v963
      %v1671 = vunpack.c.l.b16 %v964
      %v1672 = vunpack.c.h.b16 %v964
      %v1673 = vunpack.c.l.b16 %v965
      %v1674 = vunpack.c.h.b16 %v965
      %v1675 = vunpack.c.l.b16 %v966
      %v1676 = vunpack.c.l.b16 %v967
      %v1677 = vunpack.c.h.b16 %v967
      %v1678 = vunpack.c.l.b16 %v968
      %v1679 = vunpack.c.h.b16 %v968
      %v1680 = vunpack.c.l.b16 %v969
      %v1681 = vunpack.c.h.b16 %v969
      %v1682 = vunpack.c.l.b16 %v970
      %v1683 = vunpack.c.h.b16 %v970
      %v1684 = vunpack.c.l.b16 %v971
      %v1685 = vunpack.c.l.b16 %v972
      %v1686 = vunpack.c.h.b16 %v972
      %v1687 = vunpack.c.l.b16 %v973
      %v1688 = vunpack.c.h.b16 %v973
      %v1689 = vunpack.c.l.b16 %v974
      %v1690 = vunpack.c.h.b16 %v974
      %v1691 = vunpack.c.l.b16 %v975
      %v1692 = vunpack.c.h.b16 %v975
      %v1693 = vunpack.c.l.b16 %v976
      %v1694 = vunpack.c.l.b16 %v977
      %v1695 = vunpack.c.h.b16 %v977
      %v1696 = vunpack.c.l.b16 %v978
      %v1697 = vunpack.c.h.b16 %v978
      %v1698 = vunpack.c.l.b16 %v979
      %v1699 = vunpack.c.h.b16 %v979
      %v1700 = vunpack.c.l.b16 %v980
      %v1701 = vunpack.c.h.b16 %v980
      %v1702 = vunpack.c.l.b16 %v981
      %v1703 = vunpack.c.l.b16 %v982
      %v1704 = vunpack.c.h.b16 %v982
      %v1705 = vunpack.c.l.b16 %v983
      %v1706 = vunpack.c.h.b16 %v983
      %v1707 = vunpack.c.l.b16 %v984
      %v1708 = vunpack.c.h.b16 %v984
      %v1709 = vunpack.c.l.b16 %v985
      %v1710 = vunpack.c.h.b16 %v985
      %v1711 = vunpack.c.l.b16 %v986
      %v1712 = vunpack.c.l.b16 %v987
      %v1713 = vunpack.c.h.b16 %v987
      %v1714 = vunpack.c.l.b16 %v988
      %v1715 = vunpack.c.h.b16 %v988
      %v1716 = vunpack.c.l.b16 %v989
      %v1717 = vunpack.c.h.b16 %v989
      %v1718 = vunpack.c.l.b16 %v990
      %v1719 = vunpack.c.h.b16 %v990
      %v1720 = vunpack.c.l.b16 %v991
      %v1721 = vunpack.c.l.b16 %v992
      %v1722 = vunpack.c.h.b16 %v992
      %v1723 = vunpack.c.l.b16 %v993
      %v1724 = vunpack.c.h.b16 %v993
      %v1725 = vunpack.c.l.b16 %v994
      %v1726 = vunpack.c.h.b16 %v994
      %v1727 = vunpack.c.l.b16 %v995
      %v1728 = vunpack.c.h.b16 %v995
      %v1729 = vunpack.c.l.b16 %v996
      %v1730 = vunpack.c.l.b16 %v997
      %v1731 = vunpack.c.h.b16 %v997
      %v1732 = vunpack.c.l.b16 %v998
      %v1733 = vunpack.c.h.b16 %v998
      %v1734 = vunpack.c.l.b16 %v999
      %v1735 = vunpack.c.h.b16 %v999
      %v1736 = vunpack.c.l.b16 %v1000
      %v1737 = vunpack.c.h.b16 %v1000
      %v1738 = vunpack.c.l.b16 %v1001
      %v1739 = vunpack.c.l.b16 %v1002
      %v1740 = vunpack.c.h.b16 %v1002
      %v1741 = vunpack.c.l.b16 %v1003
      %v1742 = vunpack.c.h.b16 %v1003
      %v1743 = vunpack.c.l.b16 %v1004
      %v1744 = vunpack.c.h.b16 %v1004
      %v1745 = vunpack.c.l.b16 %v1005
      %v1746 = vunpack.c.h.b16 %v1005
      %v1747 = vunpack.c.l.b16 %v1006
      %v1748 = vunpack.c.l.b16 %v1007
      %v1749 = vunpack.c.h.b16 %v1007
      %v1750 = vunpack.c.l.b16 %v1008
      %v1751 = vunpack.c.h.b16 %v1008
      %v1752 = vunpack.c.l.b16 %v1009
      %v1753 = vunpack.c.h.b16 %v1009
      %v1754 = vunpack.c.l.b16 %v1010
      %v1755 = vunpack.c.h.b16 %v1010
      %v1756 = vunpack.c.l.b16 %v1011
      %v1757 = vunpack.c.l.b16 %v1012
      %v1758 = vunpack.c.h.b16 %v1012
      %v1759 = vunpack.c.l.b16 %v1013
      %v1760 = vunpack.c.h.b16 %v1013
      %v1761 = vunpack.c.l.b16 %v1014
      %v1762 = vunpack.c.h.b16 %v1014
      %v1763 = vunpack.c.l.b16 %v1015
      %v1764 = vunpack.c.h.b16 %v1015
      %v1765 = vunpack.c.l.b16 %v1016
      %v1766 = vunpack.c.l.b16 %v1017
      %v1767 = vunpack.c.h.b16 %v1017
      %v1768 = vunpack.c.l.b16 %v1018
      %v1769 = vunpack.c.h.b16 %v1018
      %v1770 = vunpack.c.l.b16 %v1019
      %v1771 = vunpack.c.h.b16 %v1019
      %v1772 = vunpack.c.l.b16 %v1020
      %v1773 = vunpack.c.h.b16 %v1020
      %v1774 = vunpack.c.l.b16 %v1021
      %v1775 = vunpack.c.l.b16 %v1022
      %v1776 = vunpack.c.h.b16 %v1022
      %v1777 = vunpack.c.l.b16 %v1023
      %v1778 = vunpack.c.h.b16 %v1023
      %v1779 = vunpack.c.l.b16 %v1024
      %v1780 = vunpack.c.h.b16 %v1024
      %v1781 = vunpack.c.l.b16 %v1025
      %v1782 = vunpack.c.h.b16 %v1025
      %v1783 = vunpack.c.l.b16 %v1026
      %v1784 = vunpack.c.l.b16 %v1027
      %v1785 = vunpack.c.h.b16 %v1027
      %v1786 = vunpack.c.l.b16 %v1028
      %v1787 = vunpack.c.h.b16 %v1028
      %v1788 = vunpack.c.l.b16 %v1029
      %v1789 = vunpack.c.h.b16 %v1029
      %v1790 = vunpack.c.l.b16 %v1030
      %v1791 = vunpack.c.h.b16 %v1030
      %v1792 = vunpack.c.l.b16 %v1031
      %v1793 = vunpack.c.l.b16 %v1032
      %v1794 = vunpack.c.h.b16 %v1032
      %v1795 = vunpack.c.l.b16 %v1033
      %v1796 = vunpack.c.h.b16 %v1033
      %v1797 = vunpack.c.l.b16 %v1034
      %v1798 = vunpack.c.h.b16 %v1034
      %v1799 = vunpack.c.l.b16 %v1035
      %v1800 = vunpack.c.h.b16 %v1035
      %v1801 = vunpack.c.l.b16 %v1036
      %v1802 = vunpack.c.l.b16 %v1037
      %v1803 = vunpack.c.h.b16 %v1037
      %v1804 = vunpack.c.l.b16 %v1038
      %v1805 = vunpack.c.h.b16 %v1038
      %v1806 = vunpack.c.l.b16 %v1039
      %v1807 = vunpack.c.h.b16 %v1039
      %v1808 = vunpack.c.l.b16 %v1040
      %v1809 = vunpack.c.h.b16 %v1040
      %v1810 = vunpack.c.l.b16 %v1041
      %v1811 = vunpack.c.l.b16 %v1042
      %v1812 = vunpack.c.h.b16 %v1042
      %v1813 = vunpack.c.l.b16 %v1043
      %v1814 = vunpack.c.h.b16 %v1043
      %v1815 = vunpack.c.l.b16 %v1044
      %v1816 = vunpack.c.h.b16 %v1044
      %v1817 = vunpack.c.l.b16 %v1045
      %v1818 = vunpack.c.h.b16 %v1045
      %v1819 = vunpack.c.l.b16 %v1046
      %v1820 = vunpack.c.l.b16 %v1047
      %v1821 = vunpack.c.h.b16 %v1047
      %v1822 = vunpack.c.l.b16 %v1048
      %v1823 = vunpack.c.h.b16 %v1048
      %v1824 = vunpack.c.l.b16 %v1049
      %v1825 = vunpack.c.h.b16 %v1049
      %v1826 = vunpack.c.l.b16 %v1050
      %v1827 = vunpack.c.h.b16 %v1050
      %v1828 = vunpack.c.l.b16 %v1051
      %v1829 = vunpack.c.l.b16 %v1052
      %v1830 = vunpack.c.h.b16 %v1052
      %v1831 = vunpack.c.l.b16 %v1053
      %v1832 = vunpack.c.h.b16 %v1053
      %v1833 = vunpack.c.l.b16 %v1054
      %v1834 = vunpack.c.h.b16 %v1054
      %v1835 = vunpack.c.l.b16 %v1055
      %v1836 = vunpack.c.h.b16 %v1055
      %v1837 = vunpack.c.l.b16 %v1056
      %v1838 = vunpack.c.l.b16 %v1057
      %v1839 = vunpack.c.h.b16 %v1057
      %v1840 = vunpack.c.l.b16 %v1058
      %v1841 = vunpack.c.h.b16 %v1058
      %v1842 = vunpack.c.l.b16 %v1059
      %v1843 = vunpack.c.h.b16 %v1059
      %v1844 = vunpack.c.l.b16 %v1060
      %v1845 = vunpack.c.h.b16 %v1060
      %v1846 = vunpack.c.l.b16 %v1061
      %v1847 = vunpack.c.l.b16 %v1062
      %v1848 = vunpack.c.h.b16 %v1062
      %v1849 = vunpack.c.l.b16 %v1063
      %v1850 = vunpack.c.h.b16 %v1063
      %v1851 = vunpack.c.l.b16 %v1064
      %v1852 = vunpack.c.h.b16 %v1064
      %v1853 = vunpack.c.l.b16 %v1065
      %v1854 = vunpack.c.h.b16 %v1065
      %v1855 = vunpack.c.l.b16 %v1066
      %v1856 = vunpack.c.l.b16 %v1067
      %v1857 = vunpack.c.h.b16 %v1067
      %v1858 = vunpack.c.l.b16 %v1068
      %v1859 = vunpack.c.h.b16 %v1068
      %v1860 = vunpack.c.l.b16 %v1069
      %v1861 = vunpack.c.h.b16 %v1069
      %v1862 = vunpack.c.l.b16 %v1070
      %v1863 = vunpack.c.h.b16 %v1070
      %v1864 = vunpack.c.l.b16 %v1071
      %v1865 = vunpack.c.l.b16 %v1072
      %v1866 = vunpack.c.h.b16 %v1072
      %v1867 = vunpack.c.l.b16 %v1073
      %v1868 = vunpack.c.h.b16 %v1073
      %v1869 = vunpack.c.l.b16 %v1074
      %v1870 = vunpack.c.h.b16 %v1074
      %v1871 = vunpack.c.l.b16 %v1075
      %v1872 = vunpack.c.h.b16 %v1075
      %v1873 = vunpack.c.l.b16 %v1076
      %v1874 = vunpack.c.l.b16 %v1077
      %v1875 = vunpack.c.h.b16 %v1077
      %v1876 = vunpack.c.l.b16 %v1078
      %v1877 = vunpack.c.h.b16 %v1078
      %v1878 = vunpack.c.l.b16 %v1079
      %v1879 = vunpack.c.h.b16 %v1079
      %v1880 = vunpack.c.l.b16 %v1080
      %v1881 = vunpack.c.h.b16 %v1080
      %v1882 = vunpack.c.l.b16 %v1081
      %v1883 = vunpack.c.l.b16 %v1082
      %v1884 = vunpack.c.h.b16 %v1082
      %v1885 = vunpack.c.l.b16 %v1083
      %v1886 = vunpack.c.h.b16 %v1083
      %v1887 = vunpack.c.l.b16 %v1084
      %v1888 = vunpack.c.h.b16 %v1084
      %v1889 = vunpack.c.l.b16 %v1085
      %v1890 = vunpack.c.h.b16 %v1085
      %v1891 = vunpack.c.l.b16 %v1086
      %v1892 = vunpack.c.l.b16 %v1087
      %v1893 = vunpack.c.h.b16 %v1087
      %v1894 = vunpack.c.l.b16 %v1088
      %v1895 = vunpack.c.h.b16 %v1088
      %v1896 = vunpack.c.l.b16 %v1089
      %v1897 = vunpack.c.h.b16 %v1089
      %v1898 = vunpack.c.l.b16 %v1090
      %v1899 = vunpack.c.h.b16 %v1090
      %v1900 = vunpack.c.l.b16 %v1091
      %v1901 = vunpack.c.l.b16 %v1092
      %v1902 = vunpack.c.h.b16 %v1092
      %v1903 = vunpack.c.l.b16 %v1093
      %v1904 = vunpack.c.h.b16 %v1093
      %v1905 = vunpack.c.l.b16 %v1094
      %v1906 = vunpack.c.h.b16 %v1094
      %v1907 = vunpack.c.l.b16 %v1095
      %v1908 = vunpack.c.h.b16 %v1095
      %v1909 = vunpack.c.l.b16 %v1096
      %v1910 = vunpack.c.l.b16 %v1097
      %v1911 = vunpack.c.h.b16 %v1097
      %v1912 = vunpack.c.l.b16 %v1098
      %v1913 = vunpack.c.h.b16 %v1098
      %v1914 = vunpack.c.l.b16 %v1099
      %v1915 = vunpack.c.h.b16 %v1099
      %v1916 = vunpack.c.l.b16 %v1100
      %v1917 = vunpack.c.h.b16 %v1100
      %v1918 = vunpack.c.l.b16 %v1101
      %v1919 = vunpack.c.l.b16 %v1102
      %v1920 = vunpack.c.h.b16 %v1102
      %v1921 = vunpack.c.l.b16 %v1103
      %v1922 = vunpack.c.h.b16 %v1103
      %v1923 = vunpack.c.l.b16 %v1104
      %v1924 = vunpack.c.h.b16 %v1104
      %v1925 = vunpack.c.l.b16 %v1105
      %v1926 = vunpack.c.h.b16 %v1105
      %v1927 = vunpack.c.l.b16 %v1106
      %v1928 = vunpack.c.l.b16 %v1107
      %v1929 = vunpack.c.h.b16 %v1107
      %v1930 = vunpack.c.l.b16 %v1108
      %v1931 = vunpack.c.h.b16 %v1108
      %v1932 = vunpack.c.l.b16 %v1109
      %v1933 = vunpack.c.h.b16 %v1109
      %v1934 = vunpack.c.l.b16 %v1110
      %v1935 = vunpack.c.h.b16 %v1110
      %v1936 = vunpack.c.l.b16 %v1111
      %v1937 = vunpack.c.l.b16 %v1112
      %v1938 = vunpack.c.h.b16 %v1112
      %v1939 = vunpack.c.l.b16 %v1113
      %v1940 = vunpack.c.h.b16 %v1113
      %v1941 = vunpack.c.l.b16 %v1114
      %v1942 = vunpack.c.h.b16 %v1114
      %v1943 = vunpack.c.l.b16 %v1115
      %v1944 = vunpack.c.h.b16 %v1115
      %v1945 = vunpack.c.l.b16 %v1116
      %v1946 = vunpack.c.l.b16 %v1117
      %v1947 = vunpack.c.h.b16 %v1117
      %v1948 = vunpack.c.l.b16 %v1118
      %v1949 = vunpack.c.h.b16 %v1118
      %v1950 = vunpack.c.l.b16 %v1119
      %v1951 = vunpack.c.h.b16 %v1119
      %v1952 = vunpack.c.l.b16 %v1120
      %v1953 = vunpack.c.h.b16 %v1120
      %v1954 = vunpack.c.l.b16 %v1121
      %v1955 = vunpack.c.l.b16 %v1122
      %v1956 = vunpack.c.h.b16 %v1122
      %v1957 = vunpack.c.l.b16 %v1123
      %v1958 = vunpack.c.h.b16 %v1123
      %v1959 = vunpack.c.l.b16 %v1124
      %v1960 = vunpack.c.h.b16 %v1124
      %v1961 = vunpack.c.l.b16 %v1125
      %v1962 = vunpack.c.h.b16 %v1125
      %v1963 = vunpack.c.l.b16 %v1126
      %v1964 = vunpack.c.l.b16 %v1127
      %v1965 = vunpack.c.h.b16 %v1127
      %v1966 = vunpack.c.l.b16 %v1128
      %v1967 = vunpack.c.h.b16 %v1128
      %v1968 = vunpack.c.l.b16 %v1129
      %v1969 = vunpack.c.h.b16 %v1129
      %v1970 = vunpack.c.l.b16 %v1130
      %v1971 = vunpack.c.h.b16 %v1130
      %v1972 = vunpack.c.l.b16 %v1131
      %v1973 = vunpack.c.l.b16 %v1132
      %v1974 = vunpack.c.h.b16 %v1132
      %v1975 = vunpack.c.l.b16 %v1133
      %v1976 = vunpack.c.h.b16 %v1133
      %v1977 = vunpack.c.l.b16 %v1134
      %v1978 = vunpack.c.h.b16 %v1134
      %v1979 = vunpack.c.l.b16 %v1135
      %v1980 = vunpack.c.h.b16 %v1135
      %v1981 = vunpack.c.l.b16 %v1136
      %v1982 = vunpack.c.l.b16 %v1137
      %v1983 = vunpack.c.h.b16 %v1137
      %v1984 = vunpack.c.l.b16 %v1138
      %v1985 = vunpack.c.h.b16 %v1138
      %v1986 = vunpack.c.l.b16 %v1139
      %v1987 = vunpack.c.h.b16 %v1139
      %v1988 = vunpack.c.l.b16 %v1140
      %v1989 = vunpack.c.h.b16 %v1140
      %v1990 = vunpack.c.l.b16 %v1141
      %v1991 = vunpack.c.l.b16 %v1142
      %v1992 = vunpack.c.h.b16 %v1142
      %v1993 = vunpack.c.l.b16 %v1143
      %v1994 = vunpack.c.h.b16 %v1143
      %v1995 = vunpack.c.l.b16 %v1144
      %v1996 = vunpack.c.h.b16 %v1144
      %v1997 = vunpack.c.l.b16 %v1145
      %v1998 = vunpack.c.h.b16 %v1145
      %v1999 = vunpack.c.l.b16 %v1146
      %v2000 = vunpack.c.l.b16 %v1147
      %v2001 = vunpack.c.h.b16 %v1147
      %v2002 = vunpack.c.l.b16 %v1148
      %v2003 = vunpack.c.h.b16 %v1148
      %v2004 = vunpack.c.l.b16 %v1149
      %v2005 = vunpack.c.h.b16 %v1149
      %v2006 = vunpack.c.l.b16 %v1150
      %v2007 = vunpack.c.h.b16 %v1150
      %v2008 = vunpack.c.l.b16 %v1151
      %v2009 = vunpack.c.l.b16 %v1152
      %v2010 = vunpack.c.h.b16 %v1152
      %v2011 = vunpack.c.l.b16 %v1153
      %v2012 = vunpack.c.h.b16 %v1153
      %v2013 = vunpack.c.l.b16 %v1154
      %v2014 = vunpack.c.h.b16 %v1154
      %v2015 = vunpack.c.l.b16 %v1155
      %v2016 = vunpack.c.h.b16 %v1155
      %v2017 = vunpack.c.l.b16 %v1156
      %v2018 = vunpack.c.l.b16 %v1157
      %v2019 = vunpack.c.h.b16 %v1157
      %v2020 = vunpack.c.l.b16 %v1158
      %v2021 = vunpack.c.h.b16 %v1158
      %v2022 = vunpack.c.l.b16 %v1159
      %v2023 = vunpack.c.h.b16 %v1159
      %v2024 = vunpack.c.l.b16 %v1160
      %v2025 = vunpack.c.h.b16 %v1160
      %v2026 = vunpack.c.l.b16 %v1161
      %v2027 = vunpack.c.l.b16 %v1162
      %v2028 = vunpack.c.h.b16 %v1162
      %v2029 = vunpack.c.l.b16 %v1163
      %v2030 = vunpack.c.h.b16 %v1163
      %v2031 = vunpack.c.l.b16 %v1164
      %v2032 = vunpack.c.h.b16 %v1164
      %v2033 = vunpack.c.l.b16 %v1165
      %v2034 = vunpack.c.h.b16 %v1165
      %v2035 = vunpack.c.l.b16 %v1166
      %v2036 = vunpack.c.l.b16 %v1167
      %v2037 = vunpack.c.h.b16 %v1167
      %v2038 = vunpack.c.l.b16 %v1168
      %v2039 = vunpack.c.h.b16 %v1168
      %v2040 = vunpack.c.l.b16 %v1169
      %v2041 = vunpack.c.h.b16 %v1169
      %v2042 = vunpack.c.l.b16 %v1170
      %v2043 = vunpack.c.h.b16 %v1170
      %v2044 = vunpack.c.l.b16 %v1171
      %v2045 = vunpack.c.l.b16 %v1172
      %v2046 = vunpack.c.h.b16 %v1172
      %v2047 = vunpack.c.l.b16 %v1173
      %v2048 = vunpack.c.h.b16 %v1173
      %v2049 = vunpack.c.l.b16 %v1174
      %v2050 = vunpack.c.h.b16 %v1174
      %v2051 = vunpack.c.l.b16 %v1175
      %v2052 = vunpack.c.h.b16 %v1175
      %v2053 = vunpack.c.l.b16 %v1176
      %v2054 = vunpack.c.l.b16 %v1177
      %v2055 = vunpack.c.h.b16 %v1177
      %v2056 = vunpack.c.l.b16 %v1178
      %v2057 = vunpack.c.h.b16 %v1178
      %v2058 = vunpack.c.l.b16 %v1179
      %v2059 = vunpack.c.h.b16 %v1179
      %v2060 = vunpack.c.l.b16 %v1180
      %v2061 = vunpack.c.h.b16 %v1180
      %v2062 = vunpack.c.l.b16 %v1181
      %v2063 = vunpack.c.l.b16 %v1182
      %v2064 = vunpack.c.h.b16 %v1182
      %v2065 = vunpack.c.l.b16 %v1183
      %v2066 = vunpack.c.h.b16 %v1183
      %v2067 = vunpack.c.l.b16 %v1184
      %v2068 = vunpack.c.h.b16 %v1184
      %v2069 = vunpack.c.l.b16 %v1185
      %v2070 = vunpack.c.h.b16 %v1185
      %v2071 = vunpack.c.l.b16 %v1186
      %v2072 = vunpack.c.l.b16 %v1187
      %v2073 = vunpack.c.h.b16 %v1187
      %v2074 = vunpack.c.l.b16 %v1188
      %v2075 = vunpack.c.h.b16 %v1188
      %v2076 = vunpack.c.l.b16 %v1189
      %v2077 = vunpack.c.h.b16 %v1189
      %v2078 = vunpack.c.l.b16 %v1190
      %v2079 = vunpack.c.h.b16 %v1190
      %v2080 = vunpack.c.l.b16 %v1191
      %v2081 = vunpack.c.l.b16 %v1192
      %v2082 = vunpack.c.h.b16 %v1192
      %v2083 = vunpack.c.l.b16 %v1193
      %v2084 = vunpack.c.h.b16 %v1193
      %v2085 = vunpack.c.l.b16 %v1194
      %v2086 = vunpack.c.h.b16 %v1194
      %v2087 = vunpack.c.l.b16 %v1195
      %v2088 = vunpack.c.h.b16 %v1195
      %v2089 = vunpack.c.l.b16 %v1196
      %v2090 = vunpack.c.l.b16 %v1197
      %v2091 = vunpack.c.h.b16 %v1197
      %v2092 = vunpack.c.l.b16 %v1198
      %v2093 = vunpack.c.h.b16 %v1198
      %v2094 = vunpack.c.l.b16 %v1199
      %v2095 = vunpack.c.h.b16 %v1199
      %v2096 = vunpack.c.l.b16 %v1200
      %v2097 = vunpack.c.h.b16 %v1200
      %v2098 = vunpack.c.l.b16 %v1201
      %v2099 = vunpack.c.l.b16 %v1202
      %v2100 = vunpack.c.h.b16 %v1202
      %v2101 = vunpack.c.l.b16 %v1203
      %v2102 = vunpack.c.h.b16 %v1203
      %v2103 = vunpack.c.l.b16 %v1204
      %v2104 = vunpack.c.h.b16 %v1204
      %v2105 = vunpack.c.l.b16 %v1205
      %v2106 = vunpack.c.h.b16 %v1205
      %v2107 = vunpack.c.l.b16 %v1206
      %v2108 = vunpack.c.l.b16 %v1207
      %v2109 = vunpack.c.h.b16 %v1207
      %v2110 = vunpack.c.l.b16 %v1208
      %v2111 = vunpack.c.h.b16 %v1208
      %v2112 = vunpack.c.l.b16 %v1209
      %v2113 = vunpack.c.h.b16 %v1209
      %v2114 = vunpack.c.l.b16 %v1210
      %v2115 = vunpack.c.h.b16 %v1210
      %v2116 = vunpack.c.l.b16 %v1211
      %v2117 = vunpack.c.l.b16 %v1212
      %v2118 = vunpack.c.h.b16 %v1212
      %v2119 = vunpack.c.l.b16 %v1213
      %v2120 = vunpack.c.h.b16 %v1213
      %v2121 = vunpack.c.l.b16 %v1214
      %v2122 = vunpack.c.h.b16 %v1214
      %v2123 = vunpack.c.l.b16 %v1215
      %v2124 = vunpack.c.h.b16 %v1215
      %v2125 = vunpack.c.l.b16 %v1216
      %v2126 = vunpack.c.l.b16 %v1217
      %v2127 = vunpack.c.h.b16 %v1217
      %v2128 = vunpack.c.l.b16 %v1218
      %v2129 = vunpack.c.h.b16 %v1218
      %v2130 = vunpack.c.l.b16 %v1219
      %v2131 = vunpack.c.h.b16 %v1219
      %v2132 = vunpack.c.l.b16 %v1220
      %v2133 = vunpack.c.h.b16 %v1220
      %v2134 = vunpack.c.l.b16 %v1221
      %v2135 = vunpack.c.l.b16 %v1222
      %v2136 = vunpack.c.h.b16 %v1222
      %v2137 = vunpack.c.l.b16 %v1223
      %v2138 = vunpack.c.h.b16 %v1223
      %v2139 = vunpack.c.l.b16 %v1224
      %v2140 = vunpack.c.h.b16 %v1224
      %v2141 = vunpack.c.l.b16 %v1225
      %v2142 = vunpack.c.h.b16 %v1225
      %v2143 = vunpack.c.l.b16 %v1226
      %v2144 = vunpack.c.l.b16 %v1227
      %v2145 = vunpack.c.h.b16 %v1227
      %v2146 = vunpack.c.l.b16 %v1228
      %v2147 = vunpack.c.h.b16 %v1228
      %v2148 = vunpack.c.l.b16 %v1229
      %v2149 = vunpack.c.h.b16 %v1229
      %v2150 = vunpack.c.l.b16 %v1230
      %v2151 = vunpack.c.h.b16 %v1230
      %v2152 = vunpack.c.l.b16 %v1231
      %v2153 = vunpack.c.l.b16 %v1232
      %v2154 = vunpack.c.h.b16 %v1232
      %v2155 = vunpack.c.l.b16 %v1233
      %v2156 = vunpack.c.h.b16 %v1233
      %v2157 = vunpack.c.l.b16 %v1234
      %v2158 = vunpack.c.h.b16 %v1234
      %v2159 = vunpack.c.l.b16 %v1235
      %v2160 = vunpack.c.h.b16 %v1235
      %v2161 = vunpack.c.l.b16 %v1236
      %v2162 = vunpack.c.l.b16 %v1237
      %v2163 = vunpack.c.h.b16 %v1237
      %v2164 = vunpack.c.l.b16 %v1238
      %v2165 = vunpack.c.h.b16 %v1238
      %v2166 = vunpack.c.l.b16 %v1239
      %v2167 = vunpack.c.h.b16 %v1239
      %v2168 = vunpack.c.l.b16 %v1240
      %v2169 = vunpack.c.h.b16 %v1240
      %v2170 = vunpack.c.l.b16 %v1241
      %v2171 = vunpack.c.l.b16 %v1242
      %v2172 = vunpack.c.h.b16 %v1242
      %v2173 = vunpack.c.l.b16 %v1243
      %v2174 = vunpack.c.h.b16 %v1243
      %v2175 = vunpack.c.l.b16 %v1244
      %v2176 = vunpack.c.h.b16 %v1244
      %v2177 = vunpack.c.l.b16 %v1245
      %v2178 = vunpack.c.h.b16 %v1245
      %v2179 = vunpack.c.l.b16 %v1246
      %v2180 = vunpack.c.l.b16 %v1247
      %v2181 = vunpack.c.h.b16 %v1247
      %v2182 = vunpack.c.l.b16 %v1248
      %v2183 = vunpack.c.h.b16 %v1248
      %v2184 = vunpack.c.l.b16 %v1249
      %v2185 = vunpack.c.h.b16 %v1249
      %v2186 = vunpack.c.l.b16 %v1250
      %v2187 = vunpack.c.h.b16 %v1250
      %v2188 = vunpack.c.l.b16 %v1251
      %v2189 = vunpack.c.l.b16 %v1252
      %v2190 = vunpack.c.h.b16 %v1252
      %v2191 = vunpack.c.l.b16 %v1253
      %v2192 = vunpack.c.h.b16 %v1253
      %v2193 = vunpack.c.l.b16 %v1254
      %v2194 = vunpack.c.h.b16 %v1254
      %v2195 = vunpack.c.l.b16 %v1255
      %v2196 = vunpack.c.h.b16 %v1255
      %v2197 = vunpack.c.l.b16 %v1256
      %v2198 = vunpack.c.l.b16 %v1257
      %v2199 = vunpack.c.h.b16 %v1257
      %v2200 = vunpack.c.l.b16 %v1258
      %v2201 = vunpack.c.h.b16 %v1258
      %v2202 = vunpack.c.l.b16 %v1259
      %v2203 = vunpack.c.h.b16 %v1259
      %v2204 = vunpack.c.l.b16 %v1260
      %v2205 = vunpack.c.h.b16 %v1260
      %v2206 = vunpack.c.l.b16 %v1261
      %v2207 = vpack.c.b16 %v1640, %v1631
      %v2208 = vpack.c.b16 %v1641, %v1632
      %v2209 = vpack.c.b16 %v1642, %v1633
      %v2210 = vpack.c.b16 %v1643, %v1634
      %v2211 = vpack.c.b16 %v1644, %v1635
      %v2212 = vpack.c.b16 %v1645, %v1636
      %v2213 = vpack.c.b16 %v1646, %v1637
      %v2214 = vpack.c.b16 %v1647, %v1638
      %v2215 = vpack.c.b16 %v1648, %v1639
      %v2216 = vpack.c.b16 %v1658, %v1649
      %v2217 = vpack.c.b16 %v1659, %v1650
      %v2218 = vpack.c.b16 %v1660, %v1651
      %v2219 = vpack.c.b16 %v1661, %v1652
      %v2220 = vpack.c.b16 %v1662, %v1653
      %v2221 = vpack.c.b16 %v1663, %v1654
      %v2222 = vpack.c.b16 %v1664, %v1655
      %v2223 = vpack.c.b16 %v1665, %v1656
      %v2224 = vpack.c.b16 %v1666, %v1657
      %v2225 = vpack.c.b16 %v1676, %v1667
      %v2226 = vpack.c.b16 %v1677, %v1668
      %v2227 = vpack.c.b16 %v1678, %v1669
      %v2228 = vpack.c.b16 %v1679, %v1670
      %v2229 = vpack.c.b16 %v1680, %v1671
      %v2230 = vpack.c.b16 %v1681, %v1672
      %v2231 = vpack.c.b16 %v1682, %v1673
      %v2232 = vpack.c.b16 %v1683, %v1674
      %v2233 = vpack.c.b16 %v1684, %v1675
      %v2234 = vpack.c.b16 %v1694, %v1685
      %v2235 = vpack.c.b16 %v1695, %v1686
      %v2236 = vpack.c.b16 %v1696, %v1687
      %v2237 = vpack.c.b16 %v1697, %v1688
      %v2238 = vpack.c.b16 %v1698, %v1689
      %v2239 = vpack.c.b16 %v1699, %v1690
      %v2240 = vpack.c.b16 %v1700, %v1691
      %v2241 = vpack.c.b16 %v1701, %v1692
      %v2242 = vpack.c.b16 %v1702, %v1693
      %v2243 = vpack.c.b16 %v1712, %v1703
      %v2244 = vpack.c.b16 %v1713, %v1704
      %v2245 = vpack.c.b16 %v1714, %v1705
      %v2246 = vpack.c.b16 %v1715, %v1706
      %v2247 = vpack.c.b16 %v1716, %v1707
      %v2248 = vpack.c.b16 %v1717, %v1708
      %v2249 = vpack.c.b16 %v1718, %v1709
      %v2250 = vpack.c.b16 %v1719, %v1710
      %v2251 = vpack.c.b16 %v1720, %v1711
      %v2252 = vpack.c.b16 %v1730, %v1721
      %v2253 = vpack.c.b16 %v1731, %v1722
      %v2254 = vpack.c.b16 %v1732, %v1723
      %v2255 = vpack.c.b16 %v1733, %v1724
      %v2256 = vpack.c.b16 %v1734, %v1725
      %v2257 = vpack.c.b16 %v1735, %v1726
      %v2258 = vpack.c.b16 %v1736, %v1727
      %v2259 = vpack.c.b16 %v1737, %v1728
      %v2260 = vpack.c.b16 %v1738, %v1729
      %v2261 = vpack.c.b16 %v1748, %v1739
      %v2262 = vpack.c.b16 %v1749, %v1740
      %v2263 = vpack.c.b16 %v1750, %v1741
      %v2264 = vpack.c.b16 %v1751, %v1742
      %v2265 = vpack.c.b16 %v1752, %v1743
      %v2266 = vpack.c.b16 %v1753, %v1744
      %v2267 = vpack.c.b16 %v1754, %v1745
      %v2268 = vpack.c.b16 %v1755, %v1746
      %v2269 = vpack.c.b16 %v1756, %v1747
      %v2270 = vpack.c.b16 %v1766, %v1757
      %v2271 = vpack.c.b16 %v1767, %v1758
      %v2272 = vpack.c.b16 %v1768, %v1759
      %v2273 = vpack.c.b16 %v1769, %v1760
      %v2274 = vpack.c.b16 %v1770, %v1761
      %v2275 = vpack.c.b16 %v1771, %v1762
      %v2276 = vpack.c.b16 %v1772, %v1763
      %v2277 = vpack.c.b16 %v1773, %v1764
      %v2278 = vpack.c.b16 %v1774, %v1765
      %v2279 = vpack.c.b16 %v1784, %v1775
      %v2280 = vpack.c.b16 %v1785, %v1776
      %v2281 = vpack.c.b16 %v1786, %v1777
      %v2282 = vpack.c.b16 %v1787, %v1778
      %v2283 = vpack.c.b16 %v1788, %v1779
      %v2284 = vpack.c.b16 %v1789, %v1780
      %v2285 = vpack.c.b16 %v1790, %v1781
      %v2286 = vpack.c.b16 %v1791, %v1782
      %v2287 = vpack.c.b16 %v1792, %v1783
      %v2288 = vpack.c.b16 %v1802, %v1793
      %v2289 = vpack.c.b16 %v1803, %v1794
      %v2290 = vpack.c.b16 %v1804, %v1795
      %v2291 = vpack.c.b16 %v1805, %v1796
      %v2292 = vpack.c.b16 %v1806, %v1797
      %v2293 = vpack.c.b16 %v1807, %v1798
      %v2294 = vpack.c.b16 %v1808, %v1799
      %v2295 = vpack.c.b16 %v1809, %v1800
      %v2296 = vpack.c.b16 %v1810, %v1801
      %v2297 = vpack.c.b16 %v1820, %v1811
      %v2298 = vpack.c.b16 %v1821, %v1812
      %v2299 = vpack.c.b16 %v1822, %v1813
      %v2300 = vpack.c.b16 %v1823, %v1814
      %v2301 = vpack.c.b16 %v1824, %v1815
      %v2302 = vpack.c.b16 %v1825, %v1816
      %v2303 = vpack.c.b16 %v1826, %v1817
      %v2304 = vpack.c.b16 %v1827, %v1818
      %v2305 = vpack.c.b16 %v1828, %v1819
      %v2306 = vpack.c.b16 %v1838, %v1829
      %v2307 = vpack.c.b16 %v1839, %v1830
      %v2308 = vpack.c.b16 %v1840, %v1831
      %v2309 = vpack.c.b16 %v1841, %v1832
      %v2310 = vpack.c.b16 %v1842, %v1833
      %v2311 = vpack.c.b16 %v1843, %v1834
      %v2312 = vpack.c.b16 %v1844, %v1835
      %v2313 = vpack.c.b16 %v1845, %v1836
      %v2314 = vpack.c.b16 %v1846, %v1837
      %v2315 = vpack.c.b16 %v1856, %v1847
      %v2316 = vpack.c.b16 %v1857, %v1848
      %v2317 = vpack.c.b16 %v1858, %v1849
      %v2318 = vpack.c.b16 %v1859, %v1850
      %v2319 = vpack.c.b16 %v1860, %v1851
      %v2320 = vpack.c.b16 %v1861, %v1852
      %v2321 = vpack.c.b16 %v1862, %v1853
      %v2322 = vpack.c.b16 %v1863, %v1854
      %v2323 = vpack.c.b16 %v1864, %v1855
      %v2324 = vpack.c.b16 %v1874, %v1865
      %v2325 = vpack.c.b16 %v1875, %v1866
      %v2326 = vpack.c.b16 %v1876, %v1867
      %v2327 = vpack.c.b16 %v1877, %v1868
      %v2328 = vpack.c.b16 %v1878, %v1869
      %v2329 = vpack.c.b16 %v1879, %v1870
      %v2330 = vpack.c.b16 %v1880, %v1871
      %v2331 = vpack.c.b16 %v1881, %v1872
      %v2332 = vpack.c.b16 %v1882, %v1873
      %v2333 = vpack.c.b16 %v1892, %v1883
      %v2334 = vpack.c.b16 %v1893, %v1884
      %v2335 = vpack.c.b16 %v1894, %v1885
      %v2336 = vpack.c.b16 %v1895, %v1886
      %v2337 = vpack.c.b16 %v1896, %v1887
      %v2338 = vpack.c.b16 %v1897, %v1888
      %v2339 = vpack.c.b16 %v1898, %v1889
      %v2340 = vpack.c.b16 %v1899, %v1890
      %v2341 = vpack.c.b16 %v1900, %v1891
      %v2342 = vpack.c.b16 %v1910, %v1901
      %v2343 = vpack.c.b16 %v1911, %v1902
      %v2344 = vpack.c.b16 %v1912, %v1903
      %v2345 = vpack.c.b16 %v1913, %v1904
      %v2346 = vpack.c.b16 %v1914, %v1905
      %v2347 = vpack.c.b16 %v1915, %v1906
      %v2348 = vpack.c.b16 %v1916, %v1907
      %v2349 = vpack.c.b16 %v1917, %v1908
      %v2350 = vpack.c.b16 %v1918, %v1909
      %v2351 = vpack.c.b16 %v1928, %v1919
      %v2352 = vpack.c.b16 %v1929, %v1920
      %v2353 = vpack.c.b16 %v1930, %v1921
      %v2354 = vpack.c.b16 %v1931, %v1922
      %v2355 = vpack.c.b16 %v1932, %v1923
      %v2356 = vpack.c.b16 %v1933, %v1924
      %v2357 = vpack.c.b16 %v1934, %v1925
      %v2358 = vpack.c.b16 %v1935, %v1926
      %v2359 = vpack.c.b16 %v1936, %v1927
      %v2360 = vpack.c.b16 %v1946, %v1937
      %v2361 = vpack.c.b16 %v1947, %v1938
      %v2362 = vpack.c.b16 %v1948, %v1939
      %v2363 = vpack.c.b16 %v1949, %v1940
      %v2364 = vpack.c.b16 %v1950, %v1941
      %v2365 = vpack.c.b16 %v1951, %v1942
      %v2366 = vpack.c.b16 %v1952, %v1943
      %v2367 = vpack.c.b16 %v1953, %v1944
      %v2368 = vpack.c.b16 %v1954, %v1945
      %v2369 = vpack.c.b16 %v1964, %v1955
      %v2370 = vpack.c.b16 %v1965, %v1956
      %v2371 = vpack.c.b16 %v1966, %v1957
      %v2372 = vpack.c.b16 %v1967, %v1958
      %v2373 = vpack.c.b16 %v1968, %v1959
      %v2374 = vpack.c.b16 %v1969, %v1960
      %v2375 = vpack.c.b16 %v1970, %v1961
      %v2376 = vpack.c.b16 %v1971, %v1962
      %v2377 = vpack.c.b16 %v1972, %v1963
      %v2378 = vpack.c.b16 %v1982, %v1973
      %v2379 = vpack.c.b16 %v1983, %v1974
      %v2380 = vpack.c.b16 %v1984, %v1975
      %v2381 = vpack.c.b16 %v1985, %v1976
      %v2382 = vpack.c.b16 %v1986, %v1977
      %v2383 = vpack.c.b16 %v1987, %v1978
      %v2384 = vpack.c.b16 %v1988, %v1979
      %v2385 = vpack.c.b16 %v1989, %v1980
      %v2386 = vpack.c.b16 %v1990, %v1981
      %v2387 = vpack.c.b16 %v2000, %v1991
      %v2388 = vpack.c.b16 %v2001, %v1992
      %v2389 = vpack.c.b16 %v2002, %v1993
      %v2390 = vpack.c.b16 %v2003, %v1994
      %v2391 = vpack.c.b16 %v2004, %v1995
      %v2392 = vpack.c.b16 %v2005, %v1996
      %v2393 = vpack.c.b16 %v2006, %v1997
      %v2394 = vpack.c.b16 %v2007, %v1998
      %v2395 = vpack.c.b16 %v2008, %v1999
      %v2396 = vpack.c.b16 %v2018, %v2009
      %v2397 = vpack.c.b16 %v2019, %v2010
      %v2398 = vpack.c.b16 %v2020, %v2011
      %v2399 = vpack.c.b16 %v2021, %v2012
      %v2400 = vpack.c.b16 %v2022, %v2013
      %v2401 = vpack.c.b16 %v2023, %v2014
      %v2402 = vpack.c.b16 %v2024, %v2015
      %v2403 = vpack.c.b16 %v2025, %v2016
      %v2404 = vpack.c.b16 %v2026, %v2017
      %v2405 = vpack.c.b16 %v2036, %v2027
      %v2406 = vpack.c.b16 %v2037, %v2028
      %v2407 = vpack.c.b16 %v2038, %v2029
      %v2408 = vpack.c.b16 %v2039, %v2030
      %v2409 = vpack.c.b16 %v2040, %v2031
      %v2410 = vpack.c.b16 %v2041, %v2032
      %v2411 = vpack.c.b16 %v2042, %v2033
      %v2412 = vpack.c.b16 %v2043, %v2034
      %v2413 = vpack.c.b16 %v2044, %v2035
      %v2414 = vpack.c.b16 %v2054, %v2045
      %v2415 = vpack.c.b16 %v2055, %v2046
      %v2416 = vpack.c.b16 %v2056, %v2047
      %v2417 = vpack.c.b16 %v2057, %v2048
      %v2418 = vpack.c.b16 %v2058, %v2049
      %v2419 = vpack.c.b16 %v2059, %v2050
      %v2420 = vpack.c.b16 %v2060, %v2051
      %v2421 = vpack.c.b16 %v2061, %v2052
      %v2422 = vpack.c.b16 %v2062, %v2053
      %v2423 = vpack.c.b16 %v2072, %v2063
      %v2424 = vpack.c.b16 %v2073, %v2064
      %v2425 = vpack.c.b16 %v2074, %v2065
      %v2426 = vpack.c.b16 %v2075, %v2066
      %v2427 = vpack.c.b16 %v2076, %v2067
      %v2428 = vpack.c.b16 %v2077, %v2068
      %v2429 = vpack.c.b16 %v2078, %v2069
      %v2430 = vpack.c.b16 %v2079, %v2070
      %v2431 = vpack.c.b16 %v2080, %v2071
      %v2432 = vpack.c.b16 %v2090, %v2081
      %v2433 = vpack.c.b16 %v2091, %v2082
      %v2434 = vpack.c.b16 %v2092, %v2083
      %v2435 = vpack.c.b16 %v2093, %v2084
      %v2436 = vpack.c.b16 %v2094, %v2085
      %v2437 = vpack.c.b16 %v2095, %v2086
      %v2438 = vpack.c.b16 %v2096, %v2087
      %v2439 = vpack.c.b16 %v2097, %v2088
      %v2440 = vpack.c.b16 %v2098, %v2089
      %v2441 = vpack.c.b16 %v2108, %v2099
      %v2442 = vpack.c.b16 %v2109, %v2100
      %v2443 = vpack.c.b16 %v2110, %v2101
      %v2444 = vpack.c.b16 %v2111, %v2102
      %v2445 = vpack.c.b16 %v2112, %v2103
      %v2446 = vpack.c.b16 %v2113, %v2104
      %v2447 = vpack.c.b16 %v2114, %v2105
      %v2448 = vpack.c.b16 %v2115, %v2106
      %v2449 = vpack.c.b16 %v2116, %v2107
      %v2450 = vpack.c.b16 %v2126, %v2117
      %v2451 = vpack.c.b16 %v2127, %v2118
      %v2452 = vpack.c.b16 %v2128, %v2119
      %v2453 = vpack.c.b16 %v2129, %v2120
      %v2454 = vpack.c.b16 %v2130, %v2121
      %v2455 = vpack.c.b16 %v2131, %v2122
      %v2456 = vpack.c.b16 %v2132, %v2123
      %v2457 = vpack.c.b16 %v2133, %v2124
      %v2458 = vpack.c.b16 %v2134, %v2125
      %v2459 = vpack.c.b16 %v2144, %v2135
      %v2460 = vpack.c.b16 %v2145, %v2136
      %v2461 = vpack.c.b16 %v2146, %v2137
      %v2462 = vpack.c.b16 %v2147, %v2138
      %v2463 = vpack.c.b16 %v2148, %v2139
      %v2464 = vpack.c.b16 %v2149, %v2140
      %v2465 = vpack.c.b16 %v2150, %v2141
      %v2466 = vpack.c.b16 %v2151, %v2142
      %v2467 = vpack.c.b16 %v2152, %v2143
      %v2468 = vpack.c.b16 %v2162, %v2153
      %v2469 = vpack.c.b16 %v2163, %v2154
      %v2470 = vpack.c.b16 %v2164, %v2155
      %v2471 = vpack.c.b16 %v2165, %v2156
      %v2472 = vpack.c.b16 %v2166, %v2157
      %v2473 = vpack.c.b16 %v2167, %v2158
      %v2474 = vpack.c.b16 %v2168, %v2159
      %v2475 = vpack.c.b16 %v2169, %v2160
      %v2476 = vpack.c.b16 %v2170, %v2161
      %v2477 = vpack.c.b16 %v2180, %v2171
      %v2478 = vpack.c.b16 %v2181, %v2172
      %v2479 = vpack.c.b16 %v2182, %v2173
      %v2480 = vpack.c.b16 %v2183, %v2174
      %v2481 = vpack.c.b16 %v2184, %v2175
      %v2482 = vpack.c.b16 %v2185, %v2176
      %v2483 = vpack.c.b16 %v2186, %v2177
      %v2484 = vpack.c.b16 %v2187, %v2178
      %v2485 = vpack.c.b16 %v2188, %v2179
      %v2486 = vpack.c.b16 %v2198, %v2189
      %v2487 = vpack.c.b16 %v2199, %v2190
      %v2488 = vpack.c.b16 %v2200, %v2191
      %v2489 = vpack.c.b16 %v2201, %v2192
      %v2490 = vpack.c.b16 %v2202, %v2193
      %v2491 = vpack.c.b16 %v2203, %v2194
      %v2492 = vpack.c.b16 %v2204, %v2195
      %v2493 = vpack.c.b16 %v2205, %v2196
      %v2494 = vpack.c.b16 %v2206, %v2197
      %2783 = vmatprep.subr.bf16.mxu0 %v2208
      %2784 = vmatpush1.bf16.msra.mxu0 %v2207
      %2785 = vmatprep.subr.bf16.mxu0 %v2217
      %2786 = vmatpush1.bf16.msra.mxu0 %v2216
      %2787 = vmatprep.subr.bf16.mxu0 %v2226
      %2788 = vmatpush1.bf16.msra.mxu0 %v2225
      %2789 = vmatprep.subr.bf16.mxu0 %v2235
      %2790 = vmatpush1.bf16.msra.mxu0 %v2234
      %2791 = vmatprep.subr.bf16.mxu0 %v2244
      %2792 = vmatpush1.bf16.msra.mxu0 %v2243
      %2793 = vmatprep.subr.bf16.mxu0 %v2253
      %2794 = vmatpush1.bf16.msra.mxu0 %v2252
      %2795 = vmatprep.subr.bf16.mxu0 %v2262
      %2796 = vmatpush1.bf16.msra.mxu0 %v2261
      %2797 = vmatprep.subr.bf16.mxu0 %v2271
      %2798 = vmatpush1.bf16.msra.mxu0 %v2270
      %2799 = vmatprep.subr.bf16.mxu0 %v2280
      %2800 = vmatpush1.bf16.msra.mxu0 %v2279
      %2801 = vmatprep.subr.bf16.mxu0 %v2289
      %2802 = vmatpush1.bf16.msra.mxu0 %v2288
      %2803 = vmatprep.subr.bf16.mxu0 %v2298
      %2804 = vmatpush1.bf16.msra.mxu0 %v2297
      %2805 = vmatprep.subr.bf16.mxu0 %v2307
      %2806 = vmatpush1.bf16.msra.mxu0 %v2306
      %2807 = vmatprep.subr.bf16.mxu0 %v2316
      %2808 = vmatpush1.bf16.msra.mxu0 %v2315
      %2809 = vmatprep.subr.bf16.mxu0 %v2325
      %2810 = vmatpush1.bf16.msra.mxu0 %v2324
      %2811 = vmatprep.subr.bf16.mxu0 %v2334
      %2812 = vmatpush1.bf16.msra.mxu0 %v2333
      %2813 = vmatprep.subr.bf16.mxu0 %v2343
      %2814 = vmatpush1.bf16.msra.mxu0 %v2342
      %2815 = vmatprep.mubr.bf16.mxu0 %v939
      %2816 = vmatmul.mubr.bf16.gmra.mrb[0].mxu0 %v938
      %v2817 = vpop.f32.mrb[0].mxu0
      %v2818 = vadd.f32 %v1269, %v2817
      %v2819 = vpop.f32.mrb[0].mxu0
      %v2820 = vadd.f32 %v1273, %v2819
      %v2821 = vpop.f32.mrb[0].mxu0
      %v2822 = vpop.f32.mrb[0].mxu0
      %2823 = vdwg.mxu0
      %2824 = vmatprep.subr.bf16.mxu0 %v2352
      %2825 = vmatpush1.bf16.msra.mxu0 %v2351
      %2826 = vmatprep.subr.bf16.mxu0 %v2361
      %2827 = vmatpush1.bf16.msra.mxu0 %v2360
      %2828 = vmatprep.subr.bf16.mxu0 %v2370
      %2829 = vmatpush1.bf16.msra.mxu0 %v2369
      %2830 = vmatprep.subr.bf16.mxu0 %v2379
      %2831 = vmatpush1.bf16.msra.mxu0 %v2378
      %2832 = vmatprep.subr.bf16.mxu0 %v2388
      %2833 = vmatpush1.bf16.msra.mxu0 %v2387
      %2834 = vmatprep.subr.bf16.mxu0 %v2397
      %2835 = vmatpush1.bf16.msra.mxu0 %v2396
      %2836 = vmatprep.subr.bf16.mxu0 %v2406
      %2837 = vmatpush1.bf16.msra.mxu0 %v2405
      %2838 = vmatprep.subr.bf16.mxu0 %v2415
      %2839 = vmatpush1.bf16.msra.mxu0 %v2414
      %2840 = vmatprep.subr.bf16.mxu0 %v2424
      %2841 = vmatpush1.bf16.msra.mxu0 %v2423
      %2842 = vmatprep.subr.bf16.mxu0 %v2433
      %2843 = vmatpush1.bf16.msra.mxu0 %v2432
      %2844 = vmatprep.subr.bf16.mxu0 %v2442
      %2845 = vmatpush1.bf16.msra.mxu0 %v2441
      %2846 = vmatprep.subr.bf16.mxu0 %v2451
      %2847 = vmatpush1.bf16.msra.mxu0 %v2450
      %2848 = vmatprep.subr.bf16.mxu0 %v2460
      %2849 = vmatpush1.bf16.msra.mxu0 %v2459
      %2850 = vmatprep.subr.bf16.mxu0 %v2469
      %2851 = vmatpush1.bf16.msra.mxu0 %v2468
      %2852 = vmatprep.subr.bf16.mxu0 %v2478
      %2853 = vmatpush1.bf16.msra.mxu0 %v2477
      %2854 = vmatprep.subr.bf16.mxu0 %v2487
      %2855 = vmatpush1.bf16.msra.mxu0 %v2486
      %2856 = vmatprep.mubr.bf16.mxu0 %v941
      %2857 = vmatmul.mubr.bf16.gmra.mrb[0].mxu0 %v940
      %v2858 = vpop.f32.mrb[0].mxu0
      %v2859 = vadd.f32 %v2818, %v2858
      %v2860 = vpop.f32.mrb[0].mxu0
      %v2861 = vadd.f32 %v2820, %v2860
      %v2862 = vpop.f32.mrb[0].mxu0
      %v2863 = vpop.f32.mrb[0].mxu0
      %2864 = vdwg.mxu0
      %2865 = vmatprep.subr.bf16.mxu0 %v2210
      %2866 = vmatpush1.bf16.msra.mxu0 %v2209
      %2867 = vmatprep.subr.bf16.mxu0 %v2219
      %2868 = vmatpush1.bf16.msra.mxu0 %v2218
      %2869 = vmatprep.subr.bf16.mxu0 %v2228
      %2870 = vmatpush1.bf16.msra.mxu0 %v2227
      %2871 = vmatprep.subr.bf16.mxu0 %v2237
      %2872 = vmatpush1.bf16.msra.mxu0 %v2236
      %2873 = vmatprep.subr.bf16.mxu0 %v2246
      %2874 = vmatpush1.bf16.msra.mxu0 %v2245
      %2875 = vmatprep.subr.bf16.mxu0 %v2255
      %2876 = vmatpush1.bf16.msra.mxu0 %v2254
      %2877 = vmatprep.subr.bf16.mxu0 %v2264
      %2878 = vmatpush1.bf16.msra.mxu0 %v2263
      %2879 = vmatprep.subr.bf16.mxu0 %v2273
      %2880 = vmatpush1.bf16.msra.mxu0 %v2272
      %2881 = vmatprep.subr.bf16.mxu0 %v2282
      %2882 = vmatpush1.bf16.msra.mxu0 %v2281
      %2883 = vmatprep.subr.bf16.mxu0 %v2291
      %2884 = vmatpush1.bf16.msra.mxu0 %v2290
      %2885 = vmatprep.subr.bf16.mxu0 %v2300
      %2886 = vmatpush1.bf16.msra.mxu0 %v2299
      %2887 = vmatprep.subr.bf16.mxu0 %v2309
      %2888 = vmatpush1.bf16.msra.mxu0 %v2308
      %2889 = vmatprep.subr.bf16.mxu0 %v2318
      %2890 = vmatpush1.bf16.msra.mxu0 %v2317
      %2891 = vmatprep.subr.bf16.mxu0 %v2327
      %2892 = vmatpush1.bf16.msra.mxu0 %v2326
      %2893 = vmatprep.subr.bf16.mxu0 %v2336
      %2894 = vmatpush1.bf16.msra.mxu0 %v2335
      %2895 = vmatprep.subr.bf16.mxu0 %v2345
      %2896 = vmatpush1.bf16.msra.mxu0 %v2344
      %2897 = vmatprep.mubr.bf16.mxu0 %v939
      %2898 = vmatmul.mubr.bf16.gmra.mrb[0].mxu0 %v938
      %v2899 = vpop.f32.mrb[0].mxu0
      %v2900 = vadd.f32 %v1277, %v2899
      %v2901 = vpop.f32.mrb[0].mxu0
      %v2902 = vadd.f32 %v1281, %v2901
      %v2903 = vpop.f32.mrb[0].mxu0
      %v2904 = vpop.f32.mrb[0].mxu0
      %2905 = vdwg.mxu0
      %2906 = vmatprep.subr.bf16.mxu0 %v2354
      %2907 = vmatpush1.bf16.msra.mxu0 %v2353
      %2908 = vmatprep.subr.bf16.mxu0 %v2363
      %2909 = vmatpush1.bf16.msra.mxu0 %v2362
      %2910 = vmatprep.subr.bf16.mxu0 %v2372
      %2911 = vmatpush1.bf16.msra.mxu0 %v2371
      %2912 = vmatprep.subr.bf16.mxu0 %v2381
      %2913 = vmatpush1.bf16.msra.mxu0 %v2380
      %2914 = vmatprep.subr.bf16.mxu0 %v2390
      %2915 = vmatpush1.bf16.msra.mxu0 %v2389
      %2916 = vmatprep.subr.bf16.mxu0 %v2399
      %2917 = vmatpush1.bf16.msra.mxu0 %v2398
      %2918 = vmatprep.subr.bf16.mxu0 %v2408
      %2919 = vmatpush1.bf16.msra.mxu0 %v2407
      %2920 = vmatprep.subr.bf16.mxu0 %v2417
      %2921 = vmatpush1.bf16.msra.mxu0 %v2416
      %2922 = vmatprep.subr.bf16.mxu0 %v2426
      %2923 = vmatpush1.bf16.msra.mxu0 %v2425
      %2924 = vmatprep.subr.bf16.mxu0 %v2435
      %2925 = vmatpush1.bf16.msra.mxu0 %v2434
      %2926 = vmatprep.subr.bf16.mxu0 %v2444
      %2927 = vmatpush1.bf16.msra.mxu0 %v2443
      %2928 = vmatprep.subr.bf16.mxu0 %v2453
      %2929 = vmatpush1.bf16.msra.mxu0 %v2452
      %2930 = vmatprep.subr.bf16.mxu0 %v2462
      %2931 = vmatpush1.bf16.msra.mxu0 %v2461
      %2932 = vmatprep.subr.bf16.mxu0 %v2471
      %2933 = vmatpush1.bf16.msra.mxu0 %v2470
      %2934 = vmatprep.subr.bf16.mxu0 %v2480
      %2935 = vmatpush1.bf16.msra.mxu0 %v2479
      %2936 = vmatprep.subr.bf16.mxu0 %v2489
      %2937 = vmatpush1.bf16.msra.mxu0 %v2488
      %2938 = vmatprep.mubr.bf16.mxu0 %v941
      %2939 = vmatmul.mubr.bf16.gmra.mrb[0].mxu0 %v940
      %v2940 = vpop.f32.mrb[0].mxu0
      %v2941 = vadd.f32 %v2900, %v2940
      %v2942 = vpop.f32.mrb[0].mxu0
      %v2943 = vadd.f32 %v2902, %v2942
      %v2944 = vpop.f32.mrb[0].mxu0
      %v2945 = vpop.f32.mrb[0].mxu0
      %2946 = vdwg.mxu0
      %2947 = vmatprep.subr.bf16.mxu0 %v2212
      %2948 = vmatpush1.bf16.msra.mxu0 %v2211
      %2949 = vmatprep.subr.bf16.mxu0 %v2221
      %2950 = vmatpush1.bf16.msra.mxu0 %v2220
      %2951 = vmatprep.subr.bf16.mxu0 %v2230
      %2952 = vmatpush1.bf16.msra.mxu0 %v2229
      %2953 = vmatprep.subr.bf16.mxu0 %v2239
      %2954 = vmatpush1.bf16.msra.mxu0 %v2238
      %2955 = vmatprep.subr.bf16.mxu0 %v2248
      %2956 = vmatpush1.bf16.msra.mxu0 %v2247
      %2957 = vmatprep.subr.bf16.mxu0 %v2257
      %2958 = vmatpush1.bf16.msra.mxu0 %v2256
      %2959 = vmatprep.subr.bf16.mxu0 %v2266
      %2960 = vmatpush1.bf16.msra.mxu0 %v2265
      %2961 = vmatprep.subr.bf16.mxu0 %v2275
      %2962 = vmatpush1.bf16.msra.mxu0 %v2274
      %2963 = vmatprep.subr.bf16.mxu0 %v2284
      %2964 = vmatpush1.bf16.msra.mxu0 %v2283
      %2965 = vmatprep.subr.bf16.mxu0 %v2293
      %2966 = vmatpush1.bf16.msra.mxu0 %v2292
      %2967 = vmatprep.subr.bf16.mxu0 %v2302
      %2968 = vmatpush1.bf16.msra.mxu0 %v2301
      %2969 = vmatprep.subr.bf16.mxu0 %v2311
      %2970 = vmatpush1.bf16.msra.mxu0 %v2310
      %2971 = vmatprep.subr.bf16.mxu0 %v2320
      %2972 = vmatpush1.bf16.msra.mxu0 %v2319
      %2973 = vmatprep.subr.bf16.mxu0 %v2329
      %2974 = vmatpush1.bf16.msra.mxu0 %v2328
      %2975 = vmatprep.subr.bf16.mxu0 %v2338
      %2976 = vmatpush1.bf16.msra.mxu0 %v2337
      %2977 = vmatprep.subr.bf16.mxu0 %v2347
      %2978 = vmatpush1.bf16.msra.mxu0 %v2346
      %2979 = vmatprep.mubr.bf16.mxu0 %v939
      %2980 = vmatmul.mubr.bf16.gmra.mrb[0].mxu0 %v938
      %v2981 = vpop.f32.mrb[0].mxu0
      %v2982 = vadd.f32 %v1285, %v2981
      %v2983 = vpop.f32.mrb[0].mxu0
      %v2984 = vadd.f32 %v1289, %v2983
      %v2985 = vpop.f32.mrb[0].mxu0
      %v2986 = vpop.f32.mrb[0].mxu0
      %2987 = vdwg.mxu0
      %2988 = vmatprep.subr.bf16.mxu0 %v2356
      %2989 = vmatpush1.bf16.msra.mxu0 %v2355
      %2990 = vmatprep.subr.bf16.mxu0 %v2365
      %2991 = vmatpush1.bf16.msra.mxu0 %v2364
      %2992 = vmatprep.subr.bf16.mxu0 %v2374
      %2993 = vmatpush1.bf16.msra.mxu0 %v2373
      %2994 = vmatprep.subr.bf16.mxu0 %v2383
      %2995 = vmatpush1.bf16.msra.mxu0 %v2382
      %2996 = vmatprep.subr.bf16.mxu0 %v2392
      %2997 = vmatpush1.bf16.msra.mxu0 %v2391
      %2998 = vmatprep.subr.bf16.mxu0 %v2401
      %2999 = vmatpush1.bf16.msra.mxu0 %v2400
      %3000 = vmatprep.subr.bf16.mxu0 %v2410
      %3001 = vmatpush1.bf16.msra.mxu0 %v2409
      %3002 = vmatprep.subr.bf16.mxu0 %v2419
      %3003 = vmatpush1.bf16.msra.mxu0 %v2418
      %3004 = vmatprep.subr.bf16.mxu0 %v2428
      %3005 = vmatpush1.bf16.msra.mxu0 %v2427
      %3006 = vmatprep.subr.bf16.mxu0 %v2437
      %3007 = vmatpush1.bf16.msra.mxu0 %v2436
      %3008 = vmatprep.subr.bf16.mxu0 %v2446
      %3009 = vmatpush1.bf16.msra.mxu0 %v2445
      %3010 = vmatprep.subr.bf16.mxu0 %v2455
      %3011 = vmatpush1.bf16.msra.mxu0 %v2454
      %3012 = vmatprep.subr.bf16.mxu0 %v2464
      %3013 = vmatpush1.bf16.msra.mxu0 %v2463
      %3014 = vmatprep.subr.bf16.mxu0 %v2473
      %3015 = vmatpush1.bf16.msra.mxu0 %v2472
      %3016 = vmatprep.subr.bf16.mxu0 %v2482
      %3017 = vmatpush1.bf16.msra.mxu0 %v2481
      %3018 = vmatprep.subr.bf16.mxu0 %v2491
      %3019 = vmatpush1.bf16.msra.mxu0 %v2490
      %3020 = vmatprep.mubr.bf16.mxu0 %v941
      %3021 = vmatmul.mubr.bf16.gmra.mrb[0].mxu0 %v940
      %v3022 = vpop.f32.mrb[0].mxu0
      %v3023 = vadd.f32 %v2982, %v3022
      %v3024 = vpop.f32.mrb[0].mxu0
      %v3025 = vadd.f32 %v2984, %v3024
      %v3026 = vpop.f32.mrb[0].mxu0
      %v3027 = vpop.f32.mrb[0].mxu0
      %3028 = vdwg.mxu0
      %3029 = vmatprep.subr.bf16.mxu0 %v2214
      %3030 = vmatpush1.bf16.msra.mxu0 %v2213
      %3031 = vmatprep.subr.bf16.mxu0 %v2223
      %3032 = vmatpush1.bf16.msra.mxu0 %v2222
      %3033 = vmatprep.subr.bf16.mxu0 %v2232
      %3034 = vmatpush1.bf16.msra.mxu0 %v2231
      %3035 = vmatprep.subr.bf16.mxu0 %v2241
      %3036 = vmatpush1.bf16.msra.mxu0 %v2240
      %3037 = vmatprep.subr.bf16.mxu0 %v2250
      %3038 = vmatpush1.bf16.msra.mxu0 %v2249
      %3039 = vmatprep.subr.bf16.mxu0 %v2259
      %3040 = vmatpush1.bf16.msra.mxu0 %v2258
      %3041 = vmatprep.subr.bf16.mxu0 %v2268
      %3042 = vmatpush1.bf16.msra.mxu0 %v2267
      %3043 = vmatprep.subr.bf16.mxu0 %v2277
      %3044 = vmatpush1.bf16.msra.mxu0 %v2276
      %3045 = vmatprep.subr.bf16.mxu0 %v2286
      %3046 = vmatpush1.bf16.msra.mxu0 %v2285
      %3047 = vmatprep.subr.bf16.mxu0 %v2295
      %3048 = vmatpush1.bf16.msra.mxu0 %v2294
      %3049 = vmatprep.subr.bf16.mxu0 %v2304
      %3050 = vmatpush1.bf16.msra.mxu0 %v2303
      %3051 = vmatprep.subr.bf16.mxu0 %v2313
      %3052 = vmatpush1.bf16.msra.mxu0 %v2312
      %3053 = vmatprep.subr.bf16.mxu0 %v2322
      %3054 = vmatpush1.bf16.msra.mxu0 %v2321
      %3055 = vmatprep.subr.bf16.mxu0 %v2331
      %3056 = vmatpush1.bf16.msra.mxu0 %v2330
      %3057 = vmatprep.subr.bf16.mxu0 %v2340
      %3058 = vmatpush1.bf16.msra.mxu0 %v2339
      %3059 = vmatprep.subr.bf16.mxu0 %v2349
      %3060 = vmatpush1.bf16.msra.mxu0 %v2348
      %3061 = vmatprep.mubr.bf16.mxu0 %v939
      %3062 = vmatmul.mubr.bf16.gmra.mrb[0].mxu0 %v938
      %v3063 = vpop.f32.mrb[0].mxu0
      %v3064 = vadd.f32 %v1293, %v3063
      %v3065 = vpop.f32.mrb[0].mxu0
      %v3066 = vadd.f32 %v1297, %v3065
      %v3067 = vpop.f32.mrb[0].mxu0
      %v3068 = vpop.f32.mrb[0].mxu0
      %3069 = vdwg.mxu0
      %3070 = vmatprep.subr.bf16.mxu0 %v2358
      %3071 = vmatpush1.bf16.msra.mxu0 %v2357
      %3072 = vmatprep.subr.bf16.mxu0 %v2367
      %3073 = vmatpush1.bf16.msra.mxu0 %v2366
      %3074 = vmatprep.subr.bf16.mxu0 %v2376
      %3075 = vmatpush1.bf16.msra.mxu0 %v2375
      %3076 = vmatprep.subr.bf16.mxu0 %v2385
      %3077 = vmatpush1.bf16.msra.mxu0 %v2384
      %3078 = vmatprep.subr.bf16.mxu0 %v2394
      %3079 = vmatpush1.bf16.msra.mxu0 %v2393
      %3080 = vmatprep.subr.bf16.mxu0 %v2403
      %3081 = vmatpush1.bf16.msra.mxu0 %v2402
      %3082 = vmatprep.subr.bf16.mxu0 %v2412
      %3083 = vmatpush1.bf16.msra.mxu0 %v2411
      %3084 = vmatprep.subr.bf16.mxu0 %v2421
      %3085 = vmatpush1.bf16.msra.mxu0 %v2420
      %3086 = vmatprep.subr.bf16.mxu0 %v2430
      %3087 = vmatpush1.bf16.msra.mxu0 %v2429
      %3088 = vmatprep.subr.bf16.mxu0 %v2439
      %3089 = vmatpush1.bf16.msra.mxu0 %v2438
      %3090 = vmatprep.subr.bf16.mxu0 %v2448
      %3091 = vmatpush1.bf16.msra.mxu0 %v2447
      %3092 = vmatprep.subr.bf16.mxu0 %v2457
      %3093 = vmatpush1.bf16.msra.mxu0 %v2456
      %3094 = vmatprep.subr.bf16.mxu0 %v2466
      %3095 = vmatpush1.bf16.msra.mxu0 %v2465
      %3096 = vmatprep.subr.bf16.mxu0 %v2475
      %3097 = vmatpush1.bf16.msra.mxu0 %v2474
      %3098 = vmatprep.subr.bf16.mxu0 %v2484
      %3099 = vmatpush1.bf16.msra.mxu0 %v2483
      %3100 = vmatprep.subr.bf16.mxu0 %v2493
      %3101 = vmatpush1.bf16.msra.mxu0 %v2492
      %3102 = vmatprep.mubr.bf16.mxu0 %v941
      %3103 = vmatmul.mubr.bf16.gmra.mrb[0].mxu0 %v940
      %v3104 = vpop.f32.mrb[0].mxu0
      %v3105 = vadd.f32 %v3064, %v3104
      %v3106 = vpop.f32.mrb[0].mxu0
      %v3107 = vadd.f32 %v3066, %v3106
      %v3108 = vpop.f32.mrb[0].mxu0
      %v3109 = vpop.f32.mrb[0].mxu0
      %3110 = vdwg.mxu0
      %3111 = vmatprep.subr.bf16.mxu0 0
      %3112 = vmatpush1.bf16.msra.mxu0 %v2215
      %3113 = vmatprep.subr.bf16.mxu0 0
      %3114 = vmatpush1.bf16.msra.mxu0 %v2224
      %3115 = vmatprep.subr.bf16.mxu0 0
      %3116 = vmatpush1.bf16.msra.mxu0 %v2233
      %3117 = vmatprep.subr.bf16.mxu0 0
      %3118 = vmatpush1.bf16.msra.mxu0 %v2242
      %3119 = vmatprep.subr.bf16.mxu0 0
      %3120 = vmatpush1.bf16.msra.mxu0 %v2251
      %3121 = vmatprep.subr.bf16.mxu0 0
      %3122 = vmatpush1.bf16.msra.mxu0 %v2260
      %3123 = vmatprep.subr.bf16.mxu0 0
      %3124 = vmatpush1.bf16.msra.mxu0 %v2269
      %3125 = vmatprep.subr.bf16.mxu0 0
      %3126 = vmatpush1.bf16.msra.mxu0 %v2278
      %3127 = vmatprep.subr.bf16.mxu0 0
      %3128 = vmatpush1.bf16.msra.mxu0 %v2287
      %3129 = vmatprep.subr.bf16.mxu0 0
      %3130 = vmatpush1.bf16.msra.mxu0 %v2296
      %3131 = vmatprep.subr.bf16.mxu0 0
      %3132 = vmatpush1.bf16.msra.mxu0 %v2305
      %3133 = vmatprep.subr.bf16.mxu0 0
      %3134 = vmatpush1.bf16.msra.mxu0 %v2314
      %3135 = vmatprep.subr.bf16.mxu0 0
      %3136 = vmatpush1.bf16.msra.mxu0 %v2323
      %3137 = vmatprep.subr.bf16.mxu0 0
      %3138 = vmatpush1.bf16.msra.mxu0 %v2332
      %3139 = vmatprep.subr.bf16.mxu0 0
      %3140 = vmatpush1.bf16.msra.mxu0 %v2341
      %3141 = vmatprep.subr.bf16.mxu0 0
      %3142 = vmatpush1.bf16.msra.mxu0 %v2350
      %3143 = vmatprep.mubr.bf16.mxu0 %v939
      %3144 = vmatmul.mubr.bf16.gmra.mrb[0].mxu0 %v938
      %v3145 = vpop.f32.mrb[0].mxu0
      %v3146 = vadd.f32 %v1301, %v3145
      %v3147 = vpop.f32.mrb[0].mxu0
      %v3148 = vpop.f32.mrb[0].mxu0
      %v3149 = vpop.f32.mrb[0].mxu0
      %3150 = vdwg.mxu0
      %3151 = vmatprep.subr.bf16.mxu0 0
      %3152 = vmatpush1.bf16.msra.mxu0 %v2359
      %3153 = vmatprep.subr.bf16.mxu0 0
      %3154 = vmatpush1.bf16.msra.mxu0 %v2368
      %3155 = vmatprep.subr.bf16.mxu0 0
      %3156 = vmatpush1.bf16.msra.mxu0 %v2377
      %3157 = vmatprep.subr.bf16.mxu0 0
      %3158 = vmatpush1.bf16.msra.mxu0 %v2386
      %3159 = vmatprep.subr.bf16.mxu0 0
      %3160 = vmatpush1.bf16.msra.mxu0 %v2395
      %3161 = vmatprep.subr.bf16.mxu0 0
      %3162 = vmatpush1.bf16.msra.mxu0 %v2404
      %3163 = vmatprep.subr.bf16.mxu0 0
      %3164 = vmatpush1.bf16.msra.mxu0 %v2413
      %3165 = vmatprep.subr.bf16.mxu0 0
      %3166 = vmatpush1.bf16.msra.mxu0 %v2422
      %3167 = vmatprep.subr.bf16.mxu0 0
      %3168 = vmatpush1.bf16.msra.mxu0 %v2431
      %3169 = vmatprep.subr.bf16.mxu0 0
      %3170 = vmatpush1.bf16.msra.mxu0 %v2440
      %3171 = vmatprep.subr.bf16.mxu0 0
      %3172 = vmatpush1.bf16.msra.mxu0 %v2449
      %3173 = vmatprep.subr.bf16.mxu0 0
      %3174 = vmatpush1.bf16.msra.mxu0 %v2458
      %3175 = vmatprep.subr.bf16.mxu0 0
      %3176 = vmatpush1.bf16.msra.mxu0 %v2467
      %3177 = vmatprep.subr.bf16.mxu0 0
      %3178 = vmatpush1.bf16.msra.mxu0 %v2476
      %3179 = vmatprep.subr.bf16.mxu0 0
      %3180 = vmatpush1.bf16.msra.mxu0 %v2485
      %3181 = vmatprep.subr.bf16.mxu0 0
      %3182 = vmatpush1.bf16.msra.mxu0 %v2494
      %3183 = vmatprep.mubr.bf16.mxu0 %v941
      %3184 = vmatmul.mubr.bf16.gmra.mrb[0].mxu0 %v940
      %v3185 = vpop.f32.mrb[0].mxu0
      %v3186 = vadd.f32 %v3146, %v3185
      %v3187 = vpop.f32.mrb[0].mxu0
      %v3188 = vpop.f32.mrb[0].mxu0
      %v3189 = vpop.f32.mrb[0].mxu0
      %3190 = vdwg.mxu0
      %v3191 = vld [vmem:[%s508] sm:$0x1]
      %v3193 = vlaneseq
      %v3194 = vshrl.u32 %v3193, 7
      %v3195 = vsub.s32 0, %v3194
      %v3196 = vrot.slane %v3191, %v3195
      %v3198 = vadd.f32 %v2859, %v3196
      %v3199 = vld [vmem:[%s529] sm:$0xff]
      %v3200 = vsub.f32 %v3198, %v3199
      %v3201 = vmul.f32 %v3200, %v3200
      %3202 = vadd.xlane.f32.xlu0 %v3201
      %v3203 = vpop.xlane.xlu0 %3202
      %v3204 = vrot.slane %v3203, 4
      %v3205 = vadd.f32 %v3203, %v3204
      %v3206 = vrot.slane %v3205, 2
      %v3207 = vadd.f32 %v3205, %v3206
      %v3208 = vrot.slane %v3207, 1
      %v3209 = vadd.f32 %v3207, %v3208
      %s3210 = vtos %v3209
      %v3211 = vmax.f32 %v2861, %v3025
      %v3212 = vmax.f32 %v2941, %v3105
      %v3213 = vmax.f32 %v2943, %v3107
      %v3214 = vmax.f32 %v3023, %v3186
      %v3215 = vmax.f32 %v3211, %v3212
      %v3216 = vmax.f32 %v3213, %v3214
      %v3217 = vmax.f32 %v3215, %v3216
      %3218 = vmax.xlane.f32.xlu0 %v3217
      %v3219 = vpop.xlane.xlu0 %3218
      %v3220 = vsub.f32 %v2861, %v3219
      %v3221 = vsub.f32 %v2941, %v3219
      %v3222 = vsub.f32 %v2943, %v3219
      %v3223 = vsub.f32 %v3023, %v3219
      %v3224 = vsub.f32 %v3025, %v3219
      %v3225 = vsub.f32 %v3105, %v3219
      %v3226 = vsub.f32 %v3107, %v3219
      %v3227 = vsub.f32 %v3186, %v3219
      %v3228 = vmul.f32 %v3220, 1.442695
      %v3229 = vpow.pop %v3228
      %v3230 = vmul.f32 %v3221, 1.442695
      %v3231 = vpow.pop %v3230
      %v3232 = vmul.f32 %v3222, 1.442695
      %v3233 = vpow.pop %v3232
      %v3234 = vmul.f32 %v3223, 1.442695
      %v3235 = vpow.pop %v3234
      %v3236 = vmul.f32 %v3224, 1.442695
      %v3237 = vpow.pop %v3236
      %v3238 = vmul.f32 %v3225, 1.442695
      %v3239 = vpow.pop %v3238
      %v3240 = vmul.f32 %v3226, 1.442695
      %v3241 = vpow.pop %v3240
      %v3242 = vmul.f32 %v3227, 1.442695
      %v3243 = vpow.pop %v3242
      %v3244 = vadd.f32 %v3229, %v3231
      %v3245 = vadd.f32 %v3244, %v3233
      %v3246 = vadd.f32 %v3245, %v3235
      %v3247 = vadd.f32 %v3246, %v3237
      %v3248 = vadd.f32 %v3247, %v3239
      %v3249 = vadd.f32 %v3248, %v3241
      %v3250 = vadd.f32 %v3249, %v3243
      %3251 = vadd.xlane.f32.xlu0 %v3250
      %v3252 = vpop.xlane.xlu0 %3251
      %v3253 = vlog2.pop %v3252
      %v3254 = vmul.f32 %v3253, 0.6931472
      %v3255 = vadd.f32 %v3219, %v3254
      %v3256 = vlaneseq
      %v3257 = vand.u32 %v3256, 127
      %v3258 = vadd.s32 %v3257, 128
      %v3259 = vadd.s32 %v3257, 256
      %v3260 = vadd.s32 %v3257, 384
      %v3261 = vadd.s32 %v3257, 512
      %v3262 = vadd.s32 %v3257, 640
      %v3263 = vadd.s32 %v3257, 768
      %v3264 = vadd.s32 %v3257, 896
      %v3265 = vld [vmem:[%s522] sm:$0xff]
      %3266 = vset.pattern.permute.xlu0 0
      %3267 = vperm.xlu0 %3266, %v3265
      %v3268 = vpop.permute.xlu0 %3267
      %vm3269 = vcmp.eq.s32.totalorder %v3257, %v3268
      %vm3270 = vcmp.eq.s32.totalorder %v3258, %v3268
      %vm3271 = vcmp.eq.s32.totalorder %v3259, %v3268
      %vm3272 = vcmp.eq.s32.totalorder %v3260, %v3268
      %vm3273 = vcmp.eq.s32.totalorder %v3261, %v3268
      %vm3274 = vcmp.eq.s32.totalorder %v3262, %v3268
      %vm3275 = vcmp.eq.s32.totalorder %v3263, %v3268
      %vm3276 = vcmp.eq.s32.totalorder %v3264, %v3268
      %v3277 = vsel %vm3269, %v2861, 0.0
      %v3278 = vsel %vm3270, %v2941, 0.0
      %v3279 = vsel %vm3271, %v2943, 0.0
      %v3280 = vsel %vm3272, %v3023, 0.0
      %v3281 = vsel %vm3273, %v3025, 0.0
      %v3282 = vsel %vm3274, %v3105, 0.0
      %v3283 = vsel %vm3275, %v3107, 0.0
      %v3284 = vsel %vm3276, %v3186, 0.0
      %v3285 = vadd.f32 %v3277, %v3278
      %v3286 = vadd.f32 %v3285, %v3279
      %v3287 = vadd.f32 %v3286, %v3280
      %v3288 = vadd.f32 %v3287, %v3281
      %v3289 = vadd.f32 %v3288, %v3282
      %v3290 = vadd.f32 %v3289, %v3283
      %v3291 = vadd.f32 %v3290, %v3284
      %3292 = vadd.xlane.f32.xlu0 %v3291
      %v3293 = vpop.xlane.xlu0 %3292
      %v3294 = vsub.f32 %v3255, %v3293
      %vm3295 = vcmask 7168
      %v3296 = vsel %vm3295, %v3294, 0.0
      %3297 = vadd.xlane.f32.xlu0 %v3296
      %v3298 = vpop.xlane.xlu0 %3297
      %v3299 = vrot.slane %v3298, 4
      %v3300 = vadd.f32 %v3298, %v3299
      %v3301 = vrot.slane %v3300, 2
      %v3302 = vadd.f32 %v3300, %v3301
      %v3303 = vrot.slane %v3302, 1
      %v3304 = vadd.f32 %v3302, %v3303
      %s3305 = vtos %v3304
      %p3306 = scmp.eq.s32.totalorder %s30, 0
      // Predicated region
      $region69: #{tse_forward.1} parent=67 // pred_check
        %p3307 = pneg %p3306
      $region70: #{tse_forward.1} parent=67 // pred_check_branch
        %3309 = sbr.rel (%p3307) target = $region72
      $region71: #{tse_forward.1} parent=67 // pred_region
        %3310 = vst [vmem:[%s532] sm:$0x1] 0.0
        %3311 = vst [vmem:[%s535] sm:$0x1] 0.0
      $region72: #{tse_forward.1} parent=67 // pred_fallthru
        _
      %v3312 = vld [vmem:[%s532] sm:$0x1]
      %v3313 = vstv %s3210
      %v3314 = vadd.f32 %v3312, %v3313
      %3315 = vst [vmem:[%s532] sm:$0x1] %v3314
      %v3316 = vld [vmem:[%s535] sm:$0x1]
      %v3317 = vstv %s3305
      %v3318 = vadd.f32 %v3316, %v3317
      %3319 = vst [vmem:[%s535] sm:$0x1] %v3318
      %p3320 = scmp.lt.s32.totalorder %s29, 1
      %s3321 = scalar_select %p3320, %s29, 1
      %s3322 = scalar_lea.vmem %s12, %s3321
      %p3323 = scmp.lt.s32.totalorder %s29, 1
      %s3324 = scalar_select %p3323, %s29, 1
      %s3325 = scalar_lea.vmem %s13, %s3324
      // Predicated region
      $region73: #{tse_forward.1} parent=67 // pred_check
        %p3326 = pneg %p333
      $region74: #{tse_forward.1} parent=67 // pred_check_branch
        %3328 = sbr.rel (%p3326) target = $region76
      $region75: #{tse_forward.1} parent=67 // pred_region
        _
      $region76: #{tse_forward.1} parent=67 // pred_fallthru
        _
      // Predicated region
      $region77: #{tse_forward.1} parent=67 // pred_check
        %p3329 = pneg %p359
      $region78: #{tse_forward.1} parent=67 // pred_check_branch
        %3331 = sbr.rel (%p3329) target = $region80
      $region79: #{tse_forward.1} parent=67 // pred_region
        _
      $region80: #{tse_forward.1} parent=67 // pred_fallthru
        _
    $region68: #{tse_forward.1} parent=5 // pred_fallthru
      _
    %p3332 = scmp.le.s32.totalorder 2, %s20
    // Predicated region
    $region81: #{tse_forward.1} parent=5 // pred_check
      %p3333 = pneg %p3332
    $region82: #{tse_forward.1} parent=5 // pred_check_branch
      %3335 = sbr.rel (%p3333) target = $region84
    $region83: #{tse_forward.1} parent=5 // pred_region
      %s3336 = ssub.s32 %s20, 2
      // Predicated region
      $region85: #{tse_forward.1} parent=83 // pred_check
        %p3337 = pneg %p339
      $region86: #{tse_forward.1} parent=83 // pred_check_branch
        %3339 = sbr.rel (%p3337) target = $region88
      $region87: #{tse_forward.1} parent=83 // pred_region
        %p3340 = scmp.lt.s32.totalorder %s31, 1
        %s3341 = scalar_select %p3340, %s31, 1
        %s3342 = scalar_lea.vmem %s12, %s3341
      $region88: #{tse_forward.1} parent=83 // pred_fallthru
        _
      // Predicated region
      $region89: #{tse_forward.1} parent=83 // pred_check
        %p3343 = pneg %p365
      $region90: #{tse_forward.1} parent=83 // pred_check_branch
        %3345 = sbr.rel (%p3343) target = $region92
      $region91: #{tse_forward.1} parent=83 // pred_region
        %p3346 = scmp.lt.s32.totalorder %s31, 1
        %s3347 = scalar_select %p3346, %s31, 1
        %s3348 = scalar_lea.vmem %s13, %s3347
      $region92: #{tse_forward.1} parent=83 // pred_fallthru
        _
    $region84: #{tse_forward.1} parent=5 // pred_fallthru
      _
  $region6: #{tse_forward.1} parent=0 // loop_footer
    %s24 = sadd.s32 1, %s20
  $region7: #{tse_forward.1} parent=0 // loop_footer_branch
    %19 = sbr.rel target = $region3
  $region8: #{tse_forward.1} parent=0 // loop_exit
    _

</llo_original>
